<compile_context>
chip_gen: v6e
topology: v6e:2x2x1
jax: 0.10.0
libtpu: 0.0.40
codegen_flags: <defaults>
</compile_context>

<pallas_src>
import math

import jax
import jax.numpy as jnp
import numpy as np
from jax.experimental import pallas as pl
from jax.experimental.pallas import tpu as pltpu


def _make_attnpool_kernel(batch_tile: int, seq_len: int, embed_dim: int,
                          num_heads: int):
    BT, L, C, H = batch_tile, seq_len, embed_dim, num_heads
    hd = C // H
    R = BT * L
    scale = 1.0 / math.sqrt(hd)
    f32 = jnp.float32

    def kernel(x_ref, pos0_ref, posr_ref, wq_ref, bq_ref, wk_ref, bk_ref,
               wv_ref, bv_ref, wc_ref, bc_ref, hm_ref, hmT_ref, o_ref):
        wdt = wq_ref.dtype

        x3 = x_ref[0].astype(f32)            # (BT, L, C)
        pos0 = pos0_ref[...].astype(f32)     # (1, C)
        posr = posr_ref[...].astype(f32)     # (L, C)

        # ---- mean token + positional embedding (f32 accumulation) --------
        tok0 = jnp.sum(x3, axis=1) * (1.0 / L) + pos0            # (BT, C)
        xp = (x3 + posr[None]).reshape(R, C)                     # (R, C)

        # ---- projections: one activation, cast once; the mean-token rows
        #      ride the big K/V GEMMs (no tiny M=BT GEMMs for k0/v0) --------
        act = jnp.concatenate([xp, tok0], axis=0).astype(wdt)    # (R+BT, C)
        k_all = (jnp.dot(act, wk_ref[...], preferred_element_type=f32)
                 + bk_ref[...].astype(f32))
        v_all = (jnp.dot(act, wv_ref[...], preferred_element_type=f32)
                 + bv_ref[...].astype(f32))
        q = (jnp.dot(tok0.astype(wdt), wq_ref[...], preferred_element_type=f32)
             + bq_ref[...].astype(f32))                          # (BT, C)

        kx = k_all[:R].reshape(BT, L, C)                         # (BT, L, C)
        vx = v_all[:R].reshape(BT, L, C)
        k0 = k_all[R:]                                           # (BT, C)
        v0 = v_all[R:]                                           # (BT, C)

        hm = hm_ref[...]                                         # (C, H) 0/1
        hmT = hmT_ref[...]                                       # (H, C) 0/1

        # ---- per-head scores via block-sum matmuls (no per-head loop) ----
        qk = (q[:, None, :] * kx).reshape(R, C)
        sx = (jnp.dot(qk, hm, preferred_element_type=f32)
              * scale).reshape(BT, L, H)                         # (BT, L, H)
        s0 = jnp.dot(q * k0, hm, preferred_element_type=f32) * scale  # (BT, H)

        # ---- stable softmax over the L+1 tokens of each (batch, head);
        #      mean token folded in analytically ---------------------------
        m = jnp.maximum(jnp.max(sx, axis=1), s0)                 # (BT, H)
        p0 = jnp.exp(s0 - m)                                     # (BT, H)
        px = jnp.exp(sx - m[:, None, :])                         # (BT, L, H)
        den = p0 + jnp.sum(px, axis=1)                           # (BT, H)
        inv = 1.0 / den                                          # exact; tiny

        # ---- weighted value sum (per-head probs broadcast to channels) ---
        w0 = jnp.dot(p0 * inv, hmT, preferred_element_type=f32)       # (BT, C)
        wx = jnp.dot((px * inv[:, None, :]).reshape(R, H), hmT,
                     preferred_element_type=f32).reshape(BT, L, C)
        attn = w0 * v0 + jnp.sum(wx * vx, axis=1)                      # (BT, C)

        # ---- output projection; lane-dense (BT, Dout) store --------------
        out = (jnp.dot(attn.astype(wdt), wc_ref[...],
                       preferred_element_type=f32)
               + bc_ref[...].astype(f32))
        o_ref[0] = out.astype(o_ref.dtype)

    return kernel


def _vmem_limit_bytes():
    """~85% of physical VMEM, capped at 112 MiB (v5e/v6e ~108 MiB, v7x ~54 MiB)."""
    try:
        cap = pltpu.get_tpu_info().vmem_capacity_bytes
    except Exception:
        cap = 128 * 1024 * 1024
    return int(min(cap * 0.85, 112 * 1024 * 1024))


def attention_pool_2d(x, pos, wq, bq, wk, bk, wv, bv, wc, bc, *,
                      num_heads, batch_tile=None, matmul_dtype=jnp.float32,
                      target_rows=256):
    """CLIP AttentionPool2d forward.

    x:   (B, L, C) tokens, float32
    pos: (L+1, C)  positional embedding (row 0 = pooled token)
    w*:  (in, out) projection weights so that y = x @ W + b
    Returns (B, output_dim).
    """
    B, L, C = x.shape
    Dout = wc.shape[1]
    assert pos.shape == (L + 1, C)
    assert C % num_heads == 0

    # Batch tile: give the projection GEMMs a real M dimension (~target_rows
    # rows; 256 feeds the v6e/v7x 256-wide MXU, use target_rows=128 on v5e),
    # while keeping nb >= 2 grid steps (megacore split on v7x, DMA overlap).
    if batch_tile is None:
        bt = min(B, max(1, -(-target_rows // L)))
        if B >= 2:
            bt = min(bt, max(1, B // 2))
        while B % bt:
            bt -= 1
    else:
        bt = batch_tile
        assert B % bt == 0
    nb = B // bt
    # TODO(synk): for L not a multiple of 8 (e.g. CLIP L=49), pad the token axis
    # to a multiple of 8 so the in-kernel (R,C)<->(BT,L,C) reshapes stay layout-free.

    wdt = jnp.dtype(matmul_dtype)
    x4 = x.reshape(nb, bt, L, C)
    if wdt != x.dtype:
        x4 = x4.astype(wdt)            # halve streamed x bytes on the bf16 path
    pos0 = pos[:1]                     # (1, C)
    posr = pos[1:]                     # (L, C)
    wq_c, wk_c, wv_c, wc_c = (w.astype(wdt) for w in (wq, wk, wv, wc))
    bq2, bk2, bv2 = bq.reshape(1, C), bk.reshape(1, C), bv.reshape(1, C)
    bc2 = bc.reshape(1, Dout)

    # Structural 0/1 head masks, precomputed once (not rebuilt from iota per step).
    hd = C // num_heads
    head_of = np.arange(C) // hd
    hm_np = (head_of[:, None] == np.arange(num_heads)[None, :]).astype(np.float32)
    hmask = jnp.asarray(hm_np)                              # (C, H)
    hmask_t = jnp.asarray(np.ascontiguousarray(hm_np.T))    # (H, C)

    kernel = _make_attnpool_kernel(bt, L, C, num_heads)
    args = (x4, pos0, posr, wq_c, bq2, wk_c, bk2, wv_c, bv2, wc_c, bc2,
            hmask, hmask_t)

    def build(single_buffer_consts):
        def const(shape):
            idx = lambda i: (0,) * len(shape)
            if single_buffer_consts:
                # Grid-invariant: single-buffer to halve resident VMEM.
                return pl.BlockSpec(shape, idx, pipeline_mode=pl.Buffered(1))
            return pl.BlockSpec(shape, idx)

        return pl.pallas_call(
            kernel,
            out_shape=jax.ShapeDtypeStruct((nb, bt, Dout), x.dtype),
            grid_spec=pltpu.PrefetchScalarGridSpec(
                num_scalar_prefetch=0,
                grid=(nb,),
                in_specs=[
                    pl.BlockSpec((1, bt, L, C), lambda i: (i, 0, 0, 0)),  # x tile
                    const((1, C)), const((L, C)),                  # pos0, pos[1:]
                    const((C, C)), const((1, C)),                  # wq, bq
                    const((C, C)), const((1, C)),                  # wk, bk
                    const((C, C)), const((1, C)),                  # wv, bv
                    const((C, Dout)), const((1, Dout)),            # wc, bc
                    const((C, num_heads)), const((num_heads, C)),  # head masks
                ],
                out_specs=pl.BlockSpec((1, bt, Dout), lambda i: (i, 0, 0)),
            ),
            compiler_params=pltpu.CompilerParams(
                dimension_semantics=("parallel",),       # megacore split on v7x
                vmem_limit_bytes=_vmem_limit_bytes(),
            ),
        )

    try:
        out = build(True)(*args)
    except Exception:
        # Fallback for jax versions without Buffered(1) support on BlockSpec.
        out = build(False)(*args)

    return out.reshape(B, Dout)


def reference_forward(x, pos, wq, bq, wk, bk, wv, bv, wc, bc, *, num_heads):
    """Pure-JAX mirror of the PyTorch forward for correctness checking."""
    B, L, C = x.shape
    hd = C // num_heads
    tok = jnp.concatenate([x.mean(axis=1, keepdims=True), x], axis=1)  # (B,L+1,C)
    tok = tok + pos[None]
    q = tok[:, :1] @ wq + bq
    k = tok @ wk + bk
    v = tok @ wv + bv
    q = q.reshape(B, 1, num_heads, hd).transpose(0, 2, 1, 3) * hd ** -0.5
    k = k.reshape(B, L + 1, num_heads, hd).transpose(0, 2, 1, 3)
    v = v.reshape(B, L + 1, num_heads, hd).transpose(0, 2, 1, 3)
    s = jnp.einsum('bhqd,bhkd->bhqk', q, k)
    p = jax.nn.softmax(s, axis=-1)
    o = jnp.einsum('bhqk,bhkd->bhqd', p, v)
    o = o.transpose(0, 2, 1, 3).reshape(B, 1, C)
    return (o @ wc + bc)[:, 0]


if __name__ == "__main__":
    # Module config (small synthetic shapes)
    B = 2
    spacial_dim = 16        # number of tokens L
    embed_dim = 32
    num_heads = 4
    output_dim = 64
    L, C, Dout = spacial_dim, embed_dim, output_dim

    key = jax.random.PRNGKey(0)
    keys = jax.random.split(key, 12)

    # Deterministic parameter init (shapes per the PyTorch __init__).
    # PyTorch Linear stores weight (out, in); we keep (in, out) so y = x @ W + b.
    pos = jax.random.normal(keys[0], (L + 1, C), jnp.float32) / math.sqrt(C)
    lin_scale = 1.0 / math.sqrt(C)
    wq = jax.random.uniform(keys[1], (C, C), jnp.float32, -lin_scale, lin_scale)
    bq = jax.random.uniform(keys[2], (C,), jnp.float32, -lin_scale, lin_scale)
    wk = jax.random.uniform(keys[3], (C, C), jnp.float32, -lin_scale, lin_scale)
    bk = jax.random.uniform(keys[4], (C,), jnp.float32, -lin_scale, lin_scale)
    wv = jax.random.uniform(keys[5], (C, C), jnp.float32, -lin_scale, lin_scale)
    bv = jax.random.uniform(keys[6], (C,), jnp.float32, -lin_scale, lin_scale)
    wc = jax.random.uniform(keys[7], (C, Dout), jnp.float32, -lin_scale, lin_scale)
    bc = jax.random.uniform(keys[8], (Dout,), jnp.float32, -lin_scale, lin_scale)

    # Input: (B, L, C)
    x = jax.random.normal(keys[9], (B, L, C), jnp.float32)

    ref = reference_forward(x, pos, wq, bq, wk, bk, wv, bv, wc, bc,
                            num_heads=num_heads)

    # f32 weights: tight tolerance.
    out = attention_pool_2d(x, pos, wq, bq, wk, bk, wv, bv, wc, bc,
                            num_heads=num_heads)
    out = jax.block_until_ready(out)
    np.testing.assert_allclose(np.asarray(out), np.asarray(ref),
                               rtol=1e-3, atol=1e-4)

    # bf16 matmul operands (v6e/v7x fast path): looser tolerance.
    out_bf16 = attention_pool_2d(x, pos, wq, bq, wk, bk, wv, bv, wc, bc,
                                 num_heads=num_heads,
                                 matmul_dtype=jnp.bfloat16)
    out_bf16 = jax.block_until_ready(out_bf16)
    np.testing.assert_allclose(np.asarray(out_bf16), np.asarray(ref),
                               rtol=5e-2, atol=5e-2)

    print("KERNEL_OK")
</pallas_src>

<mosaic_0001>
module attributes {stable_mosaic.version = 11 : i64} {
  func.func @kernel(%arg0: i32, %arg1: memref<1x1x16x32xf32, #tpu.memory_space<vmem>>, %arg2: memref<1x32xf32, #tpu.memory_space<vmem>>, %arg3: memref<16x32xf32, #tpu.memory_space<vmem>>, %arg4: memref<32x32xf32, #tpu.memory_space<vmem>>, %arg5: memref<1x32xf32, #tpu.memory_space<vmem>>, %arg6: memref<32x32xf32, #tpu.memory_space<vmem>>, %arg7: memref<1x32xf32, #tpu.memory_space<vmem>>, %arg8: memref<32x32xf32, #tpu.memory_space<vmem>>, %arg9: memref<1x32xf32, #tpu.memory_space<vmem>>, %arg10: memref<32x64xf32, #tpu.memory_space<vmem>>, %arg11: memref<1x64xf32, #tpu.memory_space<vmem>>, %arg12: memref<32x4xf32, #tpu.memory_space<vmem>>, %arg13: memref<4x32xf32, #tpu.memory_space<vmem>>, %arg14: memref<1x1x64xf32, #tpu.memory_space<vmem>>) attributes {dimension_semantics = [#tpu.dimension_semantics<parallel>], iteration_bounds = array<i64: 2>, scalar_prefetch = 0 : i64, scratch_operands = 0 : i64, tpu.core_type = #tpu.core_type<tc>, window_params = [{transform_indices = @transform_0, window_bounds = array<i64: 1, 1, 16, 32>}, {pipeline_mode = #tpu.pipeline_mode<synchronous>, transform_indices = @transform_1, window_bounds = array<i64: 1, 32>}, {pipeline_mode = #tpu.pipeline_mode<synchronous>, transform_indices = @transform_2, window_bounds = array<i64: 16, 32>}, {pipeline_mode = #tpu.pipeline_mode<synchronous>, transform_indices = @transform_3, window_bounds = array<i64: 32, 32>}, {pipeline_mode = #tpu.pipeline_mode<synchronous>, transform_indices = @transform_4, window_bounds = array<i64: 1, 32>}, {pipeline_mode = #tpu.pipeline_mode<synchronous>, transform_indices = @transform_5, window_bounds = array<i64: 32, 32>}, {pipeline_mode = #tpu.pipeline_mode<synchronous>, transform_indices = @transform_6, window_bounds = array<i64: 1, 32>}, {pipeline_mode = #tpu.pipeline_mode<synchronous>, transform_indices = @transform_7, window_bounds = array<i64: 32, 32>}, {pipeline_mode = #tpu.pipeline_mode<synchronous>, transform_indices = @transform_8, window_bounds = array<i64: 1, 32>}, {pipeline_mode = #tpu.pipeline_mode<synchronous>, transform_indices = @transform_9, window_bounds = array<i64: 32, 64>}, {pipeline_mode = #tpu.pipeline_mode<synchronous>, transform_indices = @transform_10, window_bounds = array<i64: 1, 64>}, {pipeline_mode = #tpu.pipeline_mode<synchronous>, transform_indices = @transform_11, window_bounds = array<i64: 32, 4>}, {pipeline_mode = #tpu.pipeline_mode<synchronous>, transform_indices = @transform_12, window_bounds = array<i64: 4, 32>}, {transform_indices = @transform_13, window_bounds = array<i64: 1, 1, 64>}]} {
    %c0 = arith.constant 0 : index
    %c0_0 = arith.constant 0 : index
    %c0_1 = arith.constant 0 : index
    %c0_2 = arith.constant 0 : index
    %0 = vector.load %arg1[%c0, %c0_0, %c0_1, %c0_2] : memref<1x1x16x32xf32, #tpu.memory_space<vmem>>, vector<1x1x16x32xf32>
    %1 = vector.shape_cast %0 : vector<1x1x16x32xf32> to vector<1x16x32xf32>
    %c0_3 = arith.constant 0 : index
    %c0_4 = arith.constant 0 : index
    %2 = vector.load %arg2[%c0_3, %c0_4] : memref<1x32xf32, #tpu.memory_space<vmem>>, vector<1x32xf32>
    %c0_5 = arith.constant 0 : index
    %c0_6 = arith.constant 0 : index
    %3 = vector.load %arg3[%c0_5, %c0_6] : memref<16x32xf32, #tpu.memory_space<vmem>>, vector<16x32xf32>
    %cst = arith.constant dense<0.000000e+00> : vector<1x32xf32>
    %4 = vector.multi_reduction <add>, %1, %cst [1] : vector<1x16x32xf32> to vector<1x32xf32>
    %cst_7 = arith.constant 6.250000e-02 : f32
    %5 = vector.broadcast %cst_7 : f32 to vector<1x32xf32>
    %6 = arith.mulf %4, %5 : vector<1x32xf32>
    %7 = arith.addf %6, %2 : vector<1x32xf32>
    %8 = vector.shape_cast %3 : vector<16x32xf32> to vector<1x16x32xf32>
    %9 = arith.addf %1, %8 : vector<1x16x32xf32>
    %10 = vector.shape_cast %9 : vector<1x16x32xf32> to vector<16x32xf32>
    %11 = tpu.concatenate %10, %7 in 0 : vector<16x32xf32>, vector<1x32xf32> -> vector<17x32xf32>
    %c0_8 = arith.constant 0 : index
    %c0_9 = arith.constant 0 : index
    %12 = vector.load %arg6[%c0_8, %c0_9] : memref<32x32xf32, #tpu.memory_space<vmem>>, vector<32x32xf32>
    %cst_10 = arith.constant dense<0.000000e+00> : vector<17x32xf32>
    %13 = tpu.matmul %11, %12, %cst_10 {dimension_numbers = #tpu.dot_dimension_numbers<[1], [0], [0], [1], [0, 0, 1, 1], [], []>} : vector<17x32xf32>, vector<32x32xf32>, vector<17x32xf32> -> vector<17x32xf32>
    %c0_11 = arith.constant 0 : index
    %c0_12 = arith.constant 0 : index
    %14 = vector.load %arg7[%c0_11, %c0_12] : memref<1x32xf32, #tpu.memory_space<vmem>>, vector<1x32xf32>
    %15 = vector.broadcast %14 : vector<1x32xf32> to vector<17x32xf32>
    %16 = arith.addf %13, %15 : vector<17x32xf32>
    %c0_13 = arith.constant 0 : index
    %c0_14 = arith.constant 0 : index
    %17 = vector.load %arg8[%c0_13, %c0_14] : memref<32x32xf32, #tpu.memory_space<vmem>>, vector<32x32xf32>
    %cst_15 = arith.constant dense<0.000000e+00> : vector<17x32xf32>
    %18 = tpu.matmul %11, %17, %cst_15 {dimension_numbers = #tpu.dot_dimension_numbers<[1], [0], [0], [1], [0, 0, 1, 1], [], []>} : vector<17x32xf32>, vector<32x32xf32>, vector<17x32xf32> -> vector<17x32xf32>
    %c0_16 = arith.constant 0 : index
    %c0_17 = arith.constant 0 : index
    %19 = vector.load %arg9[%c0_16, %c0_17] : memref<1x32xf32, #tpu.memory_space<vmem>>, vector<1x32xf32>
    %20 = vector.broadcast %19 : vector<1x32xf32> to vector<17x32xf32>
    %21 = arith.addf %18, %20 : vector<17x32xf32>
    %c0_18 = arith.constant 0 : index
    %c0_19 = arith.constant 0 : index
    %22 = vector.load %arg4[%c0_18, %c0_19] : memref<32x32xf32, #tpu.memory_space<vmem>>, vector<32x32xf32>
    %cst_20 = arith.constant dense<0.000000e+00> : vector<1x32xf32>
    %23 = tpu.matmul %7, %22, %cst_20 {dimension_numbers = #tpu.dot_dimension_numbers<[1], [0], [0], [1], [0, 0, 1, 1], [], []>} : vector<1x32xf32>, vector<32x32xf32>, vector<1x32xf32> -> vector<1x32xf32>
    %c0_21 = arith.constant 0 : index
    %c0_22 = arith.constant 0 : index
    %24 = vector.load %arg5[%c0_21, %c0_22] : memref<1x32xf32, #tpu.memory_space<vmem>>, vector<1x32xf32>
    %25 = arith.addf %23, %24 : vector<1x32xf32>
    %26 = vector.extract_strided_slice %16 {offsets = [0, 0], sizes = [16, 32], strides = [1, 1]} : vector<17x32xf32> to vector<16x32xf32>
    %27 = vector.shape_cast %26 : vector<16x32xf32> to vector<1x16x32xf32>
    %28 = vector.extract_strided_slice %21 {offsets = [0, 0], sizes = [16, 32], strides = [1, 1]} : vector<17x32xf32> to vector<16x32xf32>
    %29 = vector.shape_cast %28 : vector<16x32xf32> to vector<1x16x32xf32>
    %30 = vector.extract_strided_slice %16 {offsets = [16, 0], sizes = [1, 32], strides = [1, 1]} : vector<17x32xf32> to vector<1x32xf32>
    %31 = vector.extract_strided_slice %21 {offsets = [16, 0], sizes = [1, 32], strides = [1, 1]} : vector<17x32xf32> to vector<1x32xf32>
    %c0_23 = arith.constant 0 : index
    %c0_24 = arith.constant 0 : index
    %32 = vector.load %arg12[%c0_23, %c0_24] : memref<32x4xf32, #tpu.memory_space<vmem>>, vector<32x4xf32>
    %c0_25 = arith.constant 0 : index
    %c0_26 = arith.constant 0 : index
    %33 = vector.load %arg13[%c0_25, %c0_26] : memref<4x32xf32, #tpu.memory_space<vmem>>, vector<4x32xf32>
    %34 = vector.shape_cast %25 : vector<1x32xf32> to vector<1x1x32xf32>
    %35 = vector.broadcast %34 : vector<1x1x32xf32> to vector<1x16x32xf32>
    %36 = arith.mulf %35, %27 : vector<1x16x32xf32>
    %37 = vector.shape_cast %36 : vector<1x16x32xf32> to vector<16x32xf32>
    %cst_27 = arith.constant dense<0.000000e+00> : vector<16x4xf32>
    %38 = tpu.matmul %37, %32, %cst_27 {dimension_numbers = #tpu.dot_dimension_numbers<[1], [0], [0], [1], [0, 0, 1, 1], [], []>} : vector<16x32xf32>, vector<32x4xf32>, vector<16x4xf32> -> vector<16x4xf32>
    %cst_28 = arith.constant 0.353553385 : f32
    %39 = vector.broadcast %cst_28 : f32 to vector<16x4xf32>
    %40 = arith.mulf %38, %39 : vector<16x4xf32>
    %41 = vector.shape_cast %40 : vector<16x4xf32> to vector<1x16x4xf32>
    %42 = arith.mulf %25, %30 : vector<1x32xf32>
    %cst_29 = arith.constant dense<0.000000e+00> : vector<1x4xf32>
    %43 = tpu.matmul %42, %32, %cst_29 {dimension_numbers = #tpu.dot_dimension_numbers<[1], [0], [0], [1], [0, 0, 1, 1], [], []>} : vector<1x32xf32>, vector<32x4xf32>, vector<1x4xf32> -> vector<1x4xf32>
    %cst_30 = arith.constant 0.353553385 : f32
    %44 = vector.broadcast %cst_30 : f32 to vector<1x4xf32>
    %45 = arith.mulf %43, %44 : vector<1x4xf32>
    %cst_31 = arith.constant dense<0xFF800000> : vector<1x4xf32>
    %46 = vector.multi_reduction <maximumf>, %41, %cst_31 [1] : vector<1x16x4xf32> to vector<1x4xf32>
    %47 = arith.maximumf %46, %45 : vector<1x4xf32>
    %48 = arith.subf %45, %47 : vector<1x4xf32>
    %49 = math.exp %48 : vector<1x4xf32>
    %50 = vector.shape_cast %47 : vector<1x4xf32> to vector<1x1x4xf32>
    %51 = vector.broadcast %50 : vector<1x1x4xf32> to vector<1x16x4xf32>
    %52 = arith.subf %41, %51 : vector<1x16x4xf32>
    %53 = math.exp %52 : vector<1x16x4xf32>
    %cst_32 = arith.constant dense<0.000000e+00> : vector<1x4xf32>
    %54 = vector.multi_reduction <add>, %53, %cst_32 [1] : vector<1x16x4xf32> to vector<1x4xf32>
    %55 = arith.addf %49, %54 : vector<1x4xf32>
    %cst_33 = arith.constant 1.000000e+00 : f32
    %56 = vector.broadcast %cst_33 : f32 to vector<1x4xf32>
    %57 = arith.divf %56, %55 : vector<1x4xf32>
    %58 = arith.mulf %49, %57 : vector<1x4xf32>
    %cst_34 = arith.constant dense<0.000000e+00> : vector<1x32xf32>
    %59 = tpu.matmul %58, %33, %cst_34 {dimension_numbers = #tpu.dot_dimension_numbers<[1], [0], [0], [1], [0, 0, 1, 1], [], []>} : vector<1x4xf32>, vector<4x32xf32>, vector<1x32xf32> -> vector<1x32xf32>
    %60 = vector.shape_cast %57 : vector<1x4xf32> to vector<1x1x4xf32>
    %61 = vector.broadcast %60 : vector<1x1x4xf32> to vector<1x16x4xf32>
    %62 = arith.mulf %53, %61 : vector<1x16x4xf32>
    %63 = vector.shape_cast %62 : vector<1x16x4xf32> to vector<16x4xf32>
    %cst_35 = arith.constant dense<0.000000e+00> : vector<16x32xf32>
    %64 = tpu.matmul %63, %33, %cst_35 {dimension_numbers = #tpu.dot_dimension_numbers<[1], [0], [0], [1], [0, 0, 1, 1], [], []>} : vector<16x4xf32>, vector<4x32xf32>, vector<16x32xf32> -> vector<16x32xf32>
    %65 = vector.shape_cast %64 : vector<16x32xf32> to vector<1x16x32xf32>
    %66 = arith.mulf %59, %31 : vector<1x32xf32>
    %67 = arith.mulf %65, %29 : vector<1x16x32xf32>
    %cst_36 = arith.constant dense<0.000000e+00> : vector<1x32xf32>
    %68 = vector.multi_reduction <add>, %67, %cst_36 [1] : vector<1x16x32xf32> to vector<1x32xf32>
    %69 = arith.addf %66, %68 : vector<1x32xf32>
    %c0_37 = arith.constant 0 : index
    %c0_38 = arith.constant 0 : index
    %70 = vector.load %arg10[%c0_37, %c0_38] : memref<32x64xf32, #tpu.memory_space<vmem>>, vector<32x64xf32>
    %cst_39 = arith.constant dense<0.000000e+00> : vector<1x64xf32>
    %71 = tpu.matmul %69, %70, %cst_39 {dimension_numbers = #tpu.dot_dimension_numbers<[1], [0], [0], [1], [0, 0, 1, 1], [], []>} : vector<1x32xf32>, vector<32x64xf32>, vector<1x64xf32> -> vector<1x64xf32>
    %c0_40 = arith.constant 0 : index
    %c0_41 = arith.constant 0 : index
    %72 = vector.load %arg11[%c0_40, %c0_41] : memref<1x64xf32, #tpu.memory_space<vmem>>, vector<1x64xf32>
    %73 = arith.addf %71, %72 : vector<1x64xf32>
    %c0_42 = arith.constant 0 : index
    %c0_43 = arith.constant 0 : index
    %c0_44 = arith.constant 0 : index
    %74 = vector.load %arg14[%c0_42, %c0_43, %c0_44] : memref<1x1x64xf32, #tpu.memory_space<vmem>>, vector<1x1x64xf32>
    %75 = vector.shape_cast %74 : vector<1x1x64xf32> to vector<1x64xf32>
    %76 = vector.shape_cast %73 : vector<1x64xf32> to vector<1x1x64xf32>
    tpu.vector_store %arg14[%c0_42, %c0_43, %c0_44], %76 {strides = array<i32>} : memref<1x1x64xf32, #tpu.memory_space<vmem>>, vector<1x1x64xf32>,
    return
  }
  func.func @transform_0(%arg0: i32) -> (i32, i32, i32, i32) {
    %c0_i32 = arith.constant 0 : i32
    %c0_i32_0 = arith.constant 0 : i32
    %c0_i32_1 = arith.constant 0 : i32
    %c0_i32_2 = arith.constant 0 : i32
    return %arg0, %c0_i32, %c0_i32_0, %c0_i32_1 : i32, i32, i32, i32
  }
  func.func @transform_1(%arg0: i32) -> (i32, i32) {
    %c0_i32 = arith.constant 0 : i32
    %c0_i32_0 = arith.constant 0 : i32
    %c0_i32_1 = arith.constant 0 : i32
    return %c0_i32, %c0_i32_0 : i32, i32
  }
  func.func @transform_2(%arg0: i32) -> (i32, i32) {
    %c0_i32 = arith.constant 0 : i32
    %c0_i32_0 = arith.constant 0 : i32
    %c0_i32_1 = arith.constant 0 : i32
    return %c0_i32, %c0_i32_0 : i32, i32
  }
  func.func @transform_3(%arg0: i32) -> (i32, i32) {
    %c0_i32 = arith.constant 0 : i32
    %c0_i32_0 = arith.constant 0 : i32
    %c0_i32_1 = arith.constant 0 : i32
    return %c0_i32, %c0_i32_0 : i32, i32
  }
  func.func @transform_4(%arg0: i32) -> (i32, i32) {
    %c0_i32 = arith.constant 0 : i32
    %c0_i32_0 = arith.constant 0 : i32
    %c0_i32_1 = arith.constant 0 : i32
    return %c0_i32, %c0_i32_0 : i32, i32
  }
  func.func @transform_5(%arg0: i32) -> (i32, i32) {
    %c0_i32 = arith.constant 0 : i32
    %c0_i32_0 = arith.constant 0 : i32
    %c0_i32_1 = arith.constant 0 : i32
    return %c0_i32, %c0_i32_0 : i32, i32
  }
  func.func @transform_6(%arg0: i32) -> (i32, i32) {
    %c0_i32 = arith.constant 0 : i32
    %c0_i32_0 = arith.constant 0 : i32
    %c0_i32_1 = arith.constant 0 : i32
    return %c0_i32, %c0_i32_0 : i32, i32
  }
  func.func @transform_7(%arg0: i32) -> (i32, i32) {
    %c0_i32 = arith.constant 0 : i32
    %c0_i32_0 = arith.constant 0 : i32
    %c0_i32_1 = arith.constant 0 : i32
    return %c0_i32, %c0_i32_0 : i32, i32
  }
  func.func @transform_8(%arg0: i32) -> (i32, i32) {
    %c0_i32 = arith.constant 0 : i32
    %c0_i32_0 = arith.constant 0 : i32
    %c0_i32_1 = arith.constant 0 : i32
    return %c0_i32, %c0_i32_0 : i32, i32
  }
  func.func @transform_9(%arg0: i32) -> (i32, i32) {
    %c0_i32 = arith.constant 0 : i32
    %c0_i32_0 = arith.constant 0 : i32
    %c0_i32_1 = arith.constant 0 : i32
    return %c0_i32, %c0_i32_0 : i32, i32
  }
  func.func @transform_10(%arg0: i32) -> (i32, i32) {
    %c0_i32 = arith.constant 0 : i32
    %c0_i32_0 = arith.constant 0 : i32
    %c0_i32_1 = arith.constant 0 : i32
    return %c0_i32, %c0_i32_0 : i32, i32
  }
  func.func @transform_11(%arg0: i32) -> (i32, i32) {
    %c0_i32 = arith.constant 0 : i32
    %c0_i32_0 = arith.constant 0 : i32
    %c0_i32_1 = arith.constant 0 : i32
    return %c0_i32, %c0_i32_0 : i32, i32
  }
  func.func @transform_12(%arg0: i32) -> (i32, i32) {
    %c0_i32 = arith.constant 0 : i32
    %c0_i32_0 = arith.constant 0 : i32
    %c0_i32_1 = arith.constant 0 : i32
    return %c0_i32, %c0_i32_0 : i32, i32
  }
  func.func @transform_13(%arg0: i32) -> (i32, i32, i32) {
    %c0_i32 = arith.constant 0 : i32
    %c0_i32_0 = arith.constant 0 : i32
    %c0_i32_1 = arith.constant 0 : i32
    return %arg0, %c0_i32, %c0_i32_0 : i32, i32, i32
  }
}

module attributes {stable_mosaic.version = 11 : i64} {
  func.func @kernel(%arg0: i32, %arg1: memref<1x1x16x32xf32, #tpu.memory_space<vmem>>, %arg2: memref<1x32xf32, #tpu.memory_space<vmem>>, %arg3: memref<16x32xf32, #tpu.memory_space<vmem>>, %arg4: memref<32x32xf32, #tpu.memory_space<vmem>>, %arg5: memref<1x32xf32, #tpu.memory_space<vmem>>, %arg6: memref<32x32xf32, #tpu.memory_space<vmem>>, %arg7: memref<1x32xf32, #tpu.memory_space<vmem>>, %arg8: memref<32x32xf32, #tpu.memory_space<vmem>>, %arg9: memref<1x32xf32, #tpu.memory_space<vmem>>, %arg10: memref<32x64xf32, #tpu.memory_space<vmem>>, %arg11: memref<1x64xf32, #tpu.memory_space<vmem>>, %arg12: memref<32x4xf32, #tpu.memory_space<vmem>>, %arg13: memref<4x32xf32, #tpu.memory_space<vmem>>, %arg14: memref<1x1x64xf32, #tpu.memory_space<vmem>>) attributes {dimension_semantics = [#tpu.dimension_semantics<parallel>], iteration_bounds = array<i64: 2>, scalar_prefetch = 0 : i64, scratch_operands = 0 : i64, tpu.core_type = #tpu.core_type<tc>, window_params = [{transform_indices = @transform_0, window_bounds = array<i64: 1, 1, 16, 32>}, {pipeline_mode = #tpu.pipeline_mode<synchronous>, transform_indices = @transform_1, window_bounds = array<i64: 1, 32>}, {pipeline_mode = #tpu.pipeline_mode<synchronous>, transform_indices = @transform_2, window_bounds = array<i64: 16, 32>}, {pipeline_mode = #tpu.pipeline_mode<synchronous>, transform_indices = @transform_3, window_bounds = array<i64: 32, 32>}, {pipeline_mode = #tpu.pipeline_mode<synchronous>, transform_indices = @transform_4, window_bounds = array<i64: 1, 32>}, {pipeline_mode = #tpu.pipeline_mode<synchronous>, transform_indices = @transform_5, window_bounds = array<i64: 32, 32>}, {pipeline_mode = #tpu.pipeline_mode<synchronous>, transform_indices = @transform_6, window_bounds = array<i64: 1, 32>}, {pipeline_mode = #tpu.pipeline_mode<synchronous>, transform_indices = @transform_7, window_bounds = array<i64: 32, 32>}, {pipeline_mode = #tpu.pipeline_mode<synchronous>, transform_indices = @transform_8, window_bounds = array<i64: 1, 32>}, {pipeline_mode = #tpu.pipeline_mode<synchronous>, transform_indices = @transform_9, window_bounds = array<i64: 32, 64>}, {pipeline_mode = #tpu.pipeline_mode<synchronous>, transform_indices = @transform_10, window_bounds = array<i64: 1, 64>}, {pipeline_mode = #tpu.pipeline_mode<synchronous>, transform_indices = @transform_11, window_bounds = array<i64: 32, 4>}, {pipeline_mode = #tpu.pipeline_mode<synchronous>, transform_indices = @transform_12, window_bounds = array<i64: 4, 32>}, {transform_indices = @transform_13, window_bounds = array<i64: 1, 1, 64>}]} {
    %c0 = arith.constant 0 : index
    %c0_0 = arith.constant 0 : index
    %c0_1 = arith.constant 0 : index
    %c0_2 = arith.constant 0 : index
    %0 = vector.load %arg1[%c0, %c0_0, %c0_1, %c0_2] : memref<1x1x16x32xf32, #tpu.memory_space<vmem>>, vector<1x1x16x32xf32>
    %1 = vector.shape_cast %0 : vector<1x1x16x32xf32> to vector<1x16x32xf32>
    %c0_3 = arith.constant 0 : index
    %c0_4 = arith.constant 0 : index
    %2 = vector.load %arg2[%c0_3, %c0_4] : memref<1x32xf32, #tpu.memory_space<vmem>>, vector<1x32xf32>
    %c0_5 = arith.constant 0 : index
    %c0_6 = arith.constant 0 : index
    %3 = vector.load %arg3[%c0_5, %c0_6] : memref<16x32xf32, #tpu.memory_space<vmem>>, vector<16x32xf32>
    %cst = arith.constant dense<0.000000e+00> : vector<1x32xf32>
    %4 = vector.multi_reduction <add>, %1, %cst [1] : vector<1x16x32xf32> to vector<1x32xf32>
    %cst_7 = arith.constant 6.250000e-02 : f32
    %5 = vector.broadcast %cst_7 : f32 to vector<1x32xf32>
    %6 = arith.mulf %4, %5 : vector<1x32xf32>
    %7 = arith.addf %6, %2 : vector<1x32xf32>
    %8 = vector.shape_cast %3 : vector<16x32xf32> to vector<1x16x32xf32>
    %9 = arith.addf %1, %8 : vector<1x16x32xf32>
    %10 = vector.shape_cast %9 : vector<1x16x32xf32> to vector<16x32xf32>
    %11 = tpu.concatenate %10, %7 in 0 : vector<16x32xf32>, vector<1x32xf32> -> vector<17x32xf32>
    %c0_8 = arith.constant 0 : index
    %c0_9 = arith.constant 0 : index
    %12 = vector.load %arg6[%c0_8, %c0_9] : memref<32x32xf32, #tpu.memory_space<vmem>>, vector<32x32xf32>
    %cst_10 = arith.constant dense<0.000000e+00> : vector<17x32xf32>
    %13 = tpu.matmul %11, %12, %cst_10 {dimension_numbers = #tpu.dot_dimension_numbers<[1], [0], [0], [1], [0, 0, 1, 1], [], []>} : vector<17x32xf32>, vector<32x32xf32>, vector<17x32xf32> -> vector<17x32xf32>
    %c0_11 = arith.constant 0 : index
    %c0_12 = arith.constant 0 : index
    %14 = vector.load %arg7[%c0_11, %c0_12] : memref<1x32xf32, #tpu.memory_space<vmem>>, vector<1x32xf32>
    %15 = vector.broadcast %14 : vector<1x32xf32> to vector<17x32xf32>
    %16 = arith.addf %13, %15 : vector<17x32xf32>
    %c0_13 = arith.constant 0 : index
    %c0_14 = arith.constant 0 : index
    %17 = vector.load %arg8[%c0_13, %c0_14] : memref<32x32xf32, #tpu.memory_space<vmem>>, vector<32x32xf32>
    %cst_15 = arith.constant dense<0.000000e+00> : vector<17x32xf32>
    %18 = tpu.matmul %11, %17, %cst_15 {dimension_numbers = #tpu.dot_dimension_numbers<[1], [0], [0], [1], [0, 0, 1, 1], [], []>} : vector<17x32xf32>, vector<32x32xf32>, vector<17x32xf32> -> vector<17x32xf32>
    %c0_16 = arith.constant 0 : index
    %c0_17 = arith.constant 0 : index
    %19 = vector.load %arg9[%c0_16, %c0_17] : memref<1x32xf32, #tpu.memory_space<vmem>>, vector<1x32xf32>
    %20 = vector.broadcast %19 : vector<1x32xf32> to vector<17x32xf32>
    %21 = arith.addf %18, %20 : vector<17x32xf32>
    %c0_18 = arith.constant 0 : index
    %c0_19 = arith.constant 0 : index
    %22 = vector.load %arg4[%c0_18, %c0_19] : memref<32x32xf32, #tpu.memory_space<vmem>>, vector<32x32xf32>
    %cst_20 = arith.constant dense<0.000000e+00> : vector<1x32xf32>
    %23 = tpu.matmul %7, %22, %cst_20 {dimension_numbers = #tpu.dot_dimension_numbers<[1], [0], [0], [1], [0, 0, 1, 1], [], []>} : vector<1x32xf32>, vector<32x32xf32>, vector<1x32xf32> -> vector<1x32xf32>
    %c0_21 = arith.constant 0 : index
    %c0_22 = arith.constant 0 : index
    %24 = vector.load %arg5[%c0_21, %c0_22] : memref<1x32xf32, #tpu.memory_space<vmem>>, vector<1x32xf32>
    %25 = arith.addf %23, %24 : vector<1x32xf32>
    %26 = vector.extract_strided_slice %16 {offsets = [0, 0], sizes = [16, 32], strides = [1, 1]} : vector<17x32xf32> to vector<16x32xf32>
    %27 = vector.shape_cast %26 : vector<16x32xf32> to vector<1x16x32xf32>
    %28 = vector.extract_strided_slice %21 {offsets = [0, 0], sizes = [16, 32], strides = [1, 1]} : vector<17x32xf32> to vector<16x32xf32>
    %29 = vector.shape_cast %28 : vector<16x32xf32> to vector<1x16x32xf32>
    %30 = vector.extract_strided_slice %16 {offsets = [16, 0], sizes = [1, 32], strides = [1, 1]} : vector<17x32xf32> to vector<1x32xf32>
    %31 = vector.extract_strided_slice %21 {offsets = [16, 0], sizes = [1, 32], strides = [1, 1]} : vector<17x32xf32> to vector<1x32xf32>
    %c0_23 = arith.constant 0 : index
    %c0_24 = arith.constant 0 : index
    %32 = vector.load %arg12[%c0_23, %c0_24] : memref<32x4xf32, #tpu.memory_space<vmem>>, vector<32x4xf32>
    %c0_25 = arith.constant 0 : index
    %c0_26 = arith.constant 0 : index
    %33 = vector.load %arg13[%c0_25, %c0_26] : memref<4x32xf32, #tpu.memory_space<vmem>>, vector<4x32xf32>
    %34 = vector.shape_cast %25 : vector<1x32xf32> to vector<1x1x32xf32>
    %35 = vector.broadcast %34 : vector<1x1x32xf32> to vector<1x16x32xf32>
    %36 = arith.mulf %35, %27 : vector<1x16x32xf32>
    %37 = vector.shape_cast %36 : vector<1x16x32xf32> to vector<16x32xf32>
    %cst_27 = arith.constant dense<0.000000e+00> : vector<16x4xf32>
    %38 = tpu.matmul %37, %32, %cst_27 {dimension_numbers = #tpu.dot_dimension_numbers<[1], [0], [0], [1], [0, 0, 1, 1], [], []>} : vector<16x32xf32>, vector<32x4xf32>, vector<16x4xf32> -> vector<16x4xf32>
    %cst_28 = arith.constant 0.353553385 : f32
    %39 = vector.broadcast %cst_28 : f32 to vector<16x4xf32>
    %40 = arith.mulf %38, %39 : vector<16x4xf32>
    %41 = vector.shape_cast %40 : vector<16x4xf32> to vector<1x16x4xf32>
    %42 = arith.mulf %25, %30 : vector<1x32xf32>
    %cst_29 = arith.constant dense<0.000000e+00> : vector<1x4xf32>
    %43 = tpu.matmul %42, %32, %cst_29 {dimension_numbers = #tpu.dot_dimension_numbers<[1], [0], [0], [1], [0, 0, 1, 1], [], []>} : vector<1x32xf32>, vector<32x4xf32>, vector<1x4xf32> -> vector<1x4xf32>
    %cst_30 = arith.constant 0.353553385 : f32
    %44 = vector.broadcast %cst_30 : f32 to vector<1x4xf32>
    %45 = arith.mulf %43, %44 : vector<1x4xf32>
    %cst_31 = arith.constant dense<0xFF800000> : vector<1x4xf32>
    %46 = vector.multi_reduction <maximumf>, %41, %cst_31 [1] : vector<1x16x4xf32> to vector<1x4xf32>
    %47 = arith.maximumf %46, %45 : vector<1x4xf32>
    %48 = arith.subf %45, %47 : vector<1x4xf32>
    %49 = math.exp %48 : vector<1x4xf32>
    %50 = vector.shape_cast %47 : vector<1x4xf32> to vector<1x1x4xf32>
    %51 = vector.broadcast %50 : vector<1x1x4xf32> to vector<1x16x4xf32>
    %52 = arith.subf %41, %51 : vector<1x16x4xf32>
    %53 = math.exp %52 : vector<1x16x4xf32>
    %cst_32 = arith.constant dense<0.000000e+00> : vector<1x4xf32>
    %54 = vector.multi_reduction <add>, %53, %cst_32 [1] : vector<1x16x4xf32> to vector<1x4xf32>
    %55 = arith.addf %49, %54 : vector<1x4xf32>
    %cst_33 = arith.constant 1.000000e+00 : f32
    %56 = vector.broadcast %cst_33 : f32 to vector<1x4xf32>
    %57 = arith.divf %56, %55 : vector<1x4xf32>
    %58 = arith.mulf %49, %57 : vector<1x4xf32>
    %cst_34 = arith.constant dense<0.000000e+00> : vector<1x32xf32>
    %59 = tpu.matmul %58, %33, %cst_34 {dimension_numbers = #tpu.dot_dimension_numbers<[1], [0], [0], [1], [0, 0, 1, 1], [], []>} : vector<1x4xf32>, vector<4x32xf32>, vector<1x32xf32> -> vector<1x32xf32>
    %60 = vector.shape_cast %57 : vector<1x4xf32> to vector<1x1x4xf32>
    %61 = vector.broadcast %60 : vector<1x1x4xf32> to vector<1x16x4xf32>
    %62 = arith.mulf %53, %61 : vector<1x16x4xf32>
    %63 = vector.shape_cast %62 : vector<1x16x4xf32> to vector<16x4xf32>
    %cst_35 = arith.constant dense<0.000000e+00> : vector<16x32xf32>
    %64 = tpu.matmul %63, %33, %cst_35 {dimension_numbers = #tpu.dot_dimension_numbers<[1], [0], [0], [1], [0, 0, 1, 1], [], []>} : vector<16x4xf32>, vector<4x32xf32>, vector<16x32xf32> -> vector<16x32xf32>
    %65 = vector.shape_cast %64 : vector<16x32xf32> to vector<1x16x32xf32>
    %66 = arith.mulf %59, %31 : vector<1x32xf32>
    %67 = arith.mulf %65, %29 : vector<1x16x32xf32>
    %cst_36 = arith.constant dense<0.000000e+00> : vector<1x32xf32>
    %68 = vector.multi_reduction <add>, %67, %cst_36 [1] : vector<1x16x32xf32> to vector<1x32xf32>
    %69 = arith.addf %66, %68 : vector<1x32xf32>
    %c0_37 = arith.constant 0 : index
    %c0_38 = arith.constant 0 : index
    %70 = vector.load %arg10[%c0_37, %c0_38] : memref<32x64xf32, #tpu.memory_space<vmem>>, vector<32x64xf32>
    %cst_39 = arith.constant dense<0.000000e+00> : vector<1x64xf32>
    %71 = tpu.matmul %69, %70, %cst_39 {dimension_numbers = #tpu.dot_dimension_numbers<[1], [0], [0], [1], [0, 0, 1, 1], [], []>} : vector<1x32xf32>, vector<32x64xf32>, vector<1x64xf32> -> vector<1x64xf32>
    %c0_40 = arith.constant 0 : index
    %c0_41 = arith.constant 0 : index
    %72 = vector.load %arg11[%c0_40, %c0_41] : memref<1x64xf32, #tpu.memory_space<vmem>>, vector<1x64xf32>
    %73 = arith.addf %71, %72 : vector<1x64xf32>
    %c0_42 = arith.constant 0 : index
    %c0_43 = arith.constant 0 : index
    %c0_44 = arith.constant 0 : index
    %74 = vector.load %arg14[%c0_42, %c0_43, %c0_44] : memref<1x1x64xf32, #tpu.memory_space<vmem>>, vector<1x1x64xf32>
    %75 = vector.shape_cast %74 : vector<1x1x64xf32> to vector<1x64xf32>
    %76 = vector.shape_cast %73 : vector<1x64xf32> to vector<1x1x64xf32>
    tpu.vector_store %arg14[%c0_42, %c0_43, %c0_44], %76 {strides = array<i32>} : memref<1x1x64xf32, #tpu.memory_space<vmem>>, vector<1x1x64xf32>,
    return
  }
  func.func @transform_0(%arg0: i32) -> (i32, i32, i32, i32) {
    %c0_i32 = arith.constant 0 : i32
    %c0_i32_0 = arith.constant 0 : i32
    %c0_i32_1 = arith.constant 0 : i32
    %c0_i32_2 = arith.constant 0 : i32
    return %arg0, %c0_i32, %c0_i32_0, %c0_i32_1 : i32, i32, i32, i32
  }
  func.func @transform_1(%arg0: i32) -> (i32, i32) {
    %c0_i32 = arith.constant 0 : i32
    %c0_i32_0 = arith.constant 0 : i32
    %c0_i32_1 = arith.constant 0 : i32
    return %c0_i32, %c0_i32_0 : i32, i32
  }
  func.func @transform_2(%arg0: i32) -> (i32, i32) {
    %c0_i32 = arith.constant 0 : i32
    %c0_i32_0 = arith.constant 0 : i32
    %c0_i32_1 = arith.constant 0 : i32
    return %c0_i32, %c0_i32_0 : i32, i32
  }
  func.func @transform_3(%arg0: i32) -> (i32, i32) {
    %c0_i32 = arith.constant 0 : i32
    %c0_i32_0 = arith.constant 0 : i32
    %c0_i32_1 = arith.constant 0 : i32
    return %c0_i32, %c0_i32_0 : i32, i32
  }
  func.func @transform_4(%arg0: i32) -> (i32, i32) {
    %c0_i32 = arith.constant 0 : i32
    %c0_i32_0 = arith.constant 0 : i32
    %c0_i32_1 = arith.constant 0 : i32
    return %c0_i32, %c0_i32_0 : i32, i32
  }
  func.func @transform_5(%arg0: i32) -> (i32, i32) {
    %c0_i32 = arith.constant 0 : i32
    %c0_i32_0 = arith.constant 0 : i32
    %c0_i32_1 = arith.constant 0 : i32
    return %c0_i32, %c0_i32_0 : i32, i32
  }
  func.func @transform_6(%arg0: i32) -> (i32, i32) {
    %c0_i32 = arith.constant 0 : i32
    %c0_i32_0 = arith.constant 0 : i32
    %c0_i32_1 = arith.constant 0 : i32
    return %c0_i32, %c0_i32_0 : i32, i32
  }
  func.func @transform_7(%arg0: i32) -> (i32, i32) {
    %c0_i32 = arith.constant 0 : i32
    %c0_i32_0 = arith.constant 0 : i32
    %c0_i32_1 = arith.constant 0 : i32
    return %c0_i32, %c0_i32_0 : i32, i32
  }
  func.func @transform_8(%arg0: i32) -> (i32, i32) {
    %c0_i32 = arith.constant 0 : i32
    %c0_i32_0 = arith.constant 0 : i32
    %c0_i32_1 = arith.constant 0 : i32
    return %c0_i32, %c0_i32_0 : i32, i32
  }
  func.func @transform_9(%arg0: i32) -> (i32, i32) {
    %c0_i32 = arith.constant 0 : i32
    %c0_i32_0 = arith.constant 0 : i32
    %c0_i32_1 = arith.constant 0 : i32
    return %c0_i32, %c0_i32_0 : i32, i32
  }
  func.func @transform_10(%arg0: i32) -> (i32, i32) {
    %c0_i32 = arith.constant 0 : i32
    %c0_i32_0 = arith.constant 0 : i32
    %c0_i32_1 = arith.constant 0 : i32
    return %c0_i32, %c0_i32_0 : i32, i32
  }
  func.func @transform_11(%arg0: i32) -> (i32, i32) {
    %c0_i32 = arith.constant 0 : i32
    %c0_i32_0 = arith.constant 0 : i32
    %c0_i32_1 = arith.constant 0 : i32
    return %c0_i32, %c0_i32_0 : i32, i32
  }
  func.func @transform_12(%arg0: i32) -> (i32, i32) {
    %c0_i32 = arith.constant 0 : i32
    %c0_i32_0 = arith.constant 0 : i32
    %c0_i32_1 = arith.constant 0 : i32
    return %c0_i32, %c0_i32_0 : i32, i32
  }
  func.func @transform_13(%arg0: i32) -> (i32, i32, i32) {
    %c0_i32 = arith.constant 0 : i32
    %c0_i32_0 = arith.constant 0 : i32
    %c0_i32_1 = arith.constant 0 : i32
    return %arg0, %c0_i32, %c0_i32_0 : i32, i32, i32
  }
}

</mosaic_0001>

<llo_original>
// kernel: tpu_custom_call.1
$region0: #{tpu_custom_call.1}
  #allocation0 [shape = 'u32[]', space=smem, size = 0x4, offset = 0x4, fixed_abs, tag = 'smem constant byte address 0x4 - core index']
  #allocation1 [shape = 'u32[144,128]{1,0:T(1,128)}', space=vmem, size = 0x12000, scoped, tag = 'internal scratch']
  %s0 = inlined_call_operand.vmem [shape: f32[2,1,16,32], index: 0, kind: input, shape index: {}]
  %s1 = inlined_call_operand.vmem [shape: f32[1,32], index: 1, kind: input, shape index: {}]
  %s2 = inlined_call_operand.hbm [shape: f32[16,32], index: 2, kind: input, shape index: {}]
  %s3 = inlined_call_operand.hbm [shape: f32[32,32], index: 3, kind: input, shape index: {}]
  %s4 = inlined_call_operand.vmem [shape: f32[1,32], index: 4, kind: input, shape index: {}]
  %s5 = inlined_call_operand.hbm [shape: f32[32,32], index: 5, kind: input, shape index: {}]
  %s6 = inlined_call_operand.vmem [shape: f32[1,32], index: 6, kind: input, shape index: {}]
  %s7 = inlined_call_operand.hbm [shape: f32[32,32], index: 7, kind: input, shape index: {}]
  %s8 = inlined_call_operand.vmem [shape: f32[1,32], index: 8, kind: input, shape index: {}]
  %s9 = inlined_call_operand.hbm [shape: f32[32,64], index: 9, kind: input, shape index: {}]
  %s10 = inlined_call_operand.vmem [shape: f32[1,64], index: 10, kind: input, shape index: {}]
  %s11 = inlined_call_operand.vmem [shape: f32[32,4], index: 11, kind: input, shape index: {}]
  %s12 = inlined_call_operand.vmem [shape: f32[4,32], index: 12, kind: input, shape index: {}]
  %s13 = inlined_call_operand.hbm [shape: f32[2,1,64], index: 13, kind: output, shape index: {}]
  %s14 = sld [smem:[#allocation0]]
  $region105: #{tpu_custom_call.1} parent=0
    _
  %s16 = ssub.s32 1, %s14
  %s17 = scalar_select 0, %s16, %s14
  $region1: #{tpu_custom_call.1} parent=0
    #allocation2 [shape = 'u8[8192]{0}', space=vmem, size = 0x2000, scoped, tag = 'input window, operand 2, single buffered']
    #allocation3 [shape = 's32[2]{0}', space=sflag, size = 0x8, scoped, tag = 'scoped memory for tpu_custom_call.1']
    #allocation4 [shape = 's32[2]{0}', space=sflag, size = 0x8, scoped, tag = 'scoped memory for tpu_custom_call.1']
    #allocation5 [shape = 'u8[16384]{0}', space=vmem, size = 0x4000, scoped, tag = 'input window, operand 3, single buffered']
    #allocation6 [shape = 's32[1]{0}', space=sflag, size = 0x4, scoped, tag = 'scoped memory for tpu_custom_call.1']
    #allocation7 [shape = 'u8[16384]{0}', space=vmem, size = 0x4000, scoped, tag = 'input window, operand 5, single buffered']
    #allocation8 [shape = 'u8[16384]{0}', space=vmem, size = 0x4000, scoped, tag = 'input window, operand 7, single buffered']
    #allocation9 [shape = 's32[1]{0}', space=sflag, size = 0x4, scoped, tag = 'scoped memory for tpu_custom_call.1']
    #allocation10 [shape = 'u8[16384]{0}', space=vmem, size = 0x4000, scoped, tag = 'input window, operand 9, single buffered']
    #allocation11 [shape = 'u8[1024]{0}', space=vmem, size = 0x400, scoped, tag = 'output window, operand 0']
    %18 = vsyncpa [#allocation3], 0
    %19 = vsyncpa [#allocation6], 0
    %20 = vsyncpa [#allocation9], 0
    %21 = vsyncpa [#allocation4], 0
    %s22 = scalar_lea.sflag [#allocation4], 1
    %23 = vsyncpa %s22, 0
    loop: start=0, step=1, limit=4
    $region2: #{tpu_custom_call.1} parent=1 // loop_pre_header
      _
    $region3: #{tpu_custom_call.1} parent=1 // loop_header
      %s25 = sphi 0, %s29
      %p26 = scmp.ge.s32.totalorder %s25, 4
      %s35 = sphi 0, %s37
      %s38 = sphi 0, %s35
      %s39 = sphi 0, %s38
      %s55 = sphi 0, %s39
      %s59 = sphi 0, %s59
      %s61 = sphi 0, %s59
      %s62 = sphi 0, %s61
      %s76 = sphi 0, %s62
      %s80 = sphi 0, %s80
      %s82 = sphi 0, %s80
      %s83 = sphi 0, %s82
      %s97 = sphi 0, %s83
      %s101 = sphi 0, %s101
      %s103 = sphi 0, %s101
      %s104 = sphi 0, %s103
      %s118 = sphi 0, %s104
      %s122 = sphi 0, %s122
      %s124 = sphi 0, %s122
      %s125 = sphi 0, %s124
      %s139 = sphi 0, %s125
      %s143 = sphi 0, %s143
      %s145 = sphi 0, %s143
      %s146 = sphi 0, %s145
      %s160 = sphi 0, %s146
      %s164 = sphi 0, %s164
      %s166 = sphi 0, %s164
      %s167 = sphi 0, %s166
      %s181 = sphi 0, %s167
      %s185 = sphi 0, %s185
      %s187 = sphi 0, %s185
      %s188 = sphi 0, %s187
      %s202 = sphi 0, %s188
      %s206 = sphi 0, %s206
      %s208 = sphi 0, %s206
      %s209 = sphi 0, %s208
      %s223 = sphi 0, %s209
      %s227 = sphi 0, %s227
      %s229 = sphi 0, %s227
      %s230 = sphi 0, %s229
      %s244 = sphi 0, %s230
      %s248 = sphi 0, %s248
      %s250 = sphi 0, %s248
      %s251 = sphi 0, %s250
      %s265 = sphi 0, %s251
      %s269 = sphi 0, %s269
      %s271 = sphi 0, %s269
      %s272 = sphi 0, %s271
      %s286 = sphi 0, %s272
      %s290 = sphi 0, %s290
      %s292 = sphi 0, %s290
      %s293 = sphi 0, %s292
      %s307 = sphi 0, %s293
      %s313 = sphi 0, %s315
      %s316 = sphi 0, %s313
      %s317 = sphi 0, %s316
      %s333 = sphi 0, %s317
    $region4: #{tpu_custom_call.1} parent=1 // loop_header_branch
      %28 = sbr.rel (%p26) target = $region8
    $region5: #{tpu_custom_call.1} parent=1 // loop_body
      %s30 = ssub.s32 %s25, 1
      %s31 = ssub.s32 %s25, 2
      %s32 = sadd.s32 %s25, 1
      %s33 = ssub.s32 %s25, %s32
      %p34 = scmp.eq.s32.totalorder %s33, 0
      %s36 = sadd.s32 %s35, 1
      %s37 = scalar_select %p34, %s35, %s36
      %p40 = pneg %p34
      %p41 = scmp.eq.s32.totalorder %s25, 1
      %p42 = por %p40, %p41
      %p43 = scmp.ne.s32.totalorder %s35, %s38
      %p44 = scmp.eq.s32.totalorder %s25, 0
      %p45 = por %p43, %p44
      %p46 = scmp.ne.s32.totalorder %s35, %s38
      %p47 = scmp.eq.s32.totalorder %s30, 1
      %p48 = por %p46, %p47
      %p49 = scmp.ne.s32.totalorder %s38, %s39
      %p50 = scmp.eq.s32.totalorder %s30, 0
      %p51 = por %p49, %p50
      %p52 = scmp.ne.s32.totalorder %s38, %s39
      %p53 = scmp.eq.s32.totalorder %s31, 1
      %p54 = por %p52, %p53
      %p56 = scmp.ne.s32.totalorder %s39, %s55
      %p57 = scmp.eq.s32.totalorder %s31, 0
      %p58 = por %p56, %p57
      %s60 = sadd.s32 %s59, 1
      %p63 = scmp.eq.s32.totalorder %s25, 1
      %p64 = scmp.ne.s32.totalorder %s59, %s61
      %p65 = scmp.eq.s32.totalorder %s25, 0
      %p66 = por %p64, %p65
      %p67 = scmp.ne.s32.totalorder %s59, %s61
      %p68 = scmp.eq.s32.totalorder %s30, 1
      %p69 = por %p67, %p68
      %p70 = scmp.ne.s32.totalorder %s61, %s62
      %p71 = scmp.eq.s32.totalorder %s30, 0
      %p72 = por %p70, %p71
      %p73 = scmp.ne.s32.totalorder %s61, %s62
      %p74 = scmp.eq.s32.totalorder %s31, 1
      %p75 = por %p73, %p74
      %p77 = scmp.ne.s32.totalorder %s62, %s76
      %p78 = scmp.eq.s32.totalorder %s31, 0
      %p79 = por %p77, %p78
      %s81 = sadd.s32 %s80, 1
      %p84 = scmp.eq.s32.totalorder %s25, 1
      %p85 = scmp.ne.s32.totalorder %s80, %s82
      %p86 = scmp.eq.s32.totalorder %s25, 0
      %p87 = por %p85, %p86
      %p88 = scmp.ne.s32.totalorder %s80, %s82
      %p89 = scmp.eq.s32.totalorder %s30, 1
      %p90 = por %p88, %p89
      %p91 = scmp.ne.s32.totalorder %s82, %s83
      %p92 = scmp.eq.s32.totalorder %s30, 0
      %p93 = por %p91, %p92
      %p94 = scmp.ne.s32.totalorder %s82, %s83
      %p95 = scmp.eq.s32.totalorder %s31, 1
      %p96 = por %p94, %p95
      %p98 = scmp.ne.s32.totalorder %s83, %s97
      %p99 = scmp.eq.s32.totalorder %s31, 0
      %p100 = por %p98, %p99
      %s102 = sadd.s32 %s101, 1
      %p105 = scmp.eq.s32.totalorder %s25, 1
      %p106 = scmp.ne.s32.totalorder %s101, %s103
      %p107 = scmp.eq.s32.totalorder %s25, 0
      %p108 = por %p106, %p107
      %p109 = scmp.ne.s32.totalorder %s101, %s103
      %p110 = scmp.eq.s32.totalorder %s30, 1
      %p111 = por %p109, %p110
      %p112 = scmp.ne.s32.totalorder %s103, %s104
      %p113 = scmp.eq.s32.totalorder %s30, 0
      %p114 = por %p112, %p113
      %p115 = scmp.ne.s32.totalorder %s103, %s104
      %p116 = scmp.eq.s32.totalorder %s31, 1
      %p117 = por %p115, %p116
      %p119 = scmp.ne.s32.totalorder %s104, %s118
      %p120 = scmp.eq.s32.totalorder %s31, 0
      %p121 = por %p119, %p120
      %s123 = sadd.s32 %s122, 1
      %p126 = scmp.eq.s32.totalorder %s25, 1
      %p127 = scmp.ne.s32.totalorder %s122, %s124
      %p128 = scmp.eq.s32.totalorder %s25, 0
      %p129 = por %p127, %p128
      %p130 = scmp.ne.s32.totalorder %s122, %s124
      %p131 = scmp.eq.s32.totalorder %s30, 1
      %p132 = por %p130, %p131
      %p133 = scmp.ne.s32.totalorder %s124, %s125
      %p134 = scmp.eq.s32.totalorder %s30, 0
      %p135 = por %p133, %p134
      %p136 = scmp.ne.s32.totalorder %s124, %s125
      %p137 = scmp.eq.s32.totalorder %s31, 1
      %p138 = por %p136, %p137
      %p140 = scmp.ne.s32.totalorder %s125, %s139
      %p141 = scmp.eq.s32.totalorder %s31, 0
      %p142 = por %p140, %p141
      %s144 = sadd.s32 %s143, 1
      %p147 = scmp.eq.s32.totalorder %s25, 1
      %p148 = scmp.ne.s32.totalorder %s143, %s145
      %p149 = scmp.eq.s32.totalorder %s25, 0
      %p150 = por %p148, %p149
      %p151 = scmp.ne.s32.totalorder %s143, %s145
      %p152 = scmp.eq.s32.totalorder %s30, 1
      %p153 = por %p151, %p152
      %p154 = scmp.ne.s32.totalorder %s145, %s146
      %p155 = scmp.eq.s32.totalorder %s30, 0
      %p156 = por %p154, %p155
      %p157 = scmp.ne.s32.totalorder %s145, %s146
      %p158 = scmp.eq.s32.totalorder %s31, 1
      %p159 = por %p157, %p158
      %p161 = scmp.ne.s32.totalorder %s146, %s160
      %p162 = scmp.eq.s32.totalorder %s31, 0
      %p163 = por %p161, %p162
      %s165 = sadd.s32 %s164, 1
      %p168 = scmp.eq.s32.totalorder %s25, 1
      %p169 = scmp.ne.s32.totalorder %s164, %s166
      %p170 = scmp.eq.s32.totalorder %s25, 0
      %p171 = por %p169, %p170
      %p172 = scmp.ne.s32.totalorder %s164, %s166
      %p173 = scmp.eq.s32.totalorder %s30, 1
      %p174 = por %p172, %p173
      %p175 = scmp.ne.s32.totalorder %s166, %s167
      %p176 = scmp.eq.s32.totalorder %s30, 0
      %p177 = por %p175, %p176
      %p178 = scmp.ne.s32.totalorder %s166, %s167
      %p179 = scmp.eq.s32.totalorder %s31, 1
      %p180 = por %p178, %p179
      %p182 = scmp.ne.s32.totalorder %s167, %s181
      %p183 = scmp.eq.s32.totalorder %s31, 0
      %p184 = por %p182, %p183
      %s186 = sadd.s32 %s185, 1
      %p189 = scmp.eq.s32.totalorder %s25, 1
      %p190 = scmp.ne.s32.totalorder %s185, %s187
      %p191 = scmp.eq.s32.totalorder %s25, 0
      %p192 = por %p190, %p191
      %p193 = scmp.ne.s32.totalorder %s185, %s187
      %p194 = scmp.eq.s32.totalorder %s30, 1
      %p195 = por %p193, %p194
      %p196 = scmp.ne.s32.totalorder %s187, %s188
      %p197 = scmp.eq.s32.totalorder %s30, 0
      %p198 = por %p196, %p197
      %p199 = scmp.ne.s32.totalorder %s187, %s188
      %p200 = scmp.eq.s32.totalorder %s31, 1
      %p201 = por %p199, %p200
      %p203 = scmp.ne.s32.totalorder %s188, %s202
      %p204 = scmp.eq.s32.totalorder %s31, 0
      %p205 = por %p203, %p204
      %s207 = sadd.s32 %s206, 1
      %p210 = scmp.eq.s32.totalorder %s25, 1
      %p211 = scmp.ne.s32.totalorder %s206, %s208
      %p212 = scmp.eq.s32.totalorder %s25, 0
      %p213 = por %p211, %p212
      %p214 = scmp.ne.s32.totalorder %s206, %s208
      %p215 = scmp.eq.s32.totalorder %s30, 1
      %p216 = por %p214, %p215
      %p217 = scmp.ne.s32.totalorder %s208, %s209
      %p218 = scmp.eq.s32.totalorder %s30, 0
      %p219 = por %p217, %p218
      %p220 = scmp.ne.s32.totalorder %s208, %s209
      %p221 = scmp.eq.s32.totalorder %s31, 1
      %p222 = por %p220, %p221
      %p224 = scmp.ne.s32.totalorder %s209, %s223
      %p225 = scmp.eq.s32.totalorder %s31, 0
      %p226 = por %p224, %p225
      %s228 = sadd.s32 %s227, 1
      %p231 = scmp.eq.s32.totalorder %s25, 1
      %p232 = scmp.ne.s32.totalorder %s227, %s229
      %p233 = scmp.eq.s32.totalorder %s25, 0
      %p234 = por %p232, %p233
      %p235 = scmp.ne.s32.totalorder %s227, %s229
      %p236 = scmp.eq.s32.totalorder %s30, 1
      %p237 = por %p235, %p236
      %p238 = scmp.ne.s32.totalorder %s229, %s230
      %p239 = scmp.eq.s32.totalorder %s30, 0
      %p240 = por %p238, %p239
      %p241 = scmp.ne.s32.totalorder %s229, %s230
      %p242 = scmp.eq.s32.totalorder %s31, 1
      %p243 = por %p241, %p242
      %p245 = scmp.ne.s32.totalorder %s230, %s244
      %p246 = scmp.eq.s32.totalorder %s31, 0
      %p247 = por %p245, %p246
      %s249 = sadd.s32 %s248, 1
      %p252 = scmp.eq.s32.totalorder %s25, 1
      %p253 = scmp.ne.s32.totalorder %s248, %s250
      %p254 = scmp.eq.s32.totalorder %s25, 0
      %p255 = por %p253, %p254
      %p256 = scmp.ne.s32.totalorder %s248, %s250
      %p257 = scmp.eq.s32.totalorder %s30, 1
      %p258 = por %p256, %p257
      %p259 = scmp.ne.s32.totalorder %s250, %s251
      %p260 = scmp.eq.s32.totalorder %s30, 0
      %p261 = por %p259, %p260
      %p262 = scmp.ne.s32.totalorder %s250, %s251
      %p263 = scmp.eq.s32.totalorder %s31, 1
      %p264 = por %p262, %p263
      %p266 = scmp.ne.s32.totalorder %s251, %s265
      %p267 = scmp.eq.s32.totalorder %s31, 0
      %p268 = por %p266, %p267
      %s270 = sadd.s32 %s269, 1
      %p273 = scmp.eq.s32.totalorder %s25, 1
      %p274 = scmp.ne.s32.totalorder %s269, %s271
      %p275 = scmp.eq.s32.totalorder %s25, 0
      %p276 = por %p274, %p275
      %p277 = scmp.ne.s32.totalorder %s269, %s271
      %p278 = scmp.eq.s32.totalorder %s30, 1
      %p279 = por %p277, %p278
      %p280 = scmp.ne.s32.totalorder %s271, %s272
      %p281 = scmp.eq.s32.totalorder %s30, 0
      %p282 = por %p280, %p281
      %p283 = scmp.ne.s32.totalorder %s271, %s272
      %p284 = scmp.eq.s32.totalorder %s31, 1
      %p285 = por %p283, %p284
      %p287 = scmp.ne.s32.totalorder %s272, %s286
      %p288 = scmp.eq.s32.totalorder %s31, 0
      %p289 = por %p287, %p288
      %s291 = sadd.s32 %s290, 1
      %p294 = scmp.eq.s32.totalorder %s25, 1
      %p295 = scmp.ne.s32.totalorder %s290, %s292
      %p296 = scmp.eq.s32.totalorder %s25, 0
      %p297 = por %p295, %p296
      %p298 = scmp.ne.s32.totalorder %s290, %s292
      %p299 = scmp.eq.s32.totalorder %s30, 1
      %p300 = por %p298, %p299
      %p301 = scmp.ne.s32.totalorder %s292, %s293
      %p302 = scmp.eq.s32.totalorder %s30, 0
      %p303 = por %p301, %p302
      %p304 = scmp.ne.s32.totalorder %s292, %s293
      %p305 = scmp.eq.s32.totalorder %s31, 1
      %p306 = por %p304, %p305
      %p308 = scmp.ne.s32.totalorder %s293, %s307
      %p309 = scmp.eq.s32.totalorder %s31, 0
      %p310 = por %p308, %p309
      %s311 = ssub.s32 %s25, %s32
      %p312 = scmp.eq.s32.totalorder %s311, 0
      %s314 = sadd.s32 %s313, 1
      %s315 = scalar_select %p312, %s313, %s314
      %p318 = pneg %p312
      %p319 = scmp.eq.s32.totalorder %s25, 1
      %p320 = por %p318, %p319
      %p321 = scmp.ne.s32.totalorder %s313, %s316
      %p322 = scmp.eq.s32.totalorder %s25, 0
      %p323 = por %p321, %p322
      %p324 = scmp.ne.s32.totalorder %s313, %s316
      %p325 = scmp.eq.s32.totalorder %s30, 1
      %p326 = por %p324, %p325
      %p327 = scmp.ne.s32.totalorder %s316, %s317
      %p328 = scmp.eq.s32.totalorder %s30, 0
      %p329 = por %p327, %p328
      %p330 = scmp.ne.s32.totalorder %s316, %s317
      %p331 = scmp.eq.s32.totalorder %s31, 1
      %p332 = por %p330, %p331
      %p334 = scmp.ne.s32.totalorder %s317, %s333
      %p335 = scmp.eq.s32.totalorder %s31, 0
      %p336 = por %p334, %p335
      %p337 = scmp.le.s32.totalorder 1, %s25
      %p338 = scmp.lt.s32.totalorder %s25, 3
      %p339 = pnand %p337, %p338
      %p340 = pneg %p339
      // Predicated region
      $region9: #{tpu_custom_call.1} parent=5 // pred_check
        _
      $region10: #{tpu_custom_call.1} parent=5 // pred_check_branch
        %342 = sbr.rel (%p339) target = $region12
      $region11: #{tpu_custom_call.1} parent=5 // pred_region
        %s343 = ssub.s32 %s25, 1
        // Predicated region
        $region13: #{tpu_custom_call.1} parent=11 // pred_check
          %p344 = pneg %p72
        $region14: #{tpu_custom_call.1} parent=11 // pred_check_branch
          %346 = sbr.rel (%p344) target = $region16
        $region15: #{tpu_custom_call.1} parent=11 // pred_region
          _
        $region16: #{tpu_custom_call.1} parent=11 // pred_fallthru
          _
        // Predicated region
        $region17: #{tpu_custom_call.1} parent=11 // pred_check
          %p347 = pneg %p93
        $region18: #{tpu_custom_call.1} parent=11 // pred_check_branch
          %349 = sbr.rel (%p347) target = $region20
        $region19: #{tpu_custom_call.1} parent=11 // pred_region
          %s351 = ssub.s32 256, 256
          %352 = vsyncadd [#allocation3], %s351
          %s353 = sshll.u32 [#allocation2], 4
          %s354 = int_to_ptr.vmem [resolvable:$true] %s353
          %359 = dma.hbm_to_vmem [thread:$0]  %s2, 256, %s354, [#allocation3], 128, 128, 8
        $region20: #{tpu_custom_call.1} parent=11 // pred_fallthru
          _
        // Predicated region
        $region21: #{tpu_custom_call.1} parent=11 // pred_check
          %p360 = pneg %p114
        $region22: #{tpu_custom_call.1} parent=11 // pred_check_branch
          %362 = sbr.rel (%p360) target = $region24
        $region23: #{tpu_custom_call.1} parent=11 // pred_region
          %s364 = ssub.s32 512, 512
          %365 = vsyncadd [#allocation6], %s364
          %s366 = sshll.u32 [#allocation5], 4
          %s367 = int_to_ptr.vmem [resolvable:$true] %s366
          %372 = dma.hbm_to_vmem [thread:$0]  %s3, 512, %s367, [#allocation6], 128, 128, 8
        $region24: #{tpu_custom_call.1} parent=11 // pred_fallthru
          _
        // Predicated region
        $region25: #{tpu_custom_call.1} parent=11 // pred_check
          %p373 = pneg %p135
        $region26: #{tpu_custom_call.1} parent=11 // pred_check_branch
          %375 = sbr.rel (%p373) target = $region28
        $region27: #{tpu_custom_call.1} parent=11 // pred_region
          _
        $region28: #{tpu_custom_call.1} parent=11 // pred_fallthru
          _
        // Predicated region
        $region29: #{tpu_custom_call.1} parent=11 // pred_check
          %p376 = pneg %p156
        $region30: #{tpu_custom_call.1} parent=11 // pred_check_branch
          %378 = sbr.rel (%p376) target = $region32
        $region31: #{tpu_custom_call.1} parent=11 // pred_region
          %s380 = ssub.s32 512, 512
          %381 = vsyncadd [#allocation6], %s380
          %s382 = sshll.u32 [#allocation7], 4
          %s383 = int_to_ptr.vmem [resolvable:$true] %s382
          %388 = dma.hbm_to_vmem [thread:$0]  %s5, 512, %s383, [#allocation6], 128, 128, 8
        $region32: #{tpu_custom_call.1} parent=11 // pred_fallthru
          _
        // Predicated region
        $region33: #{tpu_custom_call.1} parent=11 // pred_check
          %p389 = pneg %p177
        $region34: #{tpu_custom_call.1} parent=11 // pred_check_branch
          %391 = sbr.rel (%p389) target = $region36
        $region35: #{tpu_custom_call.1} parent=11 // pred_region
          _
        $region36: #{tpu_custom_call.1} parent=11 // pred_fallthru
          _
        // Predicated region
        $region37: #{tpu_custom_call.1} parent=11 // pred_check
          %p392 = pneg %p198
        $region38: #{tpu_custom_call.1} parent=11 // pred_check_branch
          %394 = sbr.rel (%p392) target = $region40
        $region39: #{tpu_custom_call.1} parent=11 // pred_region
          %s396 = ssub.s32 512, 512
          %397 = vsyncadd [#allocation9], %s396
          %s398 = sshll.u32 [#allocation8], 4
          %s399 = int_to_ptr.vmem [resolvable:$true] %s398
          %404 = dma.hbm_to_vmem [thread:$0]  %s7, 512, %s399, [#allocation9], 128, 128, 8
        $region40: #{tpu_custom_call.1} parent=11 // pred_fallthru
          _
        // Predicated region
        $region41: #{tpu_custom_call.1} parent=11 // pred_check
          %p405 = pneg %p219
        $region42: #{tpu_custom_call.1} parent=11 // pred_check_branch
          %407 = sbr.rel (%p405) target = $region44
        $region43: #{tpu_custom_call.1} parent=11 // pred_region
          _
        $region44: #{tpu_custom_call.1} parent=11 // pred_fallthru
          _
        // Predicated region
        $region45: #{tpu_custom_call.1} parent=11 // pred_check
          %p408 = pneg %p240
        $region46: #{tpu_custom_call.1} parent=11 // pred_check_branch
          %410 = sbr.rel (%p408) target = $region48
        $region47: #{tpu_custom_call.1} parent=11 // pred_region
          %s412 = ssub.s32 512, 512
          %413 = vsyncadd [#allocation9], %s412
          %s414 = sshll.u32 [#allocation10], 4
          %s415 = int_to_ptr.vmem [resolvable:$true] %s414
          %420 = dma.hbm_to_vmem [thread:$0]  %s9, 512, %s415, [#allocation9], 128, 128, 8
        $region48: #{tpu_custom_call.1} parent=11 // pred_fallthru
          _
        // Predicated region
        $region49: #{tpu_custom_call.1} parent=11 // pred_check
          %p421 = pneg %p261
        $region50: #{tpu_custom_call.1} parent=11 // pred_check_branch
          %423 = sbr.rel (%p421) target = $region52
        $region51: #{tpu_custom_call.1} parent=11 // pred_region
          _
        $region52: #{tpu_custom_call.1} parent=11 // pred_fallthru
          _
        // Predicated region
        $region53: #{tpu_custom_call.1} parent=11 // pred_check
          %p424 = pneg %p282
        $region54: #{tpu_custom_call.1} parent=11 // pred_check_branch
          %426 = sbr.rel (%p424) target = $region56
        $region55: #{tpu_custom_call.1} parent=11 // pred_region
          _
        $region56: #{tpu_custom_call.1} parent=11 // pred_fallthru
          _
        // Predicated region
        $region57: #{tpu_custom_call.1} parent=11 // pred_check
          %p427 = pneg %p303
        $region58: #{tpu_custom_call.1} parent=11 // pred_check_branch
          %429 = sbr.rel (%p427) target = $region60
        $region59: #{tpu_custom_call.1} parent=11 // pred_region
          _
        $region60: #{tpu_custom_call.1} parent=11 // pred_fallthru
          _
      $region12: #{tpu_custom_call.1} parent=5 // pred_fallthru
        _
      %p430 = scmp.lt.s32.totalorder %s25, 2
      // Predicated region
      $region61: #{tpu_custom_call.1} parent=5 // pred_check
        %p431 = pneg %p430
      $region62: #{tpu_custom_call.1} parent=5 // pred_check_branch
        %433 = sbr.rel (%p431) target = $region64
      $region63: #{tpu_custom_call.1} parent=5 // pred_region
        // Predicated region
        $region65: #{tpu_custom_call.1} parent=63 // pred_check
          %p434 = pneg %p45
        $region66: #{tpu_custom_call.1} parent=63 // pred_check_branch
          %436 = sbr.rel (%p434) target = $region68
        $region67: #{tpu_custom_call.1} parent=63 // pred_region
          %p437 = scmp.lt.s32.totalorder %s25, 1
          %s438 = scalar_select %p437, %s25, 1
          %s439 = smul.addr %s438, 2
          %s440 = smul.addr %s439, 8
          %s441 = scalar_lea.vmem %s0, %s440
        $region68: #{tpu_custom_call.1} parent=63 // pred_fallthru
          _
      $region64: #{tpu_custom_call.1} parent=5 // pred_fallthru
        _
      %p442 = scmp.le.s32.totalorder 1, %s25
      %p443 = scmp.lt.s32.totalorder %s25, 3
      %p444 = pnand %p442, %p443
      %p445 = pneg %p444
      // Predicated region
      $region69: #{tpu_custom_call.1} parent=5 // pred_check
        _
      $region70: #{tpu_custom_call.1} parent=5 // pred_check_branch
        %447 = sbr.rel (%p444) target = $region72
      $region71: #{tpu_custom_call.1} parent=5 // pred_region
        %s448 = ssub.s32 %s25, 1
        // Predicated region
        $region73: #{tpu_custom_call.1} parent=71 // pred_check
          %p449 = pneg %p93
        $region74: #{tpu_custom_call.1} parent=71 // pred_check_branch
          %451 = sbr.rel (%p449) target = $region76
        $region75: #{tpu_custom_call.1} parent=71 // pred_region
          %452 = dma.done [#allocation3], 256
        $region76: #{tpu_custom_call.1} parent=71 // pred_fallthru
          _
        // Predicated region
        $region77: #{tpu_custom_call.1} parent=71 // pred_check
          %p453 = pneg %p114
        $region78: #{tpu_custom_call.1} parent=71 // pred_check_branch
          %455 = sbr.rel (%p453) target = $region80
        $region79: #{tpu_custom_call.1} parent=71 // pred_region
          %456 = dma.done [#allocation6], 512
        $region80: #{tpu_custom_call.1} parent=71 // pred_fallthru
          _
        // Predicated region
        $region81: #{tpu_custom_call.1} parent=71 // pred_check
          %p457 = pneg %p156
        $region82: #{tpu_custom_call.1} parent=71 // pred_check_branch
          %459 = sbr.rel (%p457) target = $region84
        $region83: #{tpu_custom_call.1} parent=71 // pred_region
          %460 = dma.done [#allocation6], 512
        $region84: #{tpu_custom_call.1} parent=71 // pred_fallthru
          _
        // Predicated region
        $region85: #{tpu_custom_call.1} parent=71 // pred_check
          %p461 = pneg %p198
        $region86: #{tpu_custom_call.1} parent=71 // pred_check_branch
          %463 = sbr.rel (%p461) target = $region88
        $region87: #{tpu_custom_call.1} parent=71 // pred_region
          %464 = dma.done [#allocation9], 512
        $region88: #{tpu_custom_call.1} parent=71 // pred_fallthru
          _
        // Predicated region
        $region89: #{tpu_custom_call.1} parent=71 // pred_check
          %p465 = pneg %p240
        $region90: #{tpu_custom_call.1} parent=71 // pred_check_branch
          %467 = sbr.rel (%p465) target = $region92
        $region91: #{tpu_custom_call.1} parent=71 // pred_region
          %468 = dma.done [#allocation9], 512
        $region92: #{tpu_custom_call.1} parent=71 // pred_fallthru
          _
        %p469 = scmp.lt.s32.totalorder %s30, 1
        %s470 = scalar_select %p469, %s30, 1
        %s471 = smul.addr %s470, 2
        %s472 = smul.addr %s471, 8
        %s473 = scalar_lea.vmem %s0, %s472
        %p474 = pneg %p51
        %p475 = pneg %p48
        %p476 = pneg %p72
        %p477 = pneg %p69
        %p478 = pneg %p93
        %p479 = pneg %p90
        %p480 = pneg %p114
        %p481 = pneg %p111
        %p482 = pneg %p135
        %p483 = pneg %p132
        %p484 = pneg %p156
        %p485 = pneg %p153
        %p486 = pneg %p177
        %p487 = pneg %p174
        %p488 = pneg %p198
        %p489 = pneg %p195
        %p490 = pneg %p219
        %p491 = pneg %p216
        %p492 = pneg %p240
        %p493 = pneg %p237
        %p494 = pneg %p261
        %p495 = pneg %p258
        %p496 = pneg %p282
        %p497 = pneg %p279
        %p498 = pneg %p303
        %p499 = pneg %p300
        %p500 = pneg %p329
        %p501 = pneg %p326
        %s502 = sand.u32 %s316, 1
        %s503 = scalar_lea.sflag [#allocation4], %s502
        %s504 = sand.u32 %s316, 1
        %s505 = scalar_lea.vmem [#allocation11], %s504
        %p506 = scmp.lt.s32.totalorder %s30, 1
        %s507 = scalar_select %p506, %s30, 1
        %s508 = smul.addr %s507, 2
        %s509 = smul.addr %s508, 8
        %s510 = scalar_lea.vmem %s0, %s509
        %v511 = vld [vmem:[%s510] sm:$0xff]
        %v512 = vld [vmem:[%s510 + $0x8] sm:$0xff]
        %v513 = vld [vmem:[%s1] sm:$0x1]
        %v514 = vld [vmem:[#allocation2] sm:$0xff]
        %v515 = vld [vmem:[#allocation2 + $0x8] sm:$0xff]
        %vm516 = vcmask 261120
        %v517 = vsel %vm516, %v511, 0.0
        %v518 = vsel %vm516, %v512, 0.0
        %v519 = vadd.f32 %v517, %v518
        %v520 = vrot.slane %v519, 4
        %v521 = vadd.f32 %v519, %v520
        %v522 = vrot.slane %v521, 2
        %v523 = vadd.f32 %v521, %v522
        %v524 = vrot.slane %v523, 1
        %v525 = vadd.f32 %v523, %v524
        %v526 = vmul.f32 %v525, 0.0625
        %v527 = vadd.f32 %v526, %v513
        %v528 = vadd.f32 %v511, %v514
        %v529 = vadd.f32 %v512, %v515
        %v530 = vld [vmem:[#allocation7] sm:$0xff]
        %v531 = vld [vmem:[#allocation7 + $0x8] sm:$0xff]
        %v532 = vld [vmem:[#allocation7 + $0x10] sm:$0xff]
        %v533 = vld [vmem:[#allocation7 + $0x18] sm:$0xff]
        %v534 = vld [vmem:[%s6] sm:$0x1]
        %v536 = vlaneseq
        %v537 = vshrl.u32 %v536, 7
        %v538 = vsub.s32 0, %v537
        %v539 = vrot.slane %v534, %v538
        %v542 = vsel %vm516, %v528, 0
        %v545 = vsel %vm516, %v529, 0
        %v548 = vsel %vm516, %v527, 0
        %550 = vmatprep.subr.mxu0 0.0
        %551 = vmatpush1.msra.mxu0 0.0
        %552 = vmatprep.subr.mxu0 0.0
        %553 = vmatpush1.msra.mxu0 0.0
        %554 = vmatprep.subr.mxu0 0.0
        %555 = vmatpush1.msra.mxu0 0.0
        %556 = vmatprep.subr.mxu0 0.0
        %557 = vmatpush1.msra.mxu0 0.0
        %558 = vmatprep.subr.mxu0 0.0
        %559 = vmatpush1.msra.mxu0 0.0
        %560 = vmatprep.subr.mxu0 0.0
        %561 = vmatpush1.msra.mxu0 0.0
        %562 = vmatprep.subr.mxu0 0.0
        %563 = vmatpush1.msra.mxu0 0.0
        %564 = vmatprep.subr.mxu0 0.0
        %565 = vmatpush1.msra.mxu0 0.0
        %566 = vmatprep.subr.mxu0 0.0
        %567 = vmatpush1.msra.mxu0 0.0
        %568 = vmatprep.subr.mxu0 0.0
        %569 = vmatpush1.msra.mxu0 0.0
        %570 = vmatprep.subr.mxu0 0.0
        %571 = vmatpush1.msra.mxu0 0.0
        %572 = vmatprep.subr.mxu0 0.0
        %573 = vmatpush1.msra.mxu0 0.0
        %574 = vmatprep.subr.mxu0 0.0
        %575 = vmatpush1.msra.mxu0 %v533
        %576 = vmatprep.subr.mxu0 0.0
        %577 = vmatpush1.msra.mxu0 %v532
        %578 = vmatprep.subr.mxu0 0.0
        %579 = vmatpush1.msra.mxu0 %v531
        %580 = vmatprep.subr.mxu0 0.0
        %581 = vmatpush1.msra.mxu0 %v530
        %582 = vmatprep.subr.mxu0 0.0
        %583 = vmatpush2.msra.mxu0 0.0
        %584 = vmatprep.subr.mxu0 0.0
        %585 = vmatpush2.msra.mxu0 0.0
        %586 = vmatprep.subr.mxu0 0.0
        %587 = vmatpush2.msra.mxu0 0.0
        %588 = vmatprep.subr.mxu0 0.0
        %589 = vmatpush2.msra.mxu0 0.0
        %590 = vmatprep.subr.mxu0 0.0
        %591 = vmatpush2.msra.mxu0 0.0
        %592 = vmatprep.subr.mxu0 0.0
        %593 = vmatpush2.msra.mxu0 0.0
        %594 = vmatprep.subr.mxu0 0.0
        %595 = vmatpush2.msra.mxu0 0.0
        %596 = vmatprep.subr.mxu0 0.0
        %597 = vmatpush2.msra.mxu0 0.0
        %598 = vmatprep.subr.mxu0 0.0
        %599 = vmatpush2.msra.mxu0 0.0
        %600 = vmatprep.subr.mxu0 0.0
        %601 = vmatpush2.msra.mxu0 0.0
        %602 = vmatprep.subr.mxu0 0.0
        %603 = vmatpush2.msra.mxu0 0.0
        %604 = vmatprep.subr.mxu0 0.0
        %605 = vmatpush2.msra.mxu0 0.0
        %606 = vmatprep.subr.mxu0 0.0
        %607 = vmatpush2.msra.mxu0 0.0
        %608 = vmatprep.subr.mxu0 0.0
        %609 = vmatpush2.msra.mxu0 0.0
        %610 = vmatprep.subr.mxu0 0.0
        %611 = vmatpush2.msra.mxu0 0.0
        %612 = vmatprep.subr.mxu0 0.0
        %613 = vmatpush2.msra.mxu0 0.0
        %614 = vmatprep.mubr.f32.mxu0 0.0
        %615 = vmatmul.mubr.f32.gmra.mxu0 %v542
        %v616 = vpop.f32.mrf.mxu0
        %v617 = vadd.f32 %v539, %v616
        %v618 = vpop.f32.mrf.mxu0
        %619 = vmatprep.mubr.f32.mxu0 0.0
        %620 = vmatmul.mubr.f32.gmra.mxu0 %v545
        %v621 = vpop.f32.mrf.mxu0
        %v622 = vadd.f32 %v539, %v621
        %v623 = vpop.f32.mrf.mxu0
        %624 = vmatprep.mubr.f32.mxu0 0.0
        %625 = vmatmul.mubr.f32.gmra.mxu0 %v548
        %v626 = vpop.f32.mrf.mxu0
        %v627 = vadd.f32 %v539, %v626
        %v628 = vpop.f32.mrf.mxu0
        %629 = vdwg.mxu0
        %v630 = vld [vmem:[#allocation8] sm:$0xff]
        %v631 = vld [vmem:[#allocation8 + $0x8] sm:$0xff]
        %v632 = vld [vmem:[#allocation8 + $0x10] sm:$0xff]
        %v633 = vld [vmem:[#allocation8 + $0x18] sm:$0xff]
        %v634 = vld [vmem:[%s8] sm:$0x1]
        %v636 = vlaneseq
        %v637 = vshrl.u32 %v636, 7
        %v638 = vsub.s32 0, %v637
        %v639 = vrot.slane %v634, %v638
        %641 = vmatprep.subr.mxu0 0.0
        %642 = vmatpush1.msra.mxu0 0.0
        %643 = vmatprep.subr.mxu0 0.0
        %644 = vmatpush1.msra.mxu0 0.0
        %645 = vmatprep.subr.mxu0 0.0
        %646 = vmatpush1.msra.mxu0 0.0
        %647 = vmatprep.subr.mxu0 0.0
        %648 = vmatpush1.msra.mxu0 0.0
        %649 = vmatprep.subr.mxu0 0.0
        %650 = vmatpush1.msra.mxu0 0.0
        %651 = vmatprep.subr.mxu0 0.0
        %652 = vmatpush1.msra.mxu0 0.0
        %653 = vmatprep.subr.mxu0 0.0
        %654 = vmatpush1.msra.mxu0 0.0
        %655 = vmatprep.subr.mxu0 0.0
        %656 = vmatpush1.msra.mxu0 0.0
        %657 = vmatprep.subr.mxu0 0.0
        %658 = vmatpush1.msra.mxu0 0.0
        %659 = vmatprep.subr.mxu0 0.0
        %660 = vmatpush1.msra.mxu0 0.0
        %661 = vmatprep.subr.mxu0 0.0
        %662 = vmatpush1.msra.mxu0 0.0
        %663 = vmatprep.subr.mxu0 0.0
        %664 = vmatpush1.msra.mxu0 0.0
        %665 = vmatprep.subr.mxu0 0.0
        %666 = vmatpush1.msra.mxu0 %v633
        %667 = vmatprep.subr.mxu0 0.0
        %668 = vmatpush1.msra.mxu0 %v632
        %669 = vmatprep.subr.mxu0 0.0
        %670 = vmatpush1.msra.mxu0 %v631
        %671 = vmatprep.subr.mxu0 0.0
        %672 = vmatpush1.msra.mxu0 %v630
        %673 = vmatprep.subr.mxu0 0.0
        %674 = vmatpush2.msra.mxu0 0.0
        %675 = vmatprep.subr.mxu0 0.0
        %676 = vmatpush2.msra.mxu0 0.0
        %677 = vmatprep.subr.mxu0 0.0
        %678 = vmatpush2.msra.mxu0 0.0
        %679 = vmatprep.subr.mxu0 0.0
        %680 = vmatpush2.msra.mxu0 0.0
        %681 = vmatprep.subr.mxu0 0.0
        %682 = vmatpush2.msra.mxu0 0.0
        %683 = vmatprep.subr.mxu0 0.0
        %684 = vmatpush2.msra.mxu0 0.0
        %685 = vmatprep.subr.mxu0 0.0
        %686 = vmatpush2.msra.mxu0 0.0
        %687 = vmatprep.subr.mxu0 0.0
        %688 = vmatpush2.msra.mxu0 0.0
        %689 = vmatprep.subr.mxu0 0.0
        %690 = vmatpush2.msra.mxu0 0.0
        %691 = vmatprep.subr.mxu0 0.0
        %692 = vmatpush2.msra.mxu0 0.0
        %693 = vmatprep.subr.mxu0 0.0
        %694 = vmatpush2.msra.mxu0 0.0
        %695 = vmatprep.subr.mxu0 0.0
        %696 = vmatpush2.msra.mxu0 0.0
        %697 = vmatprep.subr.mxu0 0.0
        %698 = vmatpush2.msra.mxu0 0.0
        %699 = vmatprep.subr.mxu0 0.0
        %700 = vmatpush2.msra.mxu0 0.0
        %701 = vmatprep.subr.mxu0 0.0
        %702 = vmatpush2.msra.mxu0 0.0
        %703 = vmatprep.subr.mxu0 0.0
        %704 = vmatpush2.msra.mxu0 0.0
        %705 = vmatprep.mubr.f32.mxu0 0.0
        %706 = vmatmul.mubr.f32.gmra.mxu0 %v542
        %v707 = vpop.f32.mrf.mxu0
        %v708 = vadd.f32 %v639, %v707
        %v709 = vpop.f32.mrf.mxu0
        %710 = vmatprep.mubr.f32.mxu0 0.0
        %711 = vmatmul.mubr.f32.gmra.mxu0 %v545
        %v712 = vpop.f32.mrf.mxu0
        %v713 = vadd.f32 %v639, %v712
        %v714 = vpop.f32.mrf.mxu0
        %715 = vmatprep.mubr.f32.mxu0 0.0
        %716 = vmatmul.mubr.f32.gmra.mxu0 %v548
        %v717 = vpop.f32.mrf.mxu0
        %v718 = vadd.f32 %v639, %v717
        %v719 = vpop.f32.mrf.mxu0
        %720 = vdwg.mxu0
        %v721 = vld [vmem:[#allocation5] sm:$0xff]
        %v722 = vld [vmem:[#allocation5 + $0x8] sm:$0xff]
        %v723 = vld [vmem:[#allocation5 + $0x10] sm:$0xff]
        %v724 = vld [vmem:[#allocation5 + $0x18] sm:$0xff]
        %v725 = vld [vmem:[%s4] sm:$0x1]
        %726 = vmatprep.subr.mxu0 0.0
        %727 = vmatpush1.msra.mxu0 0.0
        %728 = vmatprep.subr.mxu0 0.0
        %729 = vmatpush1.msra.mxu0 0.0
        %730 = vmatprep.subr.mxu0 0.0
        %731 = vmatpush1.msra.mxu0 0.0
        %732 = vmatprep.subr.mxu0 0.0
        %733 = vmatpush1.msra.mxu0 0.0
        %734 = vmatprep.subr.mxu0 0.0
        %735 = vmatpush1.msra.mxu0 0.0
        %736 = vmatprep.subr.mxu0 0.0
        %737 = vmatpush1.msra.mxu0 0.0
        %738 = vmatprep.subr.mxu0 0.0
        %739 = vmatpush1.msra.mxu0 0.0
        %740 = vmatprep.subr.mxu0 0.0
        %741 = vmatpush1.msra.mxu0 0.0
        %742 = vmatprep.subr.mxu0 0.0
        %743 = vmatpush1.msra.mxu0 0.0
        %744 = vmatprep.subr.mxu0 0.0
        %745 = vmatpush1.msra.mxu0 0.0
        %746 = vmatprep.subr.mxu0 0.0
        %747 = vmatpush1.msra.mxu0 0.0
        %748 = vmatprep.subr.mxu0 0.0
        %749 = vmatpush1.msra.mxu0 0.0
        %750 = vmatprep.subr.mxu0 0.0
        %751 = vmatpush1.msra.mxu0 %v724
        %752 = vmatprep.subr.mxu0 0.0
        %753 = vmatpush1.msra.mxu0 %v723
        %754 = vmatprep.subr.mxu0 0.0
        %755 = vmatpush1.msra.mxu0 %v722
        %756 = vmatprep.subr.mxu0 0.0
        %757 = vmatpush1.msra.mxu0 %v721
        %758 = vmatprep.subr.mxu0 0.0
        %759 = vmatpush2.msra.mxu0 0.0
        %760 = vmatprep.subr.mxu0 0.0
        %761 = vmatpush2.msra.mxu0 0.0
        %762 = vmatprep.subr.mxu0 0.0
        %763 = vmatpush2.msra.mxu0 0.0
        %764 = vmatprep.subr.mxu0 0.0
        %765 = vmatpush2.msra.mxu0 0.0
        %766 = vmatprep.subr.mxu0 0.0
        %767 = vmatpush2.msra.mxu0 0.0
        %768 = vmatprep.subr.mxu0 0.0
        %769 = vmatpush2.msra.mxu0 0.0
        %770 = vmatprep.subr.mxu0 0.0
        %771 = vmatpush2.msra.mxu0 0.0
        %772 = vmatprep.subr.mxu0 0.0
        %773 = vmatpush2.msra.mxu0 0.0
        %774 = vmatprep.subr.mxu0 0.0
        %775 = vmatpush2.msra.mxu0 0.0
        %776 = vmatprep.subr.mxu0 0.0
        %777 = vmatpush2.msra.mxu0 0.0
        %778 = vmatprep.subr.mxu0 0.0
        %779 = vmatpush2.msra.mxu0 0.0
        %780 = vmatprep.subr.mxu0 0.0
        %781 = vmatpush2.msra.mxu0 0.0
        %782 = vmatprep.subr.mxu0 0.0
        %783 = vmatpush2.msra.mxu0 0.0
        %784 = vmatprep.subr.mxu0 0.0
        %785 = vmatpush2.msra.mxu0 0.0
        %786 = vmatprep.subr.mxu0 0.0
        %787 = vmatpush2.msra.mxu0 0.0
        %788 = vmatprep.subr.mxu0 0.0
        %789 = vmatpush2.msra.mxu0 0.0
        %790 = vmatprep.mubr.f32.mxu0 0.0
        %791 = vmatmul.mubr.f32.gmra.mxu0 %v548
        %v792 = vpop.f32.mrf.mxu0
        %v793 = vadd.f32 %v725, %v792
        %v794 = vpop.f32.mrf.mxu0
        %795 = vdwg.mxu0
        %v796 = vld [vmem:[%s11] sm:$0xff]
        %v797 = vld [vmem:[%s11 + $0x8] sm:$0xff]
        %v798 = vld [vmem:[%s11 + $0x10] sm:$0xff]
        %v799 = vld [vmem:[%s11 + $0x18] sm:$0xff]
        %v800 = vld [vmem:[%s12] sm:$0xf]
        %v801 = vlaneseq
        %v802 = vshrl.u32 %v801, 7
        %v803 = vsub.s32 0, %v802
        %v804 = vrot.slane %v793, %v803
        %v805 = vmul.f32 %v804, %v617
        %v806 = vmul.f32 %v804, %v622
        %v808 = vsel %vm516, %v805, 0
        %v811 = vsel %vm516, %v806, 0
        %813 = vmatprep.subr.mxu0 0.0
        %814 = vmatpush1.msra.mxu0 0.0
        %815 = vmatprep.subr.mxu0 0.0
        %816 = vmatpush1.msra.mxu0 0.0
        %817 = vmatprep.subr.mxu0 0.0
        %818 = vmatpush1.msra.mxu0 0.0
        %819 = vmatprep.subr.mxu0 0.0
        %820 = vmatpush1.msra.mxu0 0.0
        %821 = vmatprep.subr.mxu0 0.0
        %822 = vmatpush1.msra.mxu0 0.0
        %823 = vmatprep.subr.mxu0 0.0
        %824 = vmatpush1.msra.mxu0 0.0
        %825 = vmatprep.subr.mxu0 0.0
        %826 = vmatpush1.msra.mxu0 0.0
        %827 = vmatprep.subr.mxu0 0.0
        %828 = vmatpush1.msra.mxu0 0.0
        %829 = vmatprep.subr.mxu0 0.0
        %830 = vmatpush1.msra.mxu0 0.0
        %831 = vmatprep.subr.mxu0 0.0
        %832 = vmatpush1.msra.mxu0 0.0
        %833 = vmatprep.subr.mxu0 0.0
        %834 = vmatpush1.msra.mxu0 0.0
        %835 = vmatprep.subr.mxu0 0.0
        %836 = vmatpush1.msra.mxu0 0.0
        %837 = vmatprep.subr.mxu0 0.0
        %838 = vmatpush1.msra.mxu0 %v799
        %839 = vmatprep.subr.mxu0 0.0
        %840 = vmatpush1.msra.mxu0 %v798
        %841 = vmatprep.subr.mxu0 0.0
        %842 = vmatpush1.msra.mxu0 %v797
        %843 = vmatprep.subr.mxu0 0.0
        %844 = vmatpush1.msra.mxu0 %v796
        %845 = vmatprep.subr.mxu0 0.0
        %846 = vmatpush2.msra.mxu0 0.0
        %847 = vmatprep.subr.mxu0 0.0
        %848 = vmatpush2.msra.mxu0 0.0
        %849 = vmatprep.subr.mxu0 0.0
        %850 = vmatpush2.msra.mxu0 0.0
        %851 = vmatprep.subr.mxu0 0.0
        %852 = vmatpush2.msra.mxu0 0.0
        %853 = vmatprep.subr.mxu0 0.0
        %854 = vmatpush2.msra.mxu0 0.0
        %855 = vmatprep.subr.mxu0 0.0
        %856 = vmatpush2.msra.mxu0 0.0
        %857 = vmatprep.subr.mxu0 0.0
        %858 = vmatpush2.msra.mxu0 0.0
        %859 = vmatprep.subr.mxu0 0.0
        %860 = vmatpush2.msra.mxu0 0.0
        %861 = vmatprep.subr.mxu0 0.0
        %862 = vmatpush2.msra.mxu0 0.0
        %863 = vmatprep.subr.mxu0 0.0
        %864 = vmatpush2.msra.mxu0 0.0
        %865 = vmatprep.subr.mxu0 0.0
        %866 = vmatpush2.msra.mxu0 0.0
        %867 = vmatprep.subr.mxu0 0.0
        %868 = vmatpush2.msra.mxu0 0.0
        %869 = vmatprep.subr.mxu0 0.0
        %870 = vmatpush2.msra.mxu0 0.0
        %871 = vmatprep.subr.mxu0 0.0
        %872 = vmatpush2.msra.mxu0 0.0
        %873 = vmatprep.subr.mxu0 0.0
        %874 = vmatpush2.msra.mxu0 0.0
        %875 = vmatprep.subr.mxu0 0.0
        %876 = vmatpush2.msra.mxu0 0.0
        %877 = vmatprep.mubr.f32.mxu0 0.0
        %878 = vmatmul.mubr.f32.gmra.mxu0 %v808
        %v879 = vpop.f32.mrf.mxu0
        %v880 = vadd.f32 0.0, %v879
        %v881 = vpop.f32.mrf.mxu0
        %882 = vmatprep.mubr.f32.mxu0 0.0
        %883 = vmatmul.mubr.f32.gmra.mxu0 %v811
        %v884 = vpop.f32.mrf.mxu0
        %v885 = vadd.f32 0.0, %v884
        %v886 = vpop.f32.mrf.mxu0
        %887 = vdwg.mxu0
        %v888 = vmul.f32 %v880, 0.35355338
        %v889 = vmul.f32 %v885, 0.35355338
        %v890 = vmul.f32 %v793, %v627
        %v892 = vsel %vm516, %v890, 0
        %894 = vmatprep.subr.mxu0 0.0
        %895 = vmatpush1.msra.mxu0 0.0
        %896 = vmatprep.subr.mxu0 0.0
        %897 = vmatpush1.msra.mxu0 0.0
        %898 = vmatprep.subr.mxu0 0.0
        %899 = vmatpush1.msra.mxu0 0.0
        %900 = vmatprep.subr.mxu0 0.0
        %901 = vmatpush1.msra.mxu0 0.0
        %902 = vmatprep.subr.mxu0 0.0
        %903 = vmatpush1.msra.mxu0 0.0
        %904 = vmatprep.subr.mxu0 0.0
        %905 = vmatpush1.msra.mxu0 0.0
        %906 = vmatprep.subr.mxu0 0.0
        %907 = vmatpush1.msra.mxu0 0.0
        %908 = vmatprep.subr.mxu0 0.0
        %909 = vmatpush1.msra.mxu0 0.0
        %910 = vmatprep.subr.mxu0 0.0
        %911 = vmatpush1.msra.mxu0 0.0
        %912 = vmatprep.subr.mxu0 0.0
        %913 = vmatpush1.msra.mxu0 0.0
        %914 = vmatprep.subr.mxu0 0.0
        %915 = vmatpush1.msra.mxu0 0.0
        %916 = vmatprep.subr.mxu0 0.0
        %917 = vmatpush1.msra.mxu0 0.0
        %918 = vmatprep.subr.mxu0 0.0
        %919 = vmatpush1.msra.mxu0 %v799
        %920 = vmatprep.subr.mxu0 0.0
        %921 = vmatpush1.msra.mxu0 %v798
        %922 = vmatprep.subr.mxu0 0.0
        %923 = vmatpush1.msra.mxu0 %v797
        %924 = vmatprep.subr.mxu0 0.0
        %925 = vmatpush1.msra.mxu0 %v796
        %926 = vmatprep.subr.mxu0 0.0
        %927 = vmatpush2.msra.mxu0 0.0
        %928 = vmatprep.subr.mxu0 0.0
        %929 = vmatpush2.msra.mxu0 0.0
        %930 = vmatprep.subr.mxu0 0.0
        %931 = vmatpush2.msra.mxu0 0.0
        %932 = vmatprep.subr.mxu0 0.0
        %933 = vmatpush2.msra.mxu0 0.0
        %934 = vmatprep.subr.mxu0 0.0
        %935 = vmatpush2.msra.mxu0 0.0
        %936 = vmatprep.subr.mxu0 0.0
        %937 = vmatpush2.msra.mxu0 0.0
        %938 = vmatprep.subr.mxu0 0.0
        %939 = vmatpush2.msra.mxu0 0.0
        %940 = vmatprep.subr.mxu0 0.0
        %941 = vmatpush2.msra.mxu0 0.0
        %942 = vmatprep.subr.mxu0 0.0
        %943 = vmatpush2.msra.mxu0 0.0
        %944 = vmatprep.subr.mxu0 0.0
        %945 = vmatpush2.msra.mxu0 0.0
        %946 = vmatprep.subr.mxu0 0.0
        %947 = vmatpush2.msra.mxu0 0.0
        %948 = vmatprep.subr.mxu0 0.0
        %949 = vmatpush2.msra.mxu0 0.0
        %950 = vmatprep.subr.mxu0 0.0
        %951 = vmatpush2.msra.mxu0 0.0
        %952 = vmatprep.subr.mxu0 0.0
        %953 = vmatpush2.msra.mxu0 0.0
        %954 = vmatprep.subr.mxu0 0.0
        %955 = vmatpush2.msra.mxu0 0.0
        %956 = vmatprep.subr.mxu0 0.0
        %957 = vmatpush2.msra.mxu0 0.0
        %958 = vmatprep.mubr.f32.mxu0 0.0
        %959 = vmatmul.mubr.f32.gmra.mxu0 %v892
        %v960 = vpop.f32.mrf.mxu0
        %v961 = vadd.f32 0.0, %v960
        %v962 = vpop.f32.mrf.mxu0
        %963 = vdwg.mxu0
        %v964 = vmul.f32 %v961, 0.35355338
        %vm965 = vcmask 31744
        %v966 = vsel %vm965, %v888, -inf
        %v967 = vsel %vm965, %v889, -inf
        %v968 = vmax.f32 %v966, %v967
        %v969 = vrot.slane %v968, 4
        %v970 = vmax.f32 %v968, %v969
        %v971 = vrot.slane %v970, 2
        %v972 = vmax.f32 %v970, %v971
        %v973 = vrot.slane %v972, 1
        %v974 = vmax.f32 %v972, %v973
        %v975 = vmax.f32 %v974, %v964
        %v976 = vsub.f32 %v964, %v975
        %v977 = vmul.f32 %v976, 1.442695
        %v978 = vpow.pop %v977
        %v979 = vlaneseq
        %v980 = vshrl.u32 %v979, 7
        %v981 = vsub.s32 0, %v980
        %v982 = vrot.slane %v975, %v981
        %v983 = vsub.f32 %v888, %v982
        %v984 = vsub.f32 %v889, %v982
        %v985 = vmul.f32 %v983, 1.442695
        %v986 = vpow.pop %v985
        %v987 = vmul.f32 %v984, 1.442695
        %v988 = vpow.pop %v987
        %v989 = vsel %vm965, %v986, 0.0
        %v990 = vsel %vm965, %v988, 0.0
        %v991 = vadd.f32 %v989, %v990
        %v992 = vrot.slane %v991, 4
        %v993 = vadd.f32 %v991, %v992
        %v994 = vrot.slane %v993, 2
        %v995 = vadd.f32 %v993, %v994
        %v996 = vrot.slane %v995, 1
        %v997 = vadd.f32 %v995, %v996
        %v998 = vadd.f32 %v978, %v997
        %v999 = vrcp.pop %v998
        %v1000 = vmul.f32 1.0, %v999
        %v1001 = vmul.f32 %v978, %v1000
        %v1003 = vsel %vm965, %v1001, 0
        %vm1005 = vcmask 1043456
        %v1007 = vsel %vm1005, %v800, 0
        %1009 = vmatprep.subr.mxu0 0.0
        %1010 = vmatpush1.msra.mxu0 0.0
        %1011 = vmatprep.subr.mxu0 0.0
        %1012 = vmatpush1.msra.mxu0 0.0
        %1013 = vmatprep.subr.mxu0 0.0
        %1014 = vmatpush1.msra.mxu0 0.0
        %1015 = vmatprep.subr.mxu0 0.0
        %1016 = vmatpush1.msra.mxu0 0.0
        %1017 = vmatprep.subr.mxu0 0.0
        %1018 = vmatpush1.msra.mxu0 0.0
        %1019 = vmatprep.subr.mxu0 0.0
        %1020 = vmatpush1.msra.mxu0 0.0
        %1021 = vmatprep.subr.mxu0 0.0
        %1022 = vmatpush1.msra.mxu0 0.0
        %1023 = vmatprep.subr.mxu0 0.0
        %1024 = vmatpush1.msra.mxu0 0.0
        %1025 = vmatprep.subr.mxu0 0.0
        %1026 = vmatpush1.msra.mxu0 0.0
        %1027 = vmatprep.subr.mxu0 0.0
        %1028 = vmatpush1.msra.mxu0 0.0
        %1029 = vmatprep.subr.mxu0 0.0
        %1030 = vmatpush1.msra.mxu0 0.0
        %1031 = vmatprep.subr.mxu0 0.0
        %1032 = vmatpush1.msra.mxu0 0.0
        %1033 = vmatprep.subr.mxu0 0.0
        %1034 = vmatpush1.msra.mxu0 0.0
        %1035 = vmatprep.subr.mxu0 0.0
        %1036 = vmatpush1.msra.mxu0 0.0
        %1037 = vmatprep.subr.mxu0 0.0
        %1038 = vmatpush1.msra.mxu0 0.0
        %1039 = vmatprep.subr.mxu0 0.0
        %1040 = vmatpush1.msra.mxu0 %v1007
        %1041 = vmatprep.subr.mxu0 0.0
        %1042 = vmatpush2.msra.mxu0 0.0
        %1043 = vmatprep.subr.mxu0 0.0
        %1044 = vmatpush2.msra.mxu0 0.0
        %1045 = vmatprep.subr.mxu0 0.0
        %1046 = vmatpush2.msra.mxu0 0.0
        %1047 = vmatprep.subr.mxu0 0.0
        %1048 = vmatpush2.msra.mxu0 0.0
        %1049 = vmatprep.subr.mxu0 0.0
        %1050 = vmatpush2.msra.mxu0 0.0
        %1051 = vmatprep.subr.mxu0 0.0
        %1052 = vmatpush2.msra.mxu0 0.0
        %1053 = vmatprep.subr.mxu0 0.0
        %1054 = vmatpush2.msra.mxu0 0.0
        %1055 = vmatprep.subr.mxu0 0.0
        %1056 = vmatpush2.msra.mxu0 0.0
        %1057 = vmatprep.subr.mxu0 0.0
        %1058 = vmatpush2.msra.mxu0 0.0
        %1059 = vmatprep.subr.mxu0 0.0
        %1060 = vmatpush2.msra.mxu0 0.0
        %1061 = vmatprep.subr.mxu0 0.0
        %1062 = vmatpush2.msra.mxu0 0.0
        %1063 = vmatprep.subr.mxu0 0.0
        %1064 = vmatpush2.msra.mxu0 0.0
        %1065 = vmatprep.subr.mxu0 0.0
        %1066 = vmatpush2.msra.mxu0 0.0
        %1067 = vmatprep.subr.mxu0 0.0
        %1068 = vmatpush2.msra.mxu0 0.0
        %1069 = vmatprep.subr.mxu0 0.0
        %1070 = vmatpush2.msra.mxu0 0.0
        %1071 = vmatprep.subr.mxu0 0.0
        %1072 = vmatpush2.msra.mxu0 0.0
        %1073 = vmatprep.mubr.f32.mxu0 0.0
        %1074 = vmatmul.mubr.f32.gmra.mxu0 %v1003
        %v1075 = vpop.f32.mrf.mxu0
        %v1076 = vadd.f32 0.0, %v1075
        %v1077 = vpop.f32.mrf.mxu0
        %1078 = vdwg.mxu0
        %v1079 = vlaneseq
        %v1080 = vshrl.u32 %v1079, 7
        %v1081 = vsub.s32 0, %v1080
        %v1082 = vrot.slane %v1000, %v1081
        %v1083 = vmul.f32 %v986, %v1082
        %v1084 = vmul.f32 %v988, %v1082
        %v1086 = vsel %vm965, %v1083, 0
        %v1089 = vsel %vm965, %v1084, 0
        %1091 = vmatprep.subr.mxu0 0.0
        %1092 = vmatpush1.msra.mxu0 0.0
        %1093 = vmatprep.subr.mxu0 0.0
        %1094 = vmatpush1.msra.mxu0 0.0
        %1095 = vmatprep.subr.mxu0 0.0
        %1096 = vmatpush1.msra.mxu0 0.0
        %1097 = vmatprep.subr.mxu0 0.0
        %1098 = vmatpush1.msra.mxu0 0.0
        %1099 = vmatprep.subr.mxu0 0.0
        %1100 = vmatpush1.msra.mxu0 0.0
        %1101 = vmatprep.subr.mxu0 0.0
        %1102 = vmatpush1.msra.mxu0 0.0
        %1103 = vmatprep.subr.mxu0 0.0
        %1104 = vmatpush1.msra.mxu0 0.0
        %1105 = vmatprep.subr.mxu0 0.0
        %1106 = vmatpush1.msra.mxu0 0.0
        %1107 = vmatprep.subr.mxu0 0.0
        %1108 = vmatpush1.msra.mxu0 0.0
        %1109 = vmatprep.subr.mxu0 0.0
        %1110 = vmatpush1.msra.mxu0 0.0
        %1111 = vmatprep.subr.mxu0 0.0
        %1112 = vmatpush1.msra.mxu0 0.0
        %1113 = vmatprep.subr.mxu0 0.0
        %1114 = vmatpush1.msra.mxu0 0.0
        %1115 = vmatprep.subr.mxu0 0.0
        %1116 = vmatpush1.msra.mxu0 0.0
        %1117 = vmatprep.subr.mxu0 0.0
        %1118 = vmatpush1.msra.mxu0 0.0
        %1119 = vmatprep.subr.mxu0 0.0
        %1120 = vmatpush1.msra.mxu0 0.0
        %1121 = vmatprep.subr.mxu0 0.0
        %1122 = vmatpush1.msra.mxu0 %v1007
        %1123 = vmatprep.subr.mxu0 0.0
        %1124 = vmatpush2.msra.mxu0 0.0
        %1125 = vmatprep.subr.mxu0 0.0
        %1126 = vmatpush2.msra.mxu0 0.0
        %1127 = vmatprep.subr.mxu0 0.0
        %1128 = vmatpush2.msra.mxu0 0.0
        %1129 = vmatprep.subr.mxu0 0.0
        %1130 = vmatpush2.msra.mxu0 0.0
        %1131 = vmatprep.subr.mxu0 0.0
        %1132 = vmatpush2.msra.mxu0 0.0
        %1133 = vmatprep.subr.mxu0 0.0
        %1134 = vmatpush2.msra.mxu0 0.0
        %1135 = vmatprep.subr.mxu0 0.0
        %1136 = vmatpush2.msra.mxu0 0.0
        %1137 = vmatprep.subr.mxu0 0.0
        %1138 = vmatpush2.msra.mxu0 0.0
        %1139 = vmatprep.subr.mxu0 0.0
        %1140 = vmatpush2.msra.mxu0 0.0
        %1141 = vmatprep.subr.mxu0 0.0
        %1142 = vmatpush2.msra.mxu0 0.0
        %1143 = vmatprep.subr.mxu0 0.0
        %1144 = vmatpush2.msra.mxu0 0.0
        %1145 = vmatprep.subr.mxu0 0.0
        %1146 = vmatpush2.msra.mxu0 0.0
        %1147 = vmatprep.subr.mxu0 0.0
        %1148 = vmatpush2.msra.mxu0 0.0
        %1149 = vmatprep.subr.mxu0 0.0
        %1150 = vmatpush2.msra.mxu0 0.0
        %1151 = vmatprep.subr.mxu0 0.0
        %1152 = vmatpush2.msra.mxu0 0.0
        %1153 = vmatprep.subr.mxu0 0.0
        %1154 = vmatpush2.msra.mxu0 0.0
        %1155 = vmatprep.mubr.f32.mxu0 0.0
        %1156 = vmatmul.mubr.f32.gmra.mxu0 %v1086
        %v1157 = vpop.f32.mrf.mxu0
        %v1158 = vadd.f32 0.0, %v1157
        %v1159 = vpop.f32.mrf.mxu0
        %1160 = vmatprep.mubr.f32.mxu0 0.0
        %1161 = vmatmul.mubr.f32.gmra.mxu0 %v1089
        %v1162 = vpop.f32.mrf.mxu0
        %v1163 = vadd.f32 0.0, %v1162
        %v1164 = vpop.f32.mrf.mxu0
        %1165 = vdwg.mxu0
        %v1166 = vmul.f32 %v1076, %v718
        %v1167 = vmul.f32 %v1158, %v708
        %v1168 = vmul.f32 %v1163, %v713
        %v1169 = vsel %vm516, %v1167, 0.0
        %v1170 = vsel %vm516, %v1168, 0.0
        %v1171 = vadd.f32 %v1169, %v1170
        %v1172 = vrot.slane %v1171, 4
        %v1173 = vadd.f32 %v1171, %v1172
        %v1174 = vrot.slane %v1173, 2
        %v1175 = vadd.f32 %v1173, %v1174
        %v1176 = vrot.slane %v1175, 1
        %v1177 = vadd.f32 %v1175, %v1176
        %v1178 = vadd.f32 %v1166, %v1177
        %v1179 = vld [vmem:[#allocation10] sm:$0xff]
        %v1180 = vld [vmem:[#allocation10 + $0x8] sm:$0xff]
        %v1181 = vld [vmem:[#allocation10 + $0x10] sm:$0xff]
        %v1182 = vld [vmem:[#allocation10 + $0x18] sm:$0xff]
        %v1183 = vld [vmem:[%s10] sm:$0x1]
        %v1185 = vsel %vm516, %v1178, 0
        %1187 = vmatprep.subr.mxu0 0.0
        %1188 = vmatpush1.msra.mxu0 0.0
        %1189 = vmatprep.subr.mxu0 0.0
        %1190 = vmatpush1.msra.mxu0 0.0
        %1191 = vmatprep.subr.mxu0 0.0
        %1192 = vmatpush1.msra.mxu0 0.0
        %1193 = vmatprep.subr.mxu0 0.0
        %1194 = vmatpush1.msra.mxu0 0.0
        %1195 = vmatprep.subr.mxu0 0.0
        %1196 = vmatpush1.msra.mxu0 0.0
        %1197 = vmatprep.subr.mxu0 0.0
        %1198 = vmatpush1.msra.mxu0 0.0
        %1199 = vmatprep.subr.mxu0 0.0
        %1200 = vmatpush1.msra.mxu0 0.0
        %1201 = vmatprep.subr.mxu0 0.0
        %1202 = vmatpush1.msra.mxu0 0.0
        %1203 = vmatprep.subr.mxu0 0.0
        %1204 = vmatpush1.msra.mxu0 0.0
        %1205 = vmatprep.subr.mxu0 0.0
        %1206 = vmatpush1.msra.mxu0 0.0
        %1207 = vmatprep.subr.mxu0 0.0
        %1208 = vmatpush1.msra.mxu0 0.0
        %1209 = vmatprep.subr.mxu0 0.0
        %1210 = vmatpush1.msra.mxu0 0.0
        %1211 = vmatprep.subr.mxu0 0.0
        %1212 = vmatpush1.msra.mxu0 %v1182
        %1213 = vmatprep.subr.mxu0 0.0
        %1214 = vmatpush1.msra.mxu0 %v1181
        %1215 = vmatprep.subr.mxu0 0.0
        %1216 = vmatpush1.msra.mxu0 %v1180
        %1217 = vmatprep.subr.mxu0 0.0
        %1218 = vmatpush1.msra.mxu0 %v1179
        %1219 = vmatprep.subr.mxu0 0.0
        %1220 = vmatpush2.msra.mxu0 0.0
        %1221 = vmatprep.subr.mxu0 0.0
        %1222 = vmatpush2.msra.mxu0 0.0
        %1223 = vmatprep.subr.mxu0 0.0
        %1224 = vmatpush2.msra.mxu0 0.0
        %1225 = vmatprep.subr.mxu0 0.0
        %1226 = vmatpush2.msra.mxu0 0.0
        %1227 = vmatprep.subr.mxu0 0.0
        %1228 = vmatpush2.msra.mxu0 0.0
        %1229 = vmatprep.subr.mxu0 0.0
        %1230 = vmatpush2.msra.mxu0 0.0
        %1231 = vmatprep.subr.mxu0 0.0
        %1232 = vmatpush2.msra.mxu0 0.0
        %1233 = vmatprep.subr.mxu0 0.0
        %1234 = vmatpush2.msra.mxu0 0.0
        %1235 = vmatprep.subr.mxu0 0.0
        %1236 = vmatpush2.msra.mxu0 0.0
        %1237 = vmatprep.subr.mxu0 0.0
        %1238 = vmatpush2.msra.mxu0 0.0
        %1239 = vmatprep.subr.mxu0 0.0
        %1240 = vmatpush2.msra.mxu0 0.0
        %1241 = vmatprep.subr.mxu0 0.0
        %1242 = vmatpush2.msra.mxu0 0.0
        %1243 = vmatprep.subr.mxu0 0.0
        %1244 = vmatpush2.msra.mxu0 0.0
        %1245 = vmatprep.subr.mxu0 0.0
        %1246 = vmatpush2.msra.mxu0 0.0
        %1247 = vmatprep.subr.mxu0 0.0
        %1248 = vmatpush2.msra.mxu0 0.0
        %1249 = vmatprep.subr.mxu0 0.0
        %1250 = vmatpush2.msra.mxu0 0.0
        %1251 = vmatprep.mubr.f32.mxu0 0.0
        %1252 = vmatmul.mubr.f32.gmra.mxu0 %v1185
        %v1253 = vpop.f32.mrf.mxu0
        %v1254 = vadd.f32 %v1183, %v1253
        %v1255 = vpop.f32.mrf.mxu0
        %1256 = vdwg.mxu0
        %vm1257 = vcmask 516096
        %1258 = vst.msk [vmem:[%s505] sm:$0x1] %vm1257, %v1254
        %s1259 = sand.u32 %s316, 1
        %s1260 = scalar_lea.sflag [#allocation4], %s1259
        %s1261 = sand.u32 %s316, 1
        %s1262 = scalar_lea.vmem [#allocation11], %s1261
        // Predicated region
        $region93: #{tpu_custom_call.1} parent=71 // pred_check
          %p1263 = pneg %p326
        $region94: #{tpu_custom_call.1} parent=71 // pred_check_branch
          %1265 = sbr.rel (%p1263) target = $region96
        $region95: #{tpu_custom_call.1} parent=71 // pred_region
          %s1267 = ssub.s32 16, 16
          %1268 = vsyncadd %s1260, %s1267
          %s1269 = smul.addr %s30, 16
          %s1270 = scalar_lea.hbm %s13, %s1269
          %s1272 = sshll.u32 %s1262, 4
          %s1273 = int_to_ptr.vmem [resolvable:$true] %s1272
          %1275 = dma.vmem_to_hbm [thread:$0]  %s1273, 16, %s1270, %s1260
        $region96: #{tpu_custom_call.1} parent=71 // pred_fallthru
          _
      $region72: #{tpu_custom_call.1} parent=5 // pred_fallthru
        _
      %p1276 = scmp.le.s32.totalorder 2, %s25
      // Predicated region
      $region97: #{tpu_custom_call.1} parent=5 // pred_check
        %p1277 = pneg %p1276
      $region98: #{tpu_custom_call.1} parent=5 // pred_check_branch
        %1279 = sbr.rel (%p1277) target = $region100
      $region99: #{tpu_custom_call.1} parent=5 // pred_region
        %s1280 = ssub.s32 %s25, 2
        // Predicated region
        $region101: #{tpu_custom_call.1} parent=99 // pred_check
          %p1281 = pneg %p332
        $region102: #{tpu_custom_call.1} parent=99 // pred_check_branch
          %1283 = sbr.rel (%p1281) target = $region104
        $region103: #{tpu_custom_call.1} parent=99 // pred_region
          %s1284 = sand.u32 %s317, 1
          %s1285 = scalar_lea.sflag [#allocation4], %s1284
          %s1286 = sand.u32 %s317, 1
          %s1287 = scalar_lea.vmem [#allocation11], %s1286
          %1288 = dma.done %s1285, 16
        $region104: #{tpu_custom_call.1} parent=99 // pred_fallthru
          _
      $region100: #{tpu_custom_call.1} parent=5 // pred_fallthru
        _
    $region6: #{tpu_custom_call.1} parent=1 // loop_footer
      %s29 = sadd.s32 1, %s25
    $region7: #{tpu_custom_call.1} parent=1 // loop_footer_branch
      %24 = sbr.rel target = $region3
    $region8: #{tpu_custom_call.1} parent=1 // loop_exit
      _
    %1289 = vsyncpa [#allocation3], 1
    %s1290 = scalar_lea.sflag [#allocation3], 1
    %1291 = vsyncpa %s1290, 1
    %1292 = vsyncpa [#allocation6], 1
    %1293 = vsyncpa [#allocation9], 1
    %1294 = vsyncpa [#allocation4], 1
    %s1295 = scalar_lea.sflag [#allocation4], 1
    %1296 = vsyncpa %s1295, 1

// kernel: tpu_custom_call.1
$region0: #{tpu_custom_call.1}
  #allocation0 [shape = 'u32[]', space=smem, size = 0x4, offset = 0x4, fixed_abs, tag = 'smem constant byte address 0x4 - core index']
  #allocation1 [shape = 'u32[144,128]{1,0:T(1,128)}', space=vmem, size = 0x12000, scoped, tag = 'internal scratch']
  %s0 = inlined_call_operand.vmem [shape: f32[2,1,16,32], index: 0, kind: input, shape index: {}]
  %s1 = inlined_call_operand.vmem [shape: f32[1,32], index: 1, kind: input, shape index: {}]
  %s2 = inlined_call_operand.hbm [shape: f32[16,32], index: 2, kind: input, shape index: {}]
  %s3 = inlined_call_operand.hbm [shape: f32[32,32], index: 3, kind: input, shape index: {}]
  %s4 = inlined_call_operand.vmem [shape: f32[1,32], index: 4, kind: input, shape index: {}]
  %s5 = inlined_call_operand.hbm [shape: f32[32,32], index: 5, kind: input, shape index: {}]
  %s6 = inlined_call_operand.vmem [shape: f32[1,32], index: 6, kind: input, shape index: {}]
  %s7 = inlined_call_operand.hbm [shape: f32[32,32], index: 7, kind: input, shape index: {}]
  %s8 = inlined_call_operand.vmem [shape: f32[1,32], index: 8, kind: input, shape index: {}]
  %s9 = inlined_call_operand.hbm [shape: f32[32,64], index: 9, kind: input, shape index: {}]
  %s10 = inlined_call_operand.vmem [shape: f32[1,64], index: 10, kind: input, shape index: {}]
  %s11 = inlined_call_operand.vmem [shape: f32[32,4], index: 11, kind: input, shape index: {}]
  %s12 = inlined_call_operand.vmem [shape: f32[4,32], index: 12, kind: input, shape index: {}]
  %s13 = inlined_call_operand.hbm [shape: f32[2,1,64], index: 13, kind: output, shape index: {}]
  %s14 = sld [smem:[#allocation0]]
  $region105: #{tpu_custom_call.1} parent=0
    _
  %s16 = ssub.s32 1, %s14
  %s17 = scalar_select 0, %s16, %s14
  $region1: #{tpu_custom_call.1} parent=0
    #allocation2 [shape = 'u8[8192]{0}', space=vmem, size = 0x2000, scoped, tag = 'input window, operand 2, single buffered']
    #allocation3 [shape = 's32[2]{0}', space=sflag, size = 0x8, scoped, tag = 'scoped memory for tpu_custom_call.1']
    #allocation4 [shape = 's32[2]{0}', space=sflag, size = 0x8, scoped, tag = 'scoped memory for tpu_custom_call.1']
    #allocation5 [shape = 'u8[16384]{0}', space=vmem, size = 0x4000, scoped, tag = 'input window, operand 3, single buffered']
    #allocation6 [shape = 's32[1]{0}', space=sflag, size = 0x4, scoped, tag = 'scoped memory for tpu_custom_call.1']
    #allocation7 [shape = 'u8[16384]{0}', space=vmem, size = 0x4000, scoped, tag = 'input window, operand 5, single buffered']
    #allocation8 [shape = 'u8[16384]{0}', space=vmem, size = 0x4000, scoped, tag = 'input window, operand 7, single buffered']
    #allocation9 [shape = 's32[1]{0}', space=sflag, size = 0x4, scoped, tag = 'scoped memory for tpu_custom_call.1']
    #allocation10 [shape = 'u8[16384]{0}', space=vmem, size = 0x4000, scoped, tag = 'input window, operand 9, single buffered']
    #allocation11 [shape = 'u8[1024]{0}', space=vmem, size = 0x400, scoped, tag = 'output window, operand 0']
    %18 = vsyncpa [#allocation3], 0
    %19 = vsyncpa [#allocation6], 0
    %20 = vsyncpa [#allocation9], 0
    %21 = vsyncpa [#allocation4], 0
    %s22 = scalar_lea.sflag [#allocation4], 1
    %23 = vsyncpa %s22, 0
    loop: start=0, step=1, limit=4
    $region2: #{tpu_custom_call.1} parent=1 // loop_pre_header
      _
    $region3: #{tpu_custom_call.1} parent=1 // loop_header
      %s25 = sphi 0, %s29
      %p26 = scmp.ge.s32.totalorder %s25, 4
      %s35 = sphi 0, %s37
      %s38 = sphi 0, %s35
      %s39 = sphi 0, %s38
      %s55 = sphi 0, %s39
      %s59 = sphi 0, %s59
      %s61 = sphi 0, %s59
      %s62 = sphi 0, %s61
      %s76 = sphi 0, %s62
      %s80 = sphi 0, %s80
      %s82 = sphi 0, %s80
      %s83 = sphi 0, %s82
      %s97 = sphi 0, %s83
      %s101 = sphi 0, %s101
      %s103 = sphi 0, %s101
      %s104 = sphi 0, %s103
      %s118 = sphi 0, %s104
      %s122 = sphi 0, %s122
      %s124 = sphi 0, %s122
      %s125 = sphi 0, %s124
      %s139 = sphi 0, %s125
      %s143 = sphi 0, %s143
      %s145 = sphi 0, %s143
      %s146 = sphi 0, %s145
      %s160 = sphi 0, %s146
      %s164 = sphi 0, %s164
      %s166 = sphi 0, %s164
      %s167 = sphi 0, %s166
      %s181 = sphi 0, %s167
      %s185 = sphi 0, %s185
      %s187 = sphi 0, %s185
      %s188 = sphi 0, %s187
      %s202 = sphi 0, %s188
      %s206 = sphi 0, %s206
      %s208 = sphi 0, %s206
      %s209 = sphi 0, %s208
      %s223 = sphi 0, %s209
      %s227 = sphi 0, %s227
      %s229 = sphi 0, %s227
      %s230 = sphi 0, %s229
      %s244 = sphi 0, %s230
      %s248 = sphi 0, %s248
      %s250 = sphi 0, %s248
      %s251 = sphi 0, %s250
      %s265 = sphi 0, %s251
      %s269 = sphi 0, %s269
      %s271 = sphi 0, %s269
      %s272 = sphi 0, %s271
      %s286 = sphi 0, %s272
      %s290 = sphi 0, %s290
      %s292 = sphi 0, %s290
      %s293 = sphi 0, %s292
      %s307 = sphi 0, %s293
      %s313 = sphi 0, %s315
      %s316 = sphi 0, %s313
      %s317 = sphi 0, %s316
      %s333 = sphi 0, %s317
    $region4: #{tpu_custom_call.1} parent=1 // loop_header_branch
      %28 = sbr.rel (%p26) target = $region8
    $region5: #{tpu_custom_call.1} parent=1 // loop_body
      %s30 = ssub.s32 %s25, 1
      %s31 = ssub.s32 %s25, 2
      %s32 = sadd.s32 %s25, 1
      %s33 = ssub.s32 %s25, %s32
      %p34 = scmp.eq.s32.totalorder %s33, 0
      %s36 = sadd.s32 %s35, 1
      %s37 = scalar_select %p34, %s35, %s36
      %p40 = pneg %p34
      %p41 = scmp.eq.s32.totalorder %s25, 1
      %p42 = por %p40, %p41
      %p43 = scmp.ne.s32.totalorder %s35, %s38
      %p44 = scmp.eq.s32.totalorder %s25, 0
      %p45 = por %p43, %p44
      %p46 = scmp.ne.s32.totalorder %s35, %s38
      %p47 = scmp.eq.s32.totalorder %s30, 1
      %p48 = por %p46, %p47
      %p49 = scmp.ne.s32.totalorder %s38, %s39
      %p50 = scmp.eq.s32.totalorder %s30, 0
      %p51 = por %p49, %p50
      %p52 = scmp.ne.s32.totalorder %s38, %s39
      %p53 = scmp.eq.s32.totalorder %s31, 1
      %p54 = por %p52, %p53
      %p56 = scmp.ne.s32.totalorder %s39, %s55
      %p57 = scmp.eq.s32.totalorder %s31, 0
      %p58 = por %p56, %p57
      %s60 = sadd.s32 %s59, 1
      %p63 = scmp.eq.s32.totalorder %s25, 1
      %p64 = scmp.ne.s32.totalorder %s59, %s61
      %p65 = scmp.eq.s32.totalorder %s25, 0
      %p66 = por %p64, %p65
      %p67 = scmp.ne.s32.totalorder %s59, %s61
      %p68 = scmp.eq.s32.totalorder %s30, 1
      %p69 = por %p67, %p68
      %p70 = scmp.ne.s32.totalorder %s61, %s62
      %p71 = scmp.eq.s32.totalorder %s30, 0
      %p72 = por %p70, %p71
      %p73 = scmp.ne.s32.totalorder %s61, %s62
      %p74 = scmp.eq.s32.totalorder %s31, 1
      %p75 = por %p73, %p74
      %p77 = scmp.ne.s32.totalorder %s62, %s76
      %p78 = scmp.eq.s32.totalorder %s31, 0
      %p79 = por %p77, %p78
      %s81 = sadd.s32 %s80, 1
      %p84 = scmp.eq.s32.totalorder %s25, 1
      %p85 = scmp.ne.s32.totalorder %s80, %s82
      %p86 = scmp.eq.s32.totalorder %s25, 0
      %p87 = por %p85, %p86
      %p88 = scmp.ne.s32.totalorder %s80, %s82
      %p89 = scmp.eq.s32.totalorder %s30, 1
      %p90 = por %p88, %p89
      %p91 = scmp.ne.s32.totalorder %s82, %s83
      %p92 = scmp.eq.s32.totalorder %s30, 0
      %p93 = por %p91, %p92
      %p94 = scmp.ne.s32.totalorder %s82, %s83
      %p95 = scmp.eq.s32.totalorder %s31, 1
      %p96 = por %p94, %p95
      %p98 = scmp.ne.s32.totalorder %s83, %s97
      %p99 = scmp.eq.s32.totalorder %s31, 0
      %p100 = por %p98, %p99
      %s102 = sadd.s32 %s101, 1
      %p105 = scmp.eq.s32.totalorder %s25, 1
      %p106 = scmp.ne.s32.totalorder %s101, %s103
      %p107 = scmp.eq.s32.totalorder %s25, 0
      %p108 = por %p106, %p107
      %p109 = scmp.ne.s32.totalorder %s101, %s103
      %p110 = scmp.eq.s32.totalorder %s30, 1
      %p111 = por %p109, %p110
      %p112 = scmp.ne.s32.totalorder %s103, %s104
      %p113 = scmp.eq.s32.totalorder %s30, 0
      %p114 = por %p112, %p113
      %p115 = scmp.ne.s32.totalorder %s103, %s104
      %p116 = scmp.eq.s32.totalorder %s31, 1
      %p117 = por %p115, %p116
      %p119 = scmp.ne.s32.totalorder %s104, %s118
      %p120 = scmp.eq.s32.totalorder %s31, 0
      %p121 = por %p119, %p120
      %s123 = sadd.s32 %s122, 1
      %p126 = scmp.eq.s32.totalorder %s25, 1
      %p127 = scmp.ne.s32.totalorder %s122, %s124
      %p128 = scmp.eq.s32.totalorder %s25, 0
      %p129 = por %p127, %p128
      %p130 = scmp.ne.s32.totalorder %s122, %s124
      %p131 = scmp.eq.s32.totalorder %s30, 1
      %p132 = por %p130, %p131
      %p133 = scmp.ne.s32.totalorder %s124, %s125
      %p134 = scmp.eq.s32.totalorder %s30, 0
      %p135 = por %p133, %p134
      %p136 = scmp.ne.s32.totalorder %s124, %s125
      %p137 = scmp.eq.s32.totalorder %s31, 1
      %p138 = por %p136, %p137
      %p140 = scmp.ne.s32.totalorder %s125, %s139
      %p141 = scmp.eq.s32.totalorder %s31, 0
      %p142 = por %p140, %p141
      %s144 = sadd.s32 %s143, 1
      %p147 = scmp.eq.s32.totalorder %s25, 1
      %p148 = scmp.ne.s32.totalorder %s143, %s145
      %p149 = scmp.eq.s32.totalorder %s25, 0
      %p150 = por %p148, %p149
      %p151 = scmp.ne.s32.totalorder %s143, %s145
      %p152 = scmp.eq.s32.totalorder %s30, 1
      %p153 = por %p151, %p152
      %p154 = scmp.ne.s32.totalorder %s145, %s146
      %p155 = scmp.eq.s32.totalorder %s30, 0
      %p156 = por %p154, %p155
      %p157 = scmp.ne.s32.totalorder %s145, %s146
      %p158 = scmp.eq.s32.totalorder %s31, 1
      %p159 = por %p157, %p158
      %p161 = scmp.ne.s32.totalorder %s146, %s160
      %p162 = scmp.eq.s32.totalorder %s31, 0
      %p163 = por %p161, %p162
      %s165 = sadd.s32 %s164, 1
      %p168 = scmp.eq.s32.totalorder %s25, 1
      %p169 = scmp.ne.s32.totalorder %s164, %s166
      %p170 = scmp.eq.s32.totalorder %s25, 0
      %p171 = por %p169, %p170
      %p172 = scmp.ne.s32.totalorder %s164, %s166
      %p173 = scmp.eq.s32.totalorder %s30, 1
      %p174 = por %p172, %p173
      %p175 = scmp.ne.s32.totalorder %s166, %s167
      %p176 = scmp.eq.s32.totalorder %s30, 0
      %p177 = por %p175, %p176
      %p178 = scmp.ne.s32.totalorder %s166, %s167
      %p179 = scmp.eq.s32.totalorder %s31, 1
      %p180 = por %p178, %p179
      %p182 = scmp.ne.s32.totalorder %s167, %s181
      %p183 = scmp.eq.s32.totalorder %s31, 0
      %p184 = por %p182, %p183
      %s186 = sadd.s32 %s185, 1
      %p189 = scmp.eq.s32.totalorder %s25, 1
      %p190 = scmp.ne.s32.totalorder %s185, %s187
      %p191 = scmp.eq.s32.totalorder %s25, 0
      %p192 = por %p190, %p191
      %p193 = scmp.ne.s32.totalorder %s185, %s187
      %p194 = scmp.eq.s32.totalorder %s30, 1
      %p195 = por %p193, %p194
      %p196 = scmp.ne.s32.totalorder %s187, %s188
      %p197 = scmp.eq.s32.totalorder %s30, 0
      %p198 = por %p196, %p197
      %p199 = scmp.ne.s32.totalorder %s187, %s188
      %p200 = scmp.eq.s32.totalorder %s31, 1
      %p201 = por %p199, %p200
      %p203 = scmp.ne.s32.totalorder %s188, %s202
      %p204 = scmp.eq.s32.totalorder %s31, 0
      %p205 = por %p203, %p204
      %s207 = sadd.s32 %s206, 1
      %p210 = scmp.eq.s32.totalorder %s25, 1
      %p211 = scmp.ne.s32.totalorder %s206, %s208
      %p212 = scmp.eq.s32.totalorder %s25, 0
      %p213 = por %p211, %p212
      %p214 = scmp.ne.s32.totalorder %s206, %s208
      %p215 = scmp.eq.s32.totalorder %s30, 1
      %p216 = por %p214, %p215
      %p217 = scmp.ne.s32.totalorder %s208, %s209
      %p218 = scmp.eq.s32.totalorder %s30, 0
      %p219 = por %p217, %p218
      %p220 = scmp.ne.s32.totalorder %s208, %s209
      %p221 = scmp.eq.s32.totalorder %s31, 1
      %p222 = por %p220, %p221
      %p224 = scmp.ne.s32.totalorder %s209, %s223
      %p225 = scmp.eq.s32.totalorder %s31, 0
      %p226 = por %p224, %p225
      %s228 = sadd.s32 %s227, 1
      %p231 = scmp.eq.s32.totalorder %s25, 1
      %p232 = scmp.ne.s32.totalorder %s227, %s229
      %p233 = scmp.eq.s32.totalorder %s25, 0
      %p234 = por %p232, %p233
      %p235 = scmp.ne.s32.totalorder %s227, %s229
      %p236 = scmp.eq.s32.totalorder %s30, 1
      %p237 = por %p235, %p236
      %p238 = scmp.ne.s32.totalorder %s229, %s230
      %p239 = scmp.eq.s32.totalorder %s30, 0
      %p240 = por %p238, %p239
      %p241 = scmp.ne.s32.totalorder %s229, %s230
      %p242 = scmp.eq.s32.totalorder %s31, 1
      %p243 = por %p241, %p242
      %p245 = scmp.ne.s32.totalorder %s230, %s244
      %p246 = scmp.eq.s32.totalorder %s31, 0
      %p247 = por %p245, %p246
      %s249 = sadd.s32 %s248, 1
      %p252 = scmp.eq.s32.totalorder %s25, 1
      %p253 = scmp.ne.s32.totalorder %s248, %s250
      %p254 = scmp.eq.s32.totalorder %s25, 0
      %p255 = por %p253, %p254
      %p256 = scmp.ne.s32.totalorder %s248, %s250
      %p257 = scmp.eq.s32.totalorder %s30, 1
      %p258 = por %p256, %p257
      %p259 = scmp.ne.s32.totalorder %s250, %s251
      %p260 = scmp.eq.s32.totalorder %s30, 0
      %p261 = por %p259, %p260
      %p262 = scmp.ne.s32.totalorder %s250, %s251
      %p263 = scmp.eq.s32.totalorder %s31, 1
      %p264 = por %p262, %p263
      %p266 = scmp.ne.s32.totalorder %s251, %s265
      %p267 = scmp.eq.s32.totalorder %s31, 0
      %p268 = por %p266, %p267
      %s270 = sadd.s32 %s269, 1
      %p273 = scmp.eq.s32.totalorder %s25, 1
      %p274 = scmp.ne.s32.totalorder %s269, %s271
      %p275 = scmp.eq.s32.totalorder %s25, 0
      %p276 = por %p274, %p275
      %p277 = scmp.ne.s32.totalorder %s269, %s271
      %p278 = scmp.eq.s32.totalorder %s30, 1
      %p279 = por %p277, %p278
      %p280 = scmp.ne.s32.totalorder %s271, %s272
      %p281 = scmp.eq.s32.totalorder %s30, 0
      %p282 = por %p280, %p281
      %p283 = scmp.ne.s32.totalorder %s271, %s272
      %p284 = scmp.eq.s32.totalorder %s31, 1
      %p285 = por %p283, %p284
      %p287 = scmp.ne.s32.totalorder %s272, %s286
      %p288 = scmp.eq.s32.totalorder %s31, 0
      %p289 = por %p287, %p288
      %s291 = sadd.s32 %s290, 1
      %p294 = scmp.eq.s32.totalorder %s25, 1
      %p295 = scmp.ne.s32.totalorder %s290, %s292
      %p296 = scmp.eq.s32.totalorder %s25, 0
      %p297 = por %p295, %p296
      %p298 = scmp.ne.s32.totalorder %s290, %s292
      %p299 = scmp.eq.s32.totalorder %s30, 1
      %p300 = por %p298, %p299
      %p301 = scmp.ne.s32.totalorder %s292, %s293
      %p302 = scmp.eq.s32.totalorder %s30, 0
      %p303 = por %p301, %p302
      %p304 = scmp.ne.s32.totalorder %s292, %s293
      %p305 = scmp.eq.s32.totalorder %s31, 1
      %p306 = por %p304, %p305
      %p308 = scmp.ne.s32.totalorder %s293, %s307
      %p309 = scmp.eq.s32.totalorder %s31, 0
      %p310 = por %p308, %p309
      %s311 = ssub.s32 %s25, %s32
      %p312 = scmp.eq.s32.totalorder %s311, 0
      %s314 = sadd.s32 %s313, 1
      %s315 = scalar_select %p312, %s313, %s314
      %p318 = pneg %p312
      %p319 = scmp.eq.s32.totalorder %s25, 1
      %p320 = por %p318, %p319
      %p321 = scmp.ne.s32.totalorder %s313, %s316
      %p322 = scmp.eq.s32.totalorder %s25, 0
      %p323 = por %p321, %p322
      %p324 = scmp.ne.s32.totalorder %s313, %s316
      %p325 = scmp.eq.s32.totalorder %s30, 1
      %p326 = por %p324, %p325
      %p327 = scmp.ne.s32.totalorder %s316, %s317
      %p328 = scmp.eq.s32.totalorder %s30, 0
      %p329 = por %p327, %p328
      %p330 = scmp.ne.s32.totalorder %s316, %s317
      %p331 = scmp.eq.s32.totalorder %s31, 1
      %p332 = por %p330, %p331
      %p334 = scmp.ne.s32.totalorder %s317, %s333
      %p335 = scmp.eq.s32.totalorder %s31, 0
      %p336 = por %p334, %p335
      %p337 = scmp.le.s32.totalorder 1, %s25
      %p338 = scmp.lt.s32.totalorder %s25, 3
      %p339 = pnand %p337, %p338
      %p340 = pneg %p339
      // Predicated region
      $region9: #{tpu_custom_call.1} parent=5 // pred_check
        _
      $region10: #{tpu_custom_call.1} parent=5 // pred_check_branch
        %342 = sbr.rel (%p339) target = $region12
      $region11: #{tpu_custom_call.1} parent=5 // pred_region
        %s343 = ssub.s32 %s25, 1
        // Predicated region
        $region13: #{tpu_custom_call.1} parent=11 // pred_check
          %p344 = pneg %p72
        $region14: #{tpu_custom_call.1} parent=11 // pred_check_branch
          %346 = sbr.rel (%p344) target = $region16
        $region15: #{tpu_custom_call.1} parent=11 // pred_region
          _
        $region16: #{tpu_custom_call.1} parent=11 // pred_fallthru
          _
        // Predicated region
        $region17: #{tpu_custom_call.1} parent=11 // pred_check
          %p347 = pneg %p93
        $region18: #{tpu_custom_call.1} parent=11 // pred_check_branch
          %349 = sbr.rel (%p347) target = $region20
        $region19: #{tpu_custom_call.1} parent=11 // pred_region
          %s351 = ssub.s32 256, 256
          %352 = vsyncadd [#allocation3], %s351
          %s353 = sshll.u32 [#allocation2], 4
          %s354 = int_to_ptr.vmem [resolvable:$true] %s353
          %359 = dma.hbm_to_vmem [thread:$0]  %s2, 256, %s354, [#allocation3], 128, 128, 8
        $region20: #{tpu_custom_call.1} parent=11 // pred_fallthru
          _
        // Predicated region
        $region21: #{tpu_custom_call.1} parent=11 // pred_check
          %p360 = pneg %p114
        $region22: #{tpu_custom_call.1} parent=11 // pred_check_branch
          %362 = sbr.rel (%p360) target = $region24
        $region23: #{tpu_custom_call.1} parent=11 // pred_region
          %s364 = ssub.s32 512, 512
          %365 = vsyncadd [#allocation6], %s364
          %s366 = sshll.u32 [#allocation5], 4
          %s367 = int_to_ptr.vmem [resolvable:$true] %s366
          %372 = dma.hbm_to_vmem [thread:$0]  %s3, 512, %s367, [#allocation6], 128, 128, 8
        $region24: #{tpu_custom_call.1} parent=11 // pred_fallthru
          _
        // Predicated region
        $region25: #{tpu_custom_call.1} parent=11 // pred_check
          %p373 = pneg %p135
        $region26: #{tpu_custom_call.1} parent=11 // pred_check_branch
          %375 = sbr.rel (%p373) target = $region28
        $region27: #{tpu_custom_call.1} parent=11 // pred_region
          _
        $region28: #{tpu_custom_call.1} parent=11 // pred_fallthru
          _
        // Predicated region
        $region29: #{tpu_custom_call.1} parent=11 // pred_check
          %p376 = pneg %p156
        $region30: #{tpu_custom_call.1} parent=11 // pred_check_branch
          %378 = sbr.rel (%p376) target = $region32
        $region31: #{tpu_custom_call.1} parent=11 // pred_region
          %s380 = ssub.s32 512, 512
          %381 = vsyncadd [#allocation6], %s380
          %s382 = sshll.u32 [#allocation7], 4
          %s383 = int_to_ptr.vmem [resolvable:$true] %s382
          %388 = dma.hbm_to_vmem [thread:$0]  %s5, 512, %s383, [#allocation6], 128, 128, 8
        $region32: #{tpu_custom_call.1} parent=11 // pred_fallthru
          _
        // Predicated region
        $region33: #{tpu_custom_call.1} parent=11 // pred_check
          %p389 = pneg %p177
        $region34: #{tpu_custom_call.1} parent=11 // pred_check_branch
          %391 = sbr.rel (%p389) target = $region36
        $region35: #{tpu_custom_call.1} parent=11 // pred_region
          _
        $region36: #{tpu_custom_call.1} parent=11 // pred_fallthru
          _
        // Predicated region
        $region37: #{tpu_custom_call.1} parent=11 // pred_check
          %p392 = pneg %p198
        $region38: #{tpu_custom_call.1} parent=11 // pred_check_branch
          %394 = sbr.rel (%p392) target = $region40
        $region39: #{tpu_custom_call.1} parent=11 // pred_region
          %s396 = ssub.s32 512, 512
          %397 = vsyncadd [#allocation9], %s396
          %s398 = sshll.u32 [#allocation8], 4
          %s399 = int_to_ptr.vmem [resolvable:$true] %s398
          %404 = dma.hbm_to_vmem [thread:$0]  %s7, 512, %s399, [#allocation9], 128, 128, 8
        $region40: #{tpu_custom_call.1} parent=11 // pred_fallthru
          _
        // Predicated region
        $region41: #{tpu_custom_call.1} parent=11 // pred_check
          %p405 = pneg %p219
        $region42: #{tpu_custom_call.1} parent=11 // pred_check_branch
          %407 = sbr.rel (%p405) target = $region44
        $region43: #{tpu_custom_call.1} parent=11 // pred_region
          _
        $region44: #{tpu_custom_call.1} parent=11 // pred_fallthru
          _
        // Predicated region
        $region45: #{tpu_custom_call.1} parent=11 // pred_check
          %p408 = pneg %p240
        $region46: #{tpu_custom_call.1} parent=11 // pred_check_branch
          %410 = sbr.rel (%p408) target = $region48
        $region47: #{tpu_custom_call.1} parent=11 // pred_region
          %s412 = ssub.s32 512, 512
          %413 = vsyncadd [#allocation9], %s412
          %s414 = sshll.u32 [#allocation10], 4
          %s415 = int_to_ptr.vmem [resolvable:$true] %s414
          %420 = dma.hbm_to_vmem [thread:$0]  %s9, 512, %s415, [#allocation9], 128, 128, 8
        $region48: #{tpu_custom_call.1} parent=11 // pred_fallthru
          _
        // Predicated region
        $region49: #{tpu_custom_call.1} parent=11 // pred_check
          %p421 = pneg %p261
        $region50: #{tpu_custom_call.1} parent=11 // pred_check_branch
          %423 = sbr.rel (%p421) target = $region52
        $region51: #{tpu_custom_call.1} parent=11 // pred_region
          _
        $region52: #{tpu_custom_call.1} parent=11 // pred_fallthru
          _
        // Predicated region
        $region53: #{tpu_custom_call.1} parent=11 // pred_check
          %p424 = pneg %p282
        $region54: #{tpu_custom_call.1} parent=11 // pred_check_branch
          %426 = sbr.rel (%p424) target = $region56
        $region55: #{tpu_custom_call.1} parent=11 // pred_region
          _
        $region56: #{tpu_custom_call.1} parent=11 // pred_fallthru
          _
        // Predicated region
        $region57: #{tpu_custom_call.1} parent=11 // pred_check
          %p427 = pneg %p303
        $region58: #{tpu_custom_call.1} parent=11 // pred_check_branch
          %429 = sbr.rel (%p427) target = $region60
        $region59: #{tpu_custom_call.1} parent=11 // pred_region
          _
        $region60: #{tpu_custom_call.1} parent=11 // pred_fallthru
          _
      $region12: #{tpu_custom_call.1} parent=5 // pred_fallthru
        _
      %p430 = scmp.lt.s32.totalorder %s25, 2
      // Predicated region
      $region61: #{tpu_custom_call.1} parent=5 // pred_check
        %p431 = pneg %p430
      $region62: #{tpu_custom_call.1} parent=5 // pred_check_branch
        %433 = sbr.rel (%p431) target = $region64
      $region63: #{tpu_custom_call.1} parent=5 // pred_region
        // Predicated region
        $region65: #{tpu_custom_call.1} parent=63 // pred_check
          %p434 = pneg %p45
        $region66: #{tpu_custom_call.1} parent=63 // pred_check_branch
          %436 = sbr.rel (%p434) target = $region68
        $region67: #{tpu_custom_call.1} parent=63 // pred_region
          %p437 = scmp.lt.s32.totalorder %s25, 1
          %s438 = scalar_select %p437, %s25, 1
          %s439 = smul.addr %s438, 2
          %s440 = smul.addr %s439, 8
          %s441 = scalar_lea.vmem %s0, %s440
        $region68: #{tpu_custom_call.1} parent=63 // pred_fallthru
          _
      $region64: #{tpu_custom_call.1} parent=5 // pred_fallthru
        _
      %p442 = scmp.le.s32.totalorder 1, %s25
      %p443 = scmp.lt.s32.totalorder %s25, 3
      %p444 = pnand %p442, %p443
      %p445 = pneg %p444
      // Predicated region
      $region69: #{tpu_custom_call.1} parent=5 // pred_check
        _
      $region70: #{tpu_custom_call.1} parent=5 // pred_check_branch
        %447 = sbr.rel (%p444) target = $region72
      $region71: #{tpu_custom_call.1} parent=5 // pred_region
        %s448 = ssub.s32 %s25, 1
        // Predicated region
        $region73: #{tpu_custom_call.1} parent=71 // pred_check
          %p449 = pneg %p93
        $region74: #{tpu_custom_call.1} parent=71 // pred_check_branch
          %451 = sbr.rel (%p449) target = $region76
        $region75: #{tpu_custom_call.1} parent=71 // pred_region
          %452 = dma.done [#allocation3], 256
        $region76: #{tpu_custom_call.1} parent=71 // pred_fallthru
          _
        // Predicated region
        $region77: #{tpu_custom_call.1} parent=71 // pred_check
          %p453 = pneg %p114
        $region78: #{tpu_custom_call.1} parent=71 // pred_check_branch
          %455 = sbr.rel (%p453) target = $region80
        $region79: #{tpu_custom_call.1} parent=71 // pred_region
          %456 = dma.done [#allocation6], 512
        $region80: #{tpu_custom_call.1} parent=71 // pred_fallthru
          _
        // Predicated region
        $region81: #{tpu_custom_call.1} parent=71 // pred_check
          %p457 = pneg %p156
        $region82: #{tpu_custom_call.1} parent=71 // pred_check_branch
          %459 = sbr.rel (%p457) target = $region84
        $region83: #{tpu_custom_call.1} parent=71 // pred_region
          %460 = dma.done [#allocation6], 512
        $region84: #{tpu_custom_call.1} parent=71 // pred_fallthru
          _
        // Predicated region
        $region85: #{tpu_custom_call.1} parent=71 // pred_check
          %p461 = pneg %p198
        $region86: #{tpu_custom_call.1} parent=71 // pred_check_branch
          %463 = sbr.rel (%p461) target = $region88
        $region87: #{tpu_custom_call.1} parent=71 // pred_region
          %464 = dma.done [#allocation9], 512
        $region88: #{tpu_custom_call.1} parent=71 // pred_fallthru
          _
        // Predicated region
        $region89: #{tpu_custom_call.1} parent=71 // pred_check
          %p465 = pneg %p240
        $region90: #{tpu_custom_call.1} parent=71 // pred_check_branch
          %467 = sbr.rel (%p465) target = $region92
        $region91: #{tpu_custom_call.1} parent=71 // pred_region
          %468 = dma.done [#allocation9], 512
        $region92: #{tpu_custom_call.1} parent=71 // pred_fallthru
          _
        %p469 = scmp.lt.s32.totalorder %s30, 1
        %s470 = scalar_select %p469, %s30, 1
        %s471 = smul.addr %s470, 2
        %s472 = smul.addr %s471, 8
        %s473 = scalar_lea.vmem %s0, %s472
        %p474 = pneg %p51
        %p475 = pneg %p48
        %p476 = pneg %p72
        %p477 = pneg %p69
        %p478 = pneg %p93
        %p479 = pneg %p90
        %p480 = pneg %p114
        %p481 = pneg %p111
        %p482 = pneg %p135
        %p483 = pneg %p132
        %p484 = pneg %p156
        %p485 = pneg %p153
        %p486 = pneg %p177
        %p487 = pneg %p174
        %p488 = pneg %p198
        %p489 = pneg %p195
        %p490 = pneg %p219
        %p491 = pneg %p216
        %p492 = pneg %p240
        %p493 = pneg %p237
        %p494 = pneg %p261
        %p495 = pneg %p258
        %p496 = pneg %p282
        %p497 = pneg %p279
        %p498 = pneg %p303
        %p499 = pneg %p300
        %p500 = pneg %p329
        %p501 = pneg %p326
        %s502 = sand.u32 %s316, 1
        %s503 = scalar_lea.sflag [#allocation4], %s502
        %s504 = sand.u32 %s316, 1
        %s505 = scalar_lea.vmem [#allocation11], %s504
        %p506 = scmp.lt.s32.totalorder %s30, 1
        %s507 = scalar_select %p506, %s30, 1
        %s508 = smul.addr %s507, 2
        %s509 = smul.addr %s508, 8
        %s510 = scalar_lea.vmem %s0, %s509
        %v511 = vld [vmem:[%s510] sm:$0xff]
        %v512 = vld [vmem:[%s510 + $0x8] sm:$0xff]
        %v513 = vld [vmem:[%s1] sm:$0x1]
        %v514 = vld [vmem:[#allocation2] sm:$0xff]
        %v515 = vld [vmem:[#allocation2 + $0x8] sm:$0xff]
        %vm516 = vcmask 261120
        %v517 = vsel %vm516, %v511, 0.0
        %v518 = vsel %vm516, %v512, 0.0
        %v519 = vadd.f32 %v517, %v518
        %v520 = vrot.slane %v519, 4
        %v521 = vadd.f32 %v519, %v520
        %v522 = vrot.slane %v521, 2
        %v523 = vadd.f32 %v521, %v522
        %v524 = vrot.slane %v523, 1
        %v525 = vadd.f32 %v523, %v524
        %v526 = vmul.f32 %v525, 0.0625
        %v527 = vadd.f32 %v526, %v513
        %v528 = vadd.f32 %v511, %v514
        %v529 = vadd.f32 %v512, %v515
        %v530 = vld [vmem:[#allocation7] sm:$0xff]
        %v531 = vld [vmem:[#allocation7 + $0x8] sm:$0xff]
        %v532 = vld [vmem:[#allocation7 + $0x10] sm:$0xff]
        %v533 = vld [vmem:[#allocation7 + $0x18] sm:$0xff]
        %v534 = vld [vmem:[%s6] sm:$0x1]
        %v536 = vlaneseq
        %v537 = vshrl.u32 %v536, 7
        %v538 = vsub.s32 0, %v537
        %v539 = vrot.slane %v534, %v538
        %v542 = vsel %vm516, %v528, 0
        %v545 = vsel %vm516, %v529, 0
        %v548 = vsel %vm516, %v527, 0
        %550 = vmatprep.subr.mxu0 0.0
        %551 = vmatpush1.msra.mxu0 0.0
        %552 = vmatprep.subr.mxu0 0.0
        %553 = vmatpush1.msra.mxu0 0.0
        %554 = vmatprep.subr.mxu0 0.0
        %555 = vmatpush1.msra.mxu0 0.0
        %556 = vmatprep.subr.mxu0 0.0
        %557 = vmatpush1.msra.mxu0 0.0
        %558 = vmatprep.subr.mxu0 0.0
        %559 = vmatpush1.msra.mxu0 0.0
        %560 = vmatprep.subr.mxu0 0.0
        %561 = vmatpush1.msra.mxu0 0.0
        %562 = vmatprep.subr.mxu0 0.0
        %563 = vmatpush1.msra.mxu0 0.0
        %564 = vmatprep.subr.mxu0 0.0
        %565 = vmatpush1.msra.mxu0 0.0
        %566 = vmatprep.subr.mxu0 0.0
        %567 = vmatpush1.msra.mxu0 0.0
        %568 = vmatprep.subr.mxu0 0.0
        %569 = vmatpush1.msra.mxu0 0.0
        %570 = vmatprep.subr.mxu0 0.0
        %571 = vmatpush1.msra.mxu0 0.0
        %572 = vmatprep.subr.mxu0 0.0
        %573 = vmatpush1.msra.mxu0 0.0
        %574 = vmatprep.subr.mxu0 0.0
        %575 = vmatpush1.msra.mxu0 %v533
        %576 = vmatprep.subr.mxu0 0.0
        %577 = vmatpush1.msra.mxu0 %v532
        %578 = vmatprep.subr.mxu0 0.0
        %579 = vmatpush1.msra.mxu0 %v531
        %580 = vmatprep.subr.mxu0 0.0
        %581 = vmatpush1.msra.mxu0 %v530
        %582 = vmatprep.subr.mxu0 0.0
        %583 = vmatpush2.msra.mxu0 0.0
        %584 = vmatprep.subr.mxu0 0.0
        %585 = vmatpush2.msra.mxu0 0.0
        %586 = vmatprep.subr.mxu0 0.0
        %587 = vmatpush2.msra.mxu0 0.0
        %588 = vmatprep.subr.mxu0 0.0
        %589 = vmatpush2.msra.mxu0 0.0
        %590 = vmatprep.subr.mxu0 0.0
        %591 = vmatpush2.msra.mxu0 0.0
        %592 = vmatprep.subr.mxu0 0.0
        %593 = vmatpush2.msra.mxu0 0.0
        %594 = vmatprep.subr.mxu0 0.0
        %595 = vmatpush2.msra.mxu0 0.0
        %596 = vmatprep.subr.mxu0 0.0
        %597 = vmatpush2.msra.mxu0 0.0
        %598 = vmatprep.subr.mxu0 0.0
        %599 = vmatpush2.msra.mxu0 0.0
        %600 = vmatprep.subr.mxu0 0.0
        %601 = vmatpush2.msra.mxu0 0.0
        %602 = vmatprep.subr.mxu0 0.0
        %603 = vmatpush2.msra.mxu0 0.0
        %604 = vmatprep.subr.mxu0 0.0
        %605 = vmatpush2.msra.mxu0 0.0
        %606 = vmatprep.subr.mxu0 0.0
        %607 = vmatpush2.msra.mxu0 0.0
        %608 = vmatprep.subr.mxu0 0.0
        %609 = vmatpush2.msra.mxu0 0.0
        %610 = vmatprep.subr.mxu0 0.0
        %611 = vmatpush2.msra.mxu0 0.0
        %612 = vmatprep.subr.mxu0 0.0
        %613 = vmatpush2.msra.mxu0 0.0
        %614 = vmatprep.mubr.f32.mxu0 0.0
        %615 = vmatmul.mubr.f32.gmra.mxu0 %v542
        %v616 = vpop.f32.mrf.mxu0
        %v617 = vadd.f32 %v539, %v616
        %v618 = vpop.f32.mrf.mxu0
        %619 = vmatprep.mubr.f32.mxu0 0.0
        %620 = vmatmul.mubr.f32.gmra.mxu0 %v545
        %v621 = vpop.f32.mrf.mxu0
        %v622 = vadd.f32 %v539, %v621
        %v623 = vpop.f32.mrf.mxu0
        %624 = vmatprep.mubr.f32.mxu0 0.0
        %625 = vmatmul.mubr.f32.gmra.mxu0 %v548
        %v626 = vpop.f32.mrf.mxu0
        %v627 = vadd.f32 %v539, %v626
        %v628 = vpop.f32.mrf.mxu0
        %629 = vdwg.mxu0
        %v630 = vld [vmem:[#allocation8] sm:$0xff]
        %v631 = vld [vmem:[#allocation8 + $0x8] sm:$0xff]
        %v632 = vld [vmem:[#allocation8 + $0x10] sm:$0xff]
        %v633 = vld [vmem:[#allocation8 + $0x18] sm:$0xff]
        %v634 = vld [vmem:[%s8] sm:$0x1]
        %v636 = vlaneseq
        %v637 = vshrl.u32 %v636, 7
        %v638 = vsub.s32 0, %v637
        %v639 = vrot.slane %v634, %v638
        %641 = vmatprep.subr.mxu0 0.0
        %642 = vmatpush1.msra.mxu0 0.0
        %643 = vmatprep.subr.mxu0 0.0
        %644 = vmatpush1.msra.mxu0 0.0
        %645 = vmatprep.subr.mxu0 0.0
        %646 = vmatpush1.msra.mxu0 0.0
        %647 = vmatprep.subr.mxu0 0.0
        %648 = vmatpush1.msra.mxu0 0.0
        %649 = vmatprep.subr.mxu0 0.0
        %650 = vmatpush1.msra.mxu0 0.0
        %651 = vmatprep.subr.mxu0 0.0
        %652 = vmatpush1.msra.mxu0 0.0
        %653 = vmatprep.subr.mxu0 0.0
        %654 = vmatpush1.msra.mxu0 0.0
        %655 = vmatprep.subr.mxu0 0.0
        %656 = vmatpush1.msra.mxu0 0.0
        %657 = vmatprep.subr.mxu0 0.0
        %658 = vmatpush1.msra.mxu0 0.0
        %659 = vmatprep.subr.mxu0 0.0
        %660 = vmatpush1.msra.mxu0 0.0
        %661 = vmatprep.subr.mxu0 0.0
        %662 = vmatpush1.msra.mxu0 0.0
        %663 = vmatprep.subr.mxu0 0.0
        %664 = vmatpush1.msra.mxu0 0.0
        %665 = vmatprep.subr.mxu0 0.0
        %666 = vmatpush1.msra.mxu0 %v633
        %667 = vmatprep.subr.mxu0 0.0
        %668 = vmatpush1.msra.mxu0 %v632
        %669 = vmatprep.subr.mxu0 0.0
        %670 = vmatpush1.msra.mxu0 %v631
        %671 = vmatprep.subr.mxu0 0.0
        %672 = vmatpush1.msra.mxu0 %v630
        %673 = vmatprep.subr.mxu0 0.0
        %674 = vmatpush2.msra.mxu0 0.0
        %675 = vmatprep.subr.mxu0 0.0
        %676 = vmatpush2.msra.mxu0 0.0
        %677 = vmatprep.subr.mxu0 0.0
        %678 = vmatpush2.msra.mxu0 0.0
        %679 = vmatprep.subr.mxu0 0.0
        %680 = vmatpush2.msra.mxu0 0.0
        %681 = vmatprep.subr.mxu0 0.0
        %682 = vmatpush2.msra.mxu0 0.0
        %683 = vmatprep.subr.mxu0 0.0
        %684 = vmatpush2.msra.mxu0 0.0
        %685 = vmatprep.subr.mxu0 0.0
        %686 = vmatpush2.msra.mxu0 0.0
        %687 = vmatprep.subr.mxu0 0.0
        %688 = vmatpush2.msra.mxu0 0.0
        %689 = vmatprep.subr.mxu0 0.0
        %690 = vmatpush2.msra.mxu0 0.0
        %691 = vmatprep.subr.mxu0 0.0
        %692 = vmatpush2.msra.mxu0 0.0
        %693 = vmatprep.subr.mxu0 0.0
        %694 = vmatpush2.msra.mxu0 0.0
        %695 = vmatprep.subr.mxu0 0.0
        %696 = vmatpush2.msra.mxu0 0.0
        %697 = vmatprep.subr.mxu0 0.0
        %698 = vmatpush2.msra.mxu0 0.0
        %699 = vmatprep.subr.mxu0 0.0
        %700 = vmatpush2.msra.mxu0 0.0
        %701 = vmatprep.subr.mxu0 0.0
        %702 = vmatpush2.msra.mxu0 0.0
        %703 = vmatprep.subr.mxu0 0.0
        %704 = vmatpush2.msra.mxu0 0.0
        %705 = vmatprep.mubr.f32.mxu0 0.0
        %706 = vmatmul.mubr.f32.gmra.mxu0 %v542
        %v707 = vpop.f32.mrf.mxu0
        %v708 = vadd.f32 %v639, %v707
        %v709 = vpop.f32.mrf.mxu0
        %710 = vmatprep.mubr.f32.mxu0 0.0
        %711 = vmatmul.mubr.f32.gmra.mxu0 %v545
        %v712 = vpop.f32.mrf.mxu0
        %v713 = vadd.f32 %v639, %v712
        %v714 = vpop.f32.mrf.mxu0
        %715 = vmatprep.mubr.f32.mxu0 0.0
        %716 = vmatmul.mubr.f32.gmra.mxu0 %v548
        %v717 = vpop.f32.mrf.mxu0
        %v718 = vadd.f32 %v639, %v717
        %v719 = vpop.f32.mrf.mxu0
        %720 = vdwg.mxu0
        %v721 = vld [vmem:[#allocation5] sm:$0xff]
        %v722 = vld [vmem:[#allocation5 + $0x8] sm:$0xff]
        %v723 = vld [vmem:[#allocation5 + $0x10] sm:$0xff]
        %v724 = vld [vmem:[#allocation5 + $0x18] sm:$0xff]
        %v725 = vld [vmem:[%s4] sm:$0x1]
        %726 = vmatprep.subr.mxu0 0.0
        %727 = vmatpush1.msra.mxu0 0.0
        %728 = vmatprep.subr.mxu0 0.0
        %729 = vmatpush1.msra.mxu0 0.0
        %730 = vmatprep.subr.mxu0 0.0
        %731 = vmatpush1.msra.mxu0 0.0
        %732 = vmatprep.subr.mxu0 0.0
        %733 = vmatpush1.msra.mxu0 0.0
        %734 = vmatprep.subr.mxu0 0.0
        %735 = vmatpush1.msra.mxu0 0.0
        %736 = vmatprep.subr.mxu0 0.0
        %737 = vmatpush1.msra.mxu0 0.0
        %738 = vmatprep.subr.mxu0 0.0
        %739 = vmatpush1.msra.mxu0 0.0
        %740 = vmatprep.subr.mxu0 0.0
        %741 = vmatpush1.msra.mxu0 0.0
        %742 = vmatprep.subr.mxu0 0.0
        %743 = vmatpush1.msra.mxu0 0.0
        %744 = vmatprep.subr.mxu0 0.0
        %745 = vmatpush1.msra.mxu0 0.0
        %746 = vmatprep.subr.mxu0 0.0
        %747 = vmatpush1.msra.mxu0 0.0
        %748 = vmatprep.subr.mxu0 0.0
        %749 = vmatpush1.msra.mxu0 0.0
        %750 = vmatprep.subr.mxu0 0.0
        %751 = vmatpush1.msra.mxu0 %v724
        %752 = vmatprep.subr.mxu0 0.0
        %753 = vmatpush1.msra.mxu0 %v723
        %754 = vmatprep.subr.mxu0 0.0
        %755 = vmatpush1.msra.mxu0 %v722
        %756 = vmatprep.subr.mxu0 0.0
        %757 = vmatpush1.msra.mxu0 %v721
        %758 = vmatprep.subr.mxu0 0.0
        %759 = vmatpush2.msra.mxu0 0.0
        %760 = vmatprep.subr.mxu0 0.0
        %761 = vmatpush2.msra.mxu0 0.0
        %762 = vmatprep.subr.mxu0 0.0
        %763 = vmatpush2.msra.mxu0 0.0
        %764 = vmatprep.subr.mxu0 0.0
        %765 = vmatpush2.msra.mxu0 0.0
        %766 = vmatprep.subr.mxu0 0.0
        %767 = vmatpush2.msra.mxu0 0.0
        %768 = vmatprep.subr.mxu0 0.0
        %769 = vmatpush2.msra.mxu0 0.0
        %770 = vmatprep.subr.mxu0 0.0
        %771 = vmatpush2.msra.mxu0 0.0
        %772 = vmatprep.subr.mxu0 0.0
        %773 = vmatpush2.msra.mxu0 0.0
        %774 = vmatprep.subr.mxu0 0.0
        %775 = vmatpush2.msra.mxu0 0.0
        %776 = vmatprep.subr.mxu0 0.0
        %777 = vmatpush2.msra.mxu0 0.0
        %778 = vmatprep.subr.mxu0 0.0
        %779 = vmatpush2.msra.mxu0 0.0
        %780 = vmatprep.subr.mxu0 0.0
        %781 = vmatpush2.msra.mxu0 0.0
        %782 = vmatprep.subr.mxu0 0.0
        %783 = vmatpush2.msra.mxu0 0.0
        %784 = vmatprep.subr.mxu0 0.0
        %785 = vmatpush2.msra.mxu0 0.0
        %786 = vmatprep.subr.mxu0 0.0
        %787 = vmatpush2.msra.mxu0 0.0
        %788 = vmatprep.subr.mxu0 0.0
        %789 = vmatpush2.msra.mxu0 0.0
        %790 = vmatprep.mubr.f32.mxu0 0.0
        %791 = vmatmul.mubr.f32.gmra.mxu0 %v548
        %v792 = vpop.f32.mrf.mxu0
        %v793 = vadd.f32 %v725, %v792
        %v794 = vpop.f32.mrf.mxu0
        %795 = vdwg.mxu0
        %v796 = vld [vmem:[%s11] sm:$0xff]
        %v797 = vld [vmem:[%s11 + $0x8] sm:$0xff]
        %v798 = vld [vmem:[%s11 + $0x10] sm:$0xff]
        %v799 = vld [vmem:[%s11 + $0x18] sm:$0xff]
        %v800 = vld [vmem:[%s12] sm:$0xf]
        %v801 = vlaneseq
        %v802 = vshrl.u32 %v801, 7
        %v803 = vsub.s32 0, %v802
        %v804 = vrot.slane %v793, %v803
        %v805 = vmul.f32 %v804, %v617
        %v806 = vmul.f32 %v804, %v622
        %v808 = vsel %vm516, %v805, 0
        %v811 = vsel %vm516, %v806, 0
        %813 = vmatprep.subr.mxu0 0.0
        %814 = vmatpush1.msra.mxu0 0.0
        %815 = vmatprep.subr.mxu0 0.0
        %816 = vmatpush1.msra.mxu0 0.0
        %817 = vmatprep.subr.mxu0 0.0
        %818 = vmatpush1.msra.mxu0 0.0
        %819 = vmatprep.subr.mxu0 0.0
        %820 = vmatpush1.msra.mxu0 0.0
        %821 = vmatprep.subr.mxu0 0.0
        %822 = vmatpush1.msra.mxu0 0.0
        %823 = vmatprep.subr.mxu0 0.0
        %824 = vmatpush1.msra.mxu0 0.0
        %825 = vmatprep.subr.mxu0 0.0
        %826 = vmatpush1.msra.mxu0 0.0
        %827 = vmatprep.subr.mxu0 0.0
        %828 = vmatpush1.msra.mxu0 0.0
        %829 = vmatprep.subr.mxu0 0.0
        %830 = vmatpush1.msra.mxu0 0.0
        %831 = vmatprep.subr.mxu0 0.0
        %832 = vmatpush1.msra.mxu0 0.0
        %833 = vmatprep.subr.mxu0 0.0
        %834 = vmatpush1.msra.mxu0 0.0
        %835 = vmatprep.subr.mxu0 0.0
        %836 = vmatpush1.msra.mxu0 0.0
        %837 = vmatprep.subr.mxu0 0.0
        %838 = vmatpush1.msra.mxu0 %v799
        %839 = vmatprep.subr.mxu0 0.0
        %840 = vmatpush1.msra.mxu0 %v798
        %841 = vmatprep.subr.mxu0 0.0
        %842 = vmatpush1.msra.mxu0 %v797
        %843 = vmatprep.subr.mxu0 0.0
        %844 = vmatpush1.msra.mxu0 %v796
        %845 = vmatprep.subr.mxu0 0.0
        %846 = vmatpush2.msra.mxu0 0.0
        %847 = vmatprep.subr.mxu0 0.0
        %848 = vmatpush2.msra.mxu0 0.0
        %849 = vmatprep.subr.mxu0 0.0
        %850 = vmatpush2.msra.mxu0 0.0
        %851 = vmatprep.subr.mxu0 0.0
        %852 = vmatpush2.msra.mxu0 0.0
        %853 = vmatprep.subr.mxu0 0.0
        %854 = vmatpush2.msra.mxu0 0.0
        %855 = vmatprep.subr.mxu0 0.0
        %856 = vmatpush2.msra.mxu0 0.0
        %857 = vmatprep.subr.mxu0 0.0
        %858 = vmatpush2.msra.mxu0 0.0
        %859 = vmatprep.subr.mxu0 0.0
        %860 = vmatpush2.msra.mxu0 0.0
        %861 = vmatprep.subr.mxu0 0.0
        %862 = vmatpush2.msra.mxu0 0.0
        %863 = vmatprep.subr.mxu0 0.0
        %864 = vmatpush2.msra.mxu0 0.0
        %865 = vmatprep.subr.mxu0 0.0
        %866 = vmatpush2.msra.mxu0 0.0
        %867 = vmatprep.subr.mxu0 0.0
        %868 = vmatpush2.msra.mxu0 0.0
        %869 = vmatprep.subr.mxu0 0.0
        %870 = vmatpush2.msra.mxu0 0.0
        %871 = vmatprep.subr.mxu0 0.0
        %872 = vmatpush2.msra.mxu0 0.0
        %873 = vmatprep.subr.mxu0 0.0
        %874 = vmatpush2.msra.mxu0 0.0
        %875 = vmatprep.subr.mxu0 0.0
        %876 = vmatpush2.msra.mxu0 0.0
        %877 = vmatprep.mubr.f32.mxu0 0.0
        %878 = vmatmul.mubr.f32.gmra.mxu0 %v808
        %v879 = vpop.f32.mrf.mxu0
        %v880 = vadd.f32 0.0, %v879
        %v881 = vpop.f32.mrf.mxu0
        %882 = vmatprep.mubr.f32.mxu0 0.0
        %883 = vmatmul.mubr.f32.gmra.mxu0 %v811
        %v884 = vpop.f32.mrf.mxu0
        %v885 = vadd.f32 0.0, %v884
        %v886 = vpop.f32.mrf.mxu0
        %887 = vdwg.mxu0
        %v888 = vmul.f32 %v880, 0.35355338
        %v889 = vmul.f32 %v885, 0.35355338
        %v890 = vmul.f32 %v793, %v627
        %v892 = vsel %vm516, %v890, 0
        %894 = vmatprep.subr.mxu0 0.0
        %895 = vmatpush1.msra.mxu0 0.0
        %896 = vmatprep.subr.mxu0 0.0
        %897 = vmatpush1.msra.mxu0 0.0
        %898 = vmatprep.subr.mxu0 0.0
        %899 = vmatpush1.msra.mxu0 0.0
        %900 = vmatprep.subr.mxu0 0.0
        %901 = vmatpush1.msra.mxu0 0.0
        %902 = vmatprep.subr.mxu0 0.0
        %903 = vmatpush1.msra.mxu0 0.0
        %904 = vmatprep.subr.mxu0 0.0
        %905 = vmatpush1.msra.mxu0 0.0
        %906 = vmatprep.subr.mxu0 0.0
        %907 = vmatpush1.msra.mxu0 0.0
        %908 = vmatprep.subr.mxu0 0.0
        %909 = vmatpush1.msra.mxu0 0.0
        %910 = vmatprep.subr.mxu0 0.0
        %911 = vmatpush1.msra.mxu0 0.0
        %912 = vmatprep.subr.mxu0 0.0
        %913 = vmatpush1.msra.mxu0 0.0
        %914 = vmatprep.subr.mxu0 0.0
        %915 = vmatpush1.msra.mxu0 0.0
        %916 = vmatprep.subr.mxu0 0.0
        %917 = vmatpush1.msra.mxu0 0.0
        %918 = vmatprep.subr.mxu0 0.0
        %919 = vmatpush1.msra.mxu0 %v799
        %920 = vmatprep.subr.mxu0 0.0
        %921 = vmatpush1.msra.mxu0 %v798
        %922 = vmatprep.subr.mxu0 0.0
        %923 = vmatpush1.msra.mxu0 %v797
        %924 = vmatprep.subr.mxu0 0.0
        %925 = vmatpush1.msra.mxu0 %v796
        %926 = vmatprep.subr.mxu0 0.0
        %927 = vmatpush2.msra.mxu0 0.0
        %928 = vmatprep.subr.mxu0 0.0
        %929 = vmatpush2.msra.mxu0 0.0
        %930 = vmatprep.subr.mxu0 0.0
        %931 = vmatpush2.msra.mxu0 0.0
        %932 = vmatprep.subr.mxu0 0.0
        %933 = vmatpush2.msra.mxu0 0.0
        %934 = vmatprep.subr.mxu0 0.0
        %935 = vmatpush2.msra.mxu0 0.0
        %936 = vmatprep.subr.mxu0 0.0
        %937 = vmatpush2.msra.mxu0 0.0
        %938 = vmatprep.subr.mxu0 0.0
        %939 = vmatpush2.msra.mxu0 0.0
        %940 = vmatprep.subr.mxu0 0.0
        %941 = vmatpush2.msra.mxu0 0.0
        %942 = vmatprep.subr.mxu0 0.0
        %943 = vmatpush2.msra.mxu0 0.0
        %944 = vmatprep.subr.mxu0 0.0
        %945 = vmatpush2.msra.mxu0 0.0
        %946 = vmatprep.subr.mxu0 0.0
        %947 = vmatpush2.msra.mxu0 0.0
        %948 = vmatprep.subr.mxu0 0.0
        %949 = vmatpush2.msra.mxu0 0.0
        %950 = vmatprep.subr.mxu0 0.0
        %951 = vmatpush2.msra.mxu0 0.0
        %952 = vmatprep.subr.mxu0 0.0
        %953 = vmatpush2.msra.mxu0 0.0
        %954 = vmatprep.subr.mxu0 0.0
        %955 = vmatpush2.msra.mxu0 0.0
        %956 = vmatprep.subr.mxu0 0.0
        %957 = vmatpush2.msra.mxu0 0.0
        %958 = vmatprep.mubr.f32.mxu0 0.0
        %959 = vmatmul.mubr.f32.gmra.mxu0 %v892
        %v960 = vpop.f32.mrf.mxu0
        %v961 = vadd.f32 0.0, %v960
        %v962 = vpop.f32.mrf.mxu0
        %963 = vdwg.mxu0
        %v964 = vmul.f32 %v961, 0.35355338
        %vm965 = vcmask 31744
        %v966 = vsel %vm965, %v888, -inf
        %v967 = vsel %vm965, %v889, -inf
        %v968 = vmax.f32 %v966, %v967
        %v969 = vrot.slane %v968, 4
        %v970 = vmax.f32 %v968, %v969
        %v971 = vrot.slane %v970, 2
        %v972 = vmax.f32 %v970, %v971
        %v973 = vrot.slane %v972, 1
        %v974 = vmax.f32 %v972, %v973
        %v975 = vmax.f32 %v974, %v964
        %v976 = vsub.f32 %v964, %v975
        %v977 = vmul.f32 %v976, 1.442695
        %v978 = vpow.pop %v977
        %v979 = vlaneseq
        %v980 = vshrl.u32 %v979, 7
        %v981 = vsub.s32 0, %v980
        %v982 = vrot.slane %v975, %v981
        %v983 = vsub.f32 %v888, %v982
        %v984 = vsub.f32 %v889, %v982
        %v985 = vmul.f32 %v983, 1.442695
        %v986 = vpow.pop %v985
        %v987 = vmul.f32 %v984, 1.442695
        %v988 = vpow.pop %v987
        %v989 = vsel %vm965, %v986, 0.0
        %v990 = vsel %vm965, %v988, 0.0
        %v991 = vadd.f32 %v989, %v990
        %v992 = vrot.slane %v991, 4
        %v993 = vadd.f32 %v991, %v992
        %v994 = vrot.slane %v993, 2
        %v995 = vadd.f32 %v993, %v994
        %v996 = vrot.slane %v995, 1
        %v997 = vadd.f32 %v995, %v996
        %v998 = vadd.f32 %v978, %v997
        %v999 = vrcp.pop %v998
        %v1000 = vmul.f32 1.0, %v999
        %v1001 = vmul.f32 %v978, %v1000
        %v1003 = vsel %vm965, %v1001, 0
        %vm1005 = vcmask 1043456
        %v1007 = vsel %vm1005, %v800, 0
        %1009 = vmatprep.subr.mxu0 0.0
        %1010 = vmatpush1.msra.mxu0 0.0
        %1011 = vmatprep.subr.mxu0 0.0
        %1012 = vmatpush1.msra.mxu0 0.0
        %1013 = vmatprep.subr.mxu0 0.0
        %1014 = vmatpush1.msra.mxu0 0.0
        %1015 = vmatprep.subr.mxu0 0.0
        %1016 = vmatpush1.msra.mxu0 0.0
        %1017 = vmatprep.subr.mxu0 0.0
        %1018 = vmatpush1.msra.mxu0 0.0
        %1019 = vmatprep.subr.mxu0 0.0
        %1020 = vmatpush1.msra.mxu0 0.0
        %1021 = vmatprep.subr.mxu0 0.0
        %1022 = vmatpush1.msra.mxu0 0.0
        %1023 = vmatprep.subr.mxu0 0.0
        %1024 = vmatpush1.msra.mxu0 0.0
        %1025 = vmatprep.subr.mxu0 0.0
        %1026 = vmatpush1.msra.mxu0 0.0
        %1027 = vmatprep.subr.mxu0 0.0
        %1028 = vmatpush1.msra.mxu0 0.0
        %1029 = vmatprep.subr.mxu0 0.0
        %1030 = vmatpush1.msra.mxu0 0.0
        %1031 = vmatprep.subr.mxu0 0.0
        %1032 = vmatpush1.msra.mxu0 0.0
        %1033 = vmatprep.subr.mxu0 0.0
        %1034 = vmatpush1.msra.mxu0 0.0
        %1035 = vmatprep.subr.mxu0 0.0
        %1036 = vmatpush1.msra.mxu0 0.0
        %1037 = vmatprep.subr.mxu0 0.0
        %1038 = vmatpush1.msra.mxu0 0.0
        %1039 = vmatprep.subr.mxu0 0.0
        %1040 = vmatpush1.msra.mxu0 %v1007
        %1041 = vmatprep.subr.mxu0 0.0
        %1042 = vmatpush2.msra.mxu0 0.0
        %1043 = vmatprep.subr.mxu0 0.0
        %1044 = vmatpush2.msra.mxu0 0.0
        %1045 = vmatprep.subr.mxu0 0.0
        %1046 = vmatpush2.msra.mxu0 0.0
        %1047 = vmatprep.subr.mxu0 0.0
        %1048 = vmatpush2.msra.mxu0 0.0
        %1049 = vmatprep.subr.mxu0 0.0
        %1050 = vmatpush2.msra.mxu0 0.0
        %1051 = vmatprep.subr.mxu0 0.0
        %1052 = vmatpush2.msra.mxu0 0.0
        %1053 = vmatprep.subr.mxu0 0.0
        %1054 = vmatpush2.msra.mxu0 0.0
        %1055 = vmatprep.subr.mxu0 0.0
        %1056 = vmatpush2.msra.mxu0 0.0
        %1057 = vmatprep.subr.mxu0 0.0
        %1058 = vmatpush2.msra.mxu0 0.0
        %1059 = vmatprep.subr.mxu0 0.0
        %1060 = vmatpush2.msra.mxu0 0.0
        %1061 = vmatprep.subr.mxu0 0.0
        %1062 = vmatpush2.msra.mxu0 0.0
        %1063 = vmatprep.subr.mxu0 0.0
        %1064 = vmatpush2.msra.mxu0 0.0
        %1065 = vmatprep.subr.mxu0 0.0
        %1066 = vmatpush2.msra.mxu0 0.0
        %1067 = vmatprep.subr.mxu0 0.0
        %1068 = vmatpush2.msra.mxu0 0.0
        %1069 = vmatprep.subr.mxu0 0.0
        %1070 = vmatpush2.msra.mxu0 0.0
        %1071 = vmatprep.subr.mxu0 0.0
        %1072 = vmatpush2.msra.mxu0 0.0
        %1073 = vmatprep.mubr.f32.mxu0 0.0
        %1074 = vmatmul.mubr.f32.gmra.mxu0 %v1003
        %v1075 = vpop.f32.mrf.mxu0
        %v1076 = vadd.f32 0.0, %v1075
        %v1077 = vpop.f32.mrf.mxu0
        %1078 = vdwg.mxu0
        %v1079 = vlaneseq
        %v1080 = vshrl.u32 %v1079, 7
        %v1081 = vsub.s32 0, %v1080
        %v1082 = vrot.slane %v1000, %v1081
        %v1083 = vmul.f32 %v986, %v1082
        %v1084 = vmul.f32 %v988, %v1082
        %v1086 = vsel %vm965, %v1083, 0
        %v1089 = vsel %vm965, %v1084, 0
        %1091 = vmatprep.subr.mxu0 0.0
        %1092 = vmatpush1.msra.mxu0 0.0
        %1093 = vmatprep.subr.mxu0 0.0
        %1094 = vmatpush1.msra.mxu0 0.0
        %1095 = vmatprep.subr.mxu0 0.0
        %1096 = vmatpush1.msra.mxu0 0.0
        %1097 = vmatprep.subr.mxu0 0.0
        %1098 = vmatpush1.msra.mxu0 0.0
        %1099 = vmatprep.subr.mxu0 0.0
        %1100 = vmatpush1.msra.mxu0 0.0
        %1101 = vmatprep.subr.mxu0 0.0
        %1102 = vmatpush1.msra.mxu0 0.0
        %1103 = vmatprep.subr.mxu0 0.0
        %1104 = vmatpush1.msra.mxu0 0.0
        %1105 = vmatprep.subr.mxu0 0.0
        %1106 = vmatpush1.msra.mxu0 0.0
        %1107 = vmatprep.subr.mxu0 0.0
        %1108 = vmatpush1.msra.mxu0 0.0
        %1109 = vmatprep.subr.mxu0 0.0
        %1110 = vmatpush1.msra.mxu0 0.0
        %1111 = vmatprep.subr.mxu0 0.0
        %1112 = vmatpush1.msra.mxu0 0.0
        %1113 = vmatprep.subr.mxu0 0.0
        %1114 = vmatpush1.msra.mxu0 0.0
        %1115 = vmatprep.subr.mxu0 0.0
        %1116 = vmatpush1.msra.mxu0 0.0
        %1117 = vmatprep.subr.mxu0 0.0
        %1118 = vmatpush1.msra.mxu0 0.0
        %1119 = vmatprep.subr.mxu0 0.0
        %1120 = vmatpush1.msra.mxu0 0.0
        %1121 = vmatprep.subr.mxu0 0.0
        %1122 = vmatpush1.msra.mxu0 %v1007
        %1123 = vmatprep.subr.mxu0 0.0
        %1124 = vmatpush2.msra.mxu0 0.0
        %1125 = vmatprep.subr.mxu0 0.0
        %1126 = vmatpush2.msra.mxu0 0.0
        %1127 = vmatprep.subr.mxu0 0.0
        %1128 = vmatpush2.msra.mxu0 0.0
        %1129 = vmatprep.subr.mxu0 0.0
        %1130 = vmatpush2.msra.mxu0 0.0
        %1131 = vmatprep.subr.mxu0 0.0
        %1132 = vmatpush2.msra.mxu0 0.0
        %1133 = vmatprep.subr.mxu0 0.0
        %1134 = vmatpush2.msra.mxu0 0.0
        %1135 = vmatprep.subr.mxu0 0.0
        %1136 = vmatpush2.msra.mxu0 0.0
        %1137 = vmatprep.subr.mxu0 0.0
        %1138 = vmatpush2.msra.mxu0 0.0
        %1139 = vmatprep.subr.mxu0 0.0
        %1140 = vmatpush2.msra.mxu0 0.0
        %1141 = vmatprep.subr.mxu0 0.0
        %1142 = vmatpush2.msra.mxu0 0.0
        %1143 = vmatprep.subr.mxu0 0.0
        %1144 = vmatpush2.msra.mxu0 0.0
        %1145 = vmatprep.subr.mxu0 0.0
        %1146 = vmatpush2.msra.mxu0 0.0
        %1147 = vmatprep.subr.mxu0 0.0
        %1148 = vmatpush2.msra.mxu0 0.0
        %1149 = vmatprep.subr.mxu0 0.0
        %1150 = vmatpush2.msra.mxu0 0.0
        %1151 = vmatprep.subr.mxu0 0.0
        %1152 = vmatpush2.msra.mxu0 0.0
        %1153 = vmatprep.subr.mxu0 0.0
        %1154 = vmatpush2.msra.mxu0 0.0
        %1155 = vmatprep.mubr.f32.mxu0 0.0
        %1156 = vmatmul.mubr.f32.gmra.mxu0 %v1086
        %v1157 = vpop.f32.mrf.mxu0
        %v1158 = vadd.f32 0.0, %v1157
        %v1159 = vpop.f32.mrf.mxu0
        %1160 = vmatprep.mubr.f32.mxu0 0.0
        %1161 = vmatmul.mubr.f32.gmra.mxu0 %v1089
        %v1162 = vpop.f32.mrf.mxu0
        %v1163 = vadd.f32 0.0, %v1162
        %v1164 = vpop.f32.mrf.mxu0
        %1165 = vdwg.mxu0
        %v1166 = vmul.f32 %v1076, %v718
        %v1167 = vmul.f32 %v1158, %v708
        %v1168 = vmul.f32 %v1163, %v713
        %v1169 = vsel %vm516, %v1167, 0.0
        %v1170 = vsel %vm516, %v1168, 0.0
        %v1171 = vadd.f32 %v1169, %v1170
        %v1172 = vrot.slane %v1171, 4
        %v1173 = vadd.f32 %v1171, %v1172
        %v1174 = vrot.slane %v1173, 2
        %v1175 = vadd.f32 %v1173, %v1174
        %v1176 = vrot.slane %v1175, 1
        %v1177 = vadd.f32 %v1175, %v1176
        %v1178 = vadd.f32 %v1166, %v1177
        %v1179 = vld [vmem:[#allocation10] sm:$0xff]
        %v1180 = vld [vmem:[#allocation10 + $0x8] sm:$0xff]
        %v1181 = vld [vmem:[#allocation10 + $0x10] sm:$0xff]
        %v1182 = vld [vmem:[#allocation10 + $0x18] sm:$0xff]
        %v1183 = vld [vmem:[%s10] sm:$0x1]
        %v1185 = vsel %vm516, %v1178, 0
        %1187 = vmatprep.subr.mxu0 0.0
        %1188 = vmatpush1.msra.mxu0 0.0
        %1189 = vmatprep.subr.mxu0 0.0
        %1190 = vmatpush1.msra.mxu0 0.0
        %1191 = vmatprep.subr.mxu0 0.0
        %1192 = vmatpush1.msra.mxu0 0.0
        %1193 = vmatprep.subr.mxu0 0.0
        %1194 = vmatpush1.msra.mxu0 0.0
        %1195 = vmatprep.subr.mxu0 0.0
        %1196 = vmatpush1.msra.mxu0 0.0
        %1197 = vmatprep.subr.mxu0 0.0
        %1198 = vmatpush1.msra.mxu0 0.0
        %1199 = vmatprep.subr.mxu0 0.0
        %1200 = vmatpush1.msra.mxu0 0.0
        %1201 = vmatprep.subr.mxu0 0.0
        %1202 = vmatpush1.msra.mxu0 0.0
        %1203 = vmatprep.subr.mxu0 0.0
        %1204 = vmatpush1.msra.mxu0 0.0
        %1205 = vmatprep.subr.mxu0 0.0
        %1206 = vmatpush1.msra.mxu0 0.0
        %1207 = vmatprep.subr.mxu0 0.0
        %1208 = vmatpush1.msra.mxu0 0.0
        %1209 = vmatprep.subr.mxu0 0.0
        %1210 = vmatpush1.msra.mxu0 0.0
        %1211 = vmatprep.subr.mxu0 0.0
        %1212 = vmatpush1.msra.mxu0 %v1182
        %1213 = vmatprep.subr.mxu0 0.0
        %1214 = vmatpush1.msra.mxu0 %v1181
        %1215 = vmatprep.subr.mxu0 0.0
        %1216 = vmatpush1.msra.mxu0 %v1180
        %1217 = vmatprep.subr.mxu0 0.0
        %1218 = vmatpush1.msra.mxu0 %v1179
        %1219 = vmatprep.subr.mxu0 0.0
        %1220 = vmatpush2.msra.mxu0 0.0
        %1221 = vmatprep.subr.mxu0 0.0
        %1222 = vmatpush2.msra.mxu0 0.0
        %1223 = vmatprep.subr.mxu0 0.0
        %1224 = vmatpush2.msra.mxu0 0.0
        %1225 = vmatprep.subr.mxu0 0.0
        %1226 = vmatpush2.msra.mxu0 0.0
        %1227 = vmatprep.subr.mxu0 0.0
        %1228 = vmatpush2.msra.mxu0 0.0
        %1229 = vmatprep.subr.mxu0 0.0
        %1230 = vmatpush2.msra.mxu0 0.0
        %1231 = vmatprep.subr.mxu0 0.0
        %1232 = vmatpush2.msra.mxu0 0.0
        %1233 = vmatprep.subr.mxu0 0.0
        %1234 = vmatpush2.msra.mxu0 0.0
        %1235 = vmatprep.subr.mxu0 0.0
        %1236 = vmatpush2.msra.mxu0 0.0
        %1237 = vmatprep.subr.mxu0 0.0
        %1238 = vmatpush2.msra.mxu0 0.0
        %1239 = vmatprep.subr.mxu0 0.0
        %1240 = vmatpush2.msra.mxu0 0.0
        %1241 = vmatprep.subr.mxu0 0.0
        %1242 = vmatpush2.msra.mxu0 0.0
        %1243 = vmatprep.subr.mxu0 0.0
        %1244 = vmatpush2.msra.mxu0 0.0
        %1245 = vmatprep.subr.mxu0 0.0
        %1246 = vmatpush2.msra.mxu0 0.0
        %1247 = vmatprep.subr.mxu0 0.0
        %1248 = vmatpush2.msra.mxu0 0.0
        %1249 = vmatprep.subr.mxu0 0.0
        %1250 = vmatpush2.msra.mxu0 0.0
        %1251 = vmatprep.mubr.f32.mxu0 0.0
        %1252 = vmatmul.mubr.f32.gmra.mxu0 %v1185
        %v1253 = vpop.f32.mrf.mxu0
        %v1254 = vadd.f32 %v1183, %v1253
        %v1255 = vpop.f32.mrf.mxu0
        %1256 = vdwg.mxu0
        %vm1257 = vcmask 516096
        %1258 = vst.msk [vmem:[%s505] sm:$0x1] %vm1257, %v1254
        %s1259 = sand.u32 %s316, 1
        %s1260 = scalar_lea.sflag [#allocation4], %s1259
        %s1261 = sand.u32 %s316, 1
        %s1262 = scalar_lea.vmem [#allocation11], %s1261
        // Predicated region
        $region93: #{tpu_custom_call.1} parent=71 // pred_check
          %p1263 = pneg %p326
        $region94: #{tpu_custom_call.1} parent=71 // pred_check_branch
          %1265 = sbr.rel (%p1263) target = $region96
        $region95: #{tpu_custom_call.1} parent=71 // pred_region
          %s1267 = ssub.s32 16, 16
          %1268 = vsyncadd %s1260, %s1267
          %s1269 = smul.addr %s30, 16
          %s1270 = scalar_lea.hbm %s13, %s1269
          %s1272 = sshll.u32 %s1262, 4
          %s1273 = int_to_ptr.vmem [resolvable:$true] %s1272
          %1275 = dma.vmem_to_hbm [thread:$0]  %s1273, 16, %s1270, %s1260
        $region96: #{tpu_custom_call.1} parent=71 // pred_fallthru
          _
      $region72: #{tpu_custom_call.1} parent=5 // pred_fallthru
        _
      %p1276 = scmp.le.s32.totalorder 2, %s25
      // Predicated region
      $region97: #{tpu_custom_call.1} parent=5 // pred_check
        %p1277 = pneg %p1276
      $region98: #{tpu_custom_call.1} parent=5 // pred_check_branch
        %1279 = sbr.rel (%p1277) target = $region100
      $region99: #{tpu_custom_call.1} parent=5 // pred_region
        %s1280 = ssub.s32 %s25, 2
        // Predicated region
        $region101: #{tpu_custom_call.1} parent=99 // pred_check
          %p1281 = pneg %p332
        $region102: #{tpu_custom_call.1} parent=99 // pred_check_branch
          %1283 = sbr.rel (%p1281) target = $region104
        $region103: #{tpu_custom_call.1} parent=99 // pred_region
          %s1284 = sand.u32 %s317, 1
          %s1285 = scalar_lea.sflag [#allocation4], %s1284
          %s1286 = sand.u32 %s317, 1
          %s1287 = scalar_lea.vmem [#allocation11], %s1286
          %1288 = dma.done %s1285, 16
        $region104: #{tpu_custom_call.1} parent=99 // pred_fallthru
          _
      $region100: #{tpu_custom_call.1} parent=5 // pred_fallthru
        _
    $region6: #{tpu_custom_call.1} parent=1 // loop_footer
      %s29 = sadd.s32 1, %s25
    $region7: #{tpu_custom_call.1} parent=1 // loop_footer_branch
      %24 = sbr.rel target = $region3
    $region8: #{tpu_custom_call.1} parent=1 // loop_exit
      _
    %1289 = vsyncpa [#allocation3], 1
    %s1290 = scalar_lea.sflag [#allocation3], 1
    %1291 = vsyncpa %s1290, 1
    %1292 = vsyncpa [#allocation6], 1
    %1293 = vsyncpa [#allocation9], 1
    %1294 = vsyncpa [#allocation4], 1
    %s1295 = scalar_lea.sflag [#allocation4], 1
    %1296 = vsyncpa %s1295, 1

</llo_original>
